<compile_context>
chip_gen: v6e
topology: v6e:2x2x1
jax: 0.10.0
libtpu: 0.0.40
codegen_flags: <defaults>
</compile_context>

<pallas_src>
import functools

import jax
import jax.numpy as jnp
import numpy as np
from jax.experimental import pallas as pl
from jax.experimental.pallas import tpu as pltpu

# Row layout of the packed (8, vdim) f32 bias / LayerNorm parameter slab.
_ROW_BQKV, _ROW_BO, _ROW_LNW, _ROW_LNB = 0, 1, 2, 3


def _mhsa_kernel(
    x_ref, wqkv_ref, wo_ref, vec_ref, out_ref,      # inputs / output
    qh_scr, kh_scr, vh_scr,                          # persistent VMEM scratch
    *, batch_block, seq_len, q_block, num_heads, head_dim, attn_dim, out_dim,
    ln_eps, exp_dtype, approx_recip,
):
    bb, S, tq, H, hd = batch_block, seq_len, q_block, num_heads, head_dim
    A, Ao = attn_dim, out_dim
    E = x_ref.shape[-1]
    cdt = wqkv_ref.dtype                 # MXU input dtype (bf16 or f32); accumulation is f32.
    t = pl.program_id(1)                 # q-tile index (batch-block index is program_id(0))

    vec = vec_ref[...]                   # (8, vdim) f32 packed slab
    bqkv = vec[_ROW_BQKV:_ROW_BQKV + 1, :3 * A]
    bo   = vec[_ROW_BO:_ROW_BO + 1, :Ao]
    lnw  = vec[_ROW_LNW:_ROW_LNW + 1, :Ao]
    lnb  = vec[_ROW_LNB:_ROW_LNB + 1, :Ao]

    # ---- once per batch block: fused QKV projection + head-major stash in VMEM scratch ----
    @pl.when(t == 0)
    def _project_qkv():
        x2 = x_ref[...].reshape(bb * S, E)                                    # (M, E) cdt
        qkv = jnp.dot(x2, wqkv_ref[...], preferred_element_type=jnp.float32) + bqkv  # (M, 3A)

        def to_heads(m):
            # TODO(synk): replace reshape+transpose relayout with pltpu.einshape.
            return (m.reshape(bb, S, H, hd).transpose(0, 2, 1, 3)
                      .reshape(bb * H, S, hd).astype(cdt))

        qh_scr[...] = to_heads(qkv[:, :A])         # 1/sqrt(hd) already folded into Wq/bq
        kh_scr[...] = to_heads(qkv[:, A:2 * A])
        vh_scr[...] = to_heads(qkv[:, 2 * A:])

    # ---- per q tile: scores -> softmax -> context -> O proj -> LayerNorm -> store ----
    start = pl.multiple_of(t * tq, tq)
    q_t = qh_scr[:, pl.ds(start, tq), :]                                      # (bb*H, tq, hd)

    s = jnp.einsum("nqd,nkd->nqk", q_t, kh_scr[...],
                   preferred_element_type=jnp.float32)                        # (bb*H, tq, S)
    s = s - jnp.max(s, axis=-1, keepdims=True)
    p = jnp.exp(s.astype(exp_dtype))                                          # EUP bf16 path on v6e/v7x
    denom = jnp.sum(p.astype(jnp.float32), axis=-1, keepdims=True)            # f32 row sums

    ctx = jnp.einsum("nqk,nkd->nqd", p.astype(cdt), vh_scr[...],
                     preferred_element_type=jnp.float32)                      # (bb*H, tq, hd)
    ctx = ctx * pl.reciprocal(denom, approx=approx_recip)                     # normalize post-PV

    ctx = (ctx.reshape(bb, H, tq, hd).transpose(0, 2, 1, 3)
              .reshape(bb * tq, A))                                           # (bb*tq, A) f32

    o = jnp.dot(ctx.astype(cdt), wo_ref[...], preferred_element_type=jnp.float32) + bo
    mean = jnp.mean(o, axis=-1, keepdims=True)
    cen = o - mean
    var = jnp.mean(cen * cen, axis=-1, keepdims=True)                         # two-pass variance
    o = cen * jax.lax.rsqrt(var + ln_eps) * lnw + lnb

    out_ref[...] = o.reshape(bb, tq, Ao).astype(out_ref.dtype)


def bge_mhsa(x, params, *, num_heads, ln_eps, compute_dtype=jnp.bfloat16,
             batch_block=None, q_block=None, exp_dtype=None, approx_recip=True):
    B, S, E = x.shape
    A = params["wq"].shape[-1]           # attn_dim
    Ao = params["wo"].shape[-1]          # attn_output_dim
    assert A % num_heads == 0
    hd = A // num_heads

    # Default bb=1 so the batch grid axis has >= 2 iterations (megacore + DMA pipelining).
    bb = 1 if batch_block is None else batch_block
    assert B % bb == 0, "batch_block must divide batch"
    nb = B // bb

    # Query tile: bounds live softmax state to O(tq * S).
    tq = (S if S <= 256 else 256) if q_block is None else q_block
    assert S % tq == 0, "q_block must divide seq_len"
    assert tq == S or tq % 8 == 0, "q_block must be a multiple of 8 (sublane tiling)"
    nq = S // tq
    # NOTE: A, Ao, 3A should be multiples of 128 at production sizes for lane-dense stores;
    # at demo sizes they equal the full array dims, which is also legal.

    if exp_dtype is None:
        exp_dtype = compute_dtype        # bf16 exp on v6e/v7x; pass jnp.float32 on v5e.

    # Fold 1/sqrt(head_dim) into Wq / bq; fuse q|k|v into one (E, 3A) matmul weight.
    scale = 1.0 / float(hd) ** 0.5
    wqkv = jnp.concatenate(
        [params["wq"] * scale, params["wk"], params["wv"]], axis=1).astype(compute_dtype)
    wo = params["wo"].astype(compute_dtype)

    # Pack bias / LayerNorm vectors into one (8, vdim) f32 slab (single DMA stream).
    bqkv = jnp.concatenate([params["bq"] * scale, params["bk"], params["bv"]], axis=0)
    vdim = max(3 * A, Ao)
    vec = jnp.zeros((8, vdim), jnp.float32)
    vec = vec.at[_ROW_BQKV, :3 * A].set(bqkv.astype(jnp.float32))
    vec = vec.at[_ROW_BO, :Ao].set(params["bo"].astype(jnp.float32))
    vec = vec.at[_ROW_LNW, :Ao].set(params["ln_w"].astype(jnp.float32))
    vec = vec.at[_ROW_LNB, :Ao].set(params["ln_b"].astype(jnp.float32))

    x3 = x.astype(compute_dtype)

    # Generation-aware scoped-VMEM limit (~0.6x capacity: ~38 MiB v7x, ~77 MiB v5e/v6e).
    try:
        vmem_cap = int(pltpu.get_tpu_info().vmem_capacity_bytes)
    except Exception:
        vmem_cap = 64 * 1024 * 1024
    vmem_limit = max(32 * 1024 * 1024, min(int(0.6 * vmem_cap), 100 * 1024 * 1024))

    kernel = functools.partial(
        _mhsa_kernel,
        batch_block=bb, seq_len=S, q_block=tq, num_heads=num_heads, head_dim=hd,
        attn_dim=A, out_dim=Ao, ln_eps=ln_eps, exp_dtype=exp_dtype,
        approx_recip=approx_recip,
    )

    # Advisory cost estimate for XLA's scheduler.
    itemsize = jnp.dtype(compute_dtype).itemsize
    flops = 2 * B * S * (E * 3 * A + A * Ao) + 4 * B * num_heads * S * S * hd
    transcendentals = B * num_heads * S * S + B * S
    bytes_accessed = ((x3.size + wqkv.size + wo.size) * itemsize + vec.size * 4
                      + B * S * Ao * jnp.dtype(x.dtype).itemsize)
    cost = pl.CostEstimate(flops=int(flops), transcendentals=int(transcendentals),
                           bytes_accessed=int(bytes_accessed))

    def build(single_buffer_weights):
        if single_buffer_weights:
            def const_spec(shape):
                return pl.BlockSpec(shape, lambda i, t: (0,) * len(shape),
                                    pipeline_mode=pl.Buffered(1))
        else:
            def const_spec(shape):
                return pl.BlockSpec(shape, lambda i, t: (0,) * len(shape))
        return pl.pallas_call(
            kernel,
            out_shape=jax.ShapeDtypeStruct((B, S, Ao), x.dtype),
            grid=(nb, nq),
            in_specs=[
                pl.BlockSpec((bb, S, E), lambda i, t: (i, 0, 0)),   # resident across q axis
                const_spec(wqkv.shape),
                const_spec(wo.shape),
                const_spec(vec.shape),
            ],
            out_specs=pl.BlockSpec((bb, tq, Ao), lambda i, t: (i, t, 0)),
            scratch_shapes=[pltpu.VMEM((bb * num_heads, S, hd), compute_dtype)
                            for _ in range(3)],                     # qh, kh, vh
            compiler_params=pltpu.CompilerParams(
                dimension_semantics=("parallel", "arbitrary"),
                vmem_limit_bytes=vmem_limit,
            ),
            cost_estimate=cost,
        )

    try:
        out = build(True)(x3, wqkv, wo, vec)
    except Exception:
        # pipeline_mode=pl.Buffered(1) unsupported on this jax build -> default buffering.
        out = build(False)(x3, wqkv, wo, vec)
    return out


def _reference(x, params, *, num_heads, ln_eps):
    """Pure-JAX f32 reference mirroring the PyTorch forward (eval mode)."""
    B, S, E = x.shape
    A = params["wq"].shape[-1]
    hd = A // num_heads

    q = (x @ params["wq"] + params["bq"]).reshape(B, S, num_heads, hd).transpose(0, 2, 1, 3)
    k = (x @ params["wk"] + params["bk"]).reshape(B, S, num_heads, hd).transpose(0, 2, 1, 3)
    v = (x @ params["wv"] + params["bv"]).reshape(B, S, num_heads, hd).transpose(0, 2, 1, 3)
    s = jnp.einsum("bhqd,bhkd->bhqk", q, k) / (hd ** 0.5)
    p = jax.nn.softmax(s, axis=-1)
    o = jnp.einsum("bhqk,bhkd->bhqd", p, v).transpose(0, 2, 1, 3).reshape(B, S, A)
    o = o @ params["wo"] + params["bo"]
    m = jnp.mean(o, axis=-1, keepdims=True)
    var = jnp.mean((o - m) ** 2, axis=-1, keepdims=True)
    return (o - m) / jnp.sqrt(var + ln_eps) * params["ln_w"] + params["ln_b"]


if __name__ == "__main__":
    # Synthetic BgeConfig-equivalent, small shapes.
    embed_dim = 32
    attn_dim = 32
    attn_output_dim = 32
    num_heads = 4
    attn_layer_norm_eps = 1e-12
    B, S = 2, 8

    key = jax.random.PRNGKey(0)
    keys = jax.random.split(key, 11)

    def dense(kk, fan_in, fan_out):
        # (in, out) layout: kernel computes x @ W + b (PyTorch weight transposed).
        return jax.random.normal(kk, (fan_in, fan_out), jnp.float32) * 0.05

    def vecp(kk, dim, base=0.0):
        return base + jax.random.normal(kk, (dim,), jnp.float32) * 0.01

    params = {
        "wq": dense(keys[0], embed_dim, attn_dim),
        "bq": vecp(keys[1], attn_dim),
        "wk": dense(keys[2], embed_dim, attn_dim),
        "bk": vecp(keys[3], attn_dim),
        "wv": dense(keys[4], embed_dim, attn_dim),
        "bv": vecp(keys[5], attn_dim),
        "wo": dense(keys[6], attn_dim, attn_output_dim),
        "bo": vecp(keys[7], attn_output_dim),
        "ln_w": vecp(keys[8], attn_output_dim, base=1.0),
        "ln_b": vecp(keys[9], attn_output_dim),
    }
    x = jax.random.normal(keys[10], (B, S, embed_dim), jnp.float32)

    ref = _reference(x, params, num_heads=num_heads, ln_eps=attn_layer_norm_eps)

    # f32 MXU path (approx-reciprocal softmax normalization is the only non-exact step).
    out_f32 = bge_mhsa(x, params, num_heads=num_heads, ln_eps=attn_layer_norm_eps,
                       compute_dtype=jnp.float32)
    out_f32 = jax.block_until_ready(out_f32)
    np.testing.assert_allclose(np.asarray(out_f32), np.asarray(ref), rtol=1e-2, atol=1e-2)

    # bf16 MXU path (v6e/v7x fast path; bf16 exp, f32 accumulate + f32 LayerNorm math).
    out_bf16 = bge_mhsa(x, params, num_heads=num_heads, ln_eps=attn_layer_norm_eps,
                        compute_dtype=jnp.bfloat16)
    out_bf16 = jax.block_until_ready(out_bf16)
    np.testing.assert_allclose(np.asarray(out_bf16), np.asarray(ref), rtol=6e-2, atol=6e-2)

    print("KERNEL_OK")
</pallas_src>

<mosaic_0001>
module attributes {stable_mosaic.version = 11 : i64} {
  func.func @_mhsa_kernel(%arg0: i32, %arg1: i32, %arg2: memref<1x8x32xf32, #tpu.memory_space<vmem>>, %arg3: memref<32x96xf32, #tpu.memory_space<vmem>>, %arg4: memref<32x32xf32, #tpu.memory_space<vmem>>, %arg5: memref<8x96xf32, #tpu.memory_space<vmem>>, %arg6: memref<1x8x32xf32, #tpu.memory_space<vmem>>, %arg7: memref<4x8x8xf32, #tpu.memory_space<vmem>>, %arg8: memref<4x8x8xf32, #tpu.memory_space<vmem>>, %arg9: memref<4x8x8xf32, #tpu.memory_space<vmem>>) attributes {dimension_semantics = [#tpu.dimension_semantics<parallel>, #tpu.dimension_semantics<arbitrary>], iteration_bounds = array<i64: 2, 1>, scalar_prefetch = 0 : i64, scratch_operands = 3 : i64, tpu.core_type = #tpu.core_type<tc>, window_params = [{transform_indices = @transform_0, window_bounds = array<i64: 1, 8, 32>}, {pipeline_mode = #tpu.pipeline_mode<synchronous>, transform_indices = @transform_1, window_bounds = array<i64: 32, 96>}, {pipeline_mode = #tpu.pipeline_mode<synchronous>, transform_indices = @transform_2, window_bounds = array<i64: 32, 32>}, {pipeline_mode = #tpu.pipeline_mode<synchronous>, transform_indices = @transform_3, window_bounds = array<i64: 8, 96>}, {transform_indices = @transform_4, window_bounds = array<i64: 1, 8, 32>}]} {
    %c0 = arith.constant 0 : index
    %c0_0 = arith.constant 0 : index
    %0 = vector.load %arg5[%c0, %c0_0] : memref<8x96xf32, #tpu.memory_space<vmem>>, vector<8x96xf32>
    %1 = vector.extract_strided_slice %0 {offsets = [0, 0], sizes = [1, 96], strides = [1, 1]} : vector<8x96xf32> to vector<1x96xf32>
    %2 = vector.extract_strided_slice %0 {offsets = [1, 0], sizes = [1, 32], strides = [1, 1]} : vector<8x96xf32> to vector<1x32xf32>
    %3 = vector.extract_strided_slice %0 {offsets = [2, 0], sizes = [1, 32], strides = [1, 1]} : vector<8x96xf32> to vector<1x32xf32>
    %4 = vector.extract_strided_slice %0 {offsets = [3, 0], sizes = [1, 32], strides = [1, 1]} : vector<8x96xf32> to vector<1x32xf32>
    %c0_i32 = arith.constant 0 : i32
    %5 = arith.cmpi eq, %arg1, %c0_i32 : i32
    %6 = arith.extui %5 : i1 to i32
    %c0_i32_1 = arith.constant 0 : i32
    %7 = arith.cmpi ne, %6, %c0_i32_1 : i32
    scf.if %7 {
      %c0_24 = arith.constant 0 : index
      %c0_25 = arith.constant 0 : index
      %c0_26 = arith.constant 0 : index
      %55 = vector.load %arg2[%c0_24, %c0_25, %c0_26] : memref<1x8x32xf32, #tpu.memory_space<vmem>>, vector<1x8x32xf32>
      %56 = vector.shape_cast %55 : vector<1x8x32xf32> to vector<8x32xf32>
      %c0_27 = arith.constant 0 : index
      %c0_28 = arith.constant 0 : index
      %57 = vector.load %arg3[%c0_27, %c0_28] : memref<32x96xf32, #tpu.memory_space<vmem>>, vector<32x96xf32>
      %cst_29 = arith.constant dense<0.000000e+00> : vector<8x96xf32>
      %58 = tpu.matmul %56, %57, %cst_29 {dimension_numbers = #tpu.dot_dimension_numbers<[1], [0], [0], [1], [0, 0, 1, 1], [], []>} : vector<8x32xf32>, vector<32x96xf32>, vector<8x96xf32> -> vector<8x96xf32>
      %59 = vector.broadcast %1 : vector<1x96xf32> to vector<8x96xf32>
      %60 = arith.addf %58, %59 : vector<8x96xf32>
      %61 = vector.extract_strided_slice %60 {offsets = [0, 0], sizes = [8, 32], strides = [1, 1]} : vector<8x96xf32> to vector<8x32xf32>
      %62 = vector.shape_cast %61 : vector<8x32xf32> to vector<1x8x4x8xf32>
      %63 = tpu.transpose %62, [0, 2, 1, 3] : vector<1x8x4x8xf32> -> vector<1x4x8x8xf32>
      %64 = vector.shape_cast %63 : vector<1x4x8x8xf32> to vector<4x8x8xf32>
      %c0_30 = arith.constant 0 : index
      %c0_31 = arith.constant 0 : index
      %c0_32 = arith.constant 0 : index
      %65 = vector.load %arg7[%c0_30, %c0_31, %c0_32] : memref<4x8x8xf32, #tpu.memory_space<vmem>>, vector<4x8x8xf32>
      tpu.vector_store %arg7[%c0_30, %c0_31, %c0_32], %64 {strides = array<i32>} : memref<4x8x8xf32, #tpu.memory_space<vmem>>, vector<4x8x8xf32>,
      %66 = vector.extract_strided_slice %60 {offsets = [0, 32], sizes = [8, 32], strides = [1, 1]} : vector<8x96xf32> to vector<8x32xf32>
      %67 = vector.shape_cast %66 : vector<8x32xf32> to vector<1x8x4x8xf32>
      %68 = tpu.transpose %67, [0, 2, 1, 3] : vector<1x8x4x8xf32> -> vector<1x4x8x8xf32>
      %69 = vector.shape_cast %68 : vector<1x4x8x8xf32> to vector<4x8x8xf32>
      %c0_33 = arith.constant 0 : index
      %c0_34 = arith.constant 0 : index
      %c0_35 = arith.constant 0 : index
      %70 = vector.load %arg8[%c0_33, %c0_34, %c0_35] : memref<4x8x8xf32, #tpu.memory_space<vmem>>, vector<4x8x8xf32>
      tpu.vector_store %arg8[%c0_33, %c0_34, %c0_35], %69 {strides = array<i32>} : memref<4x8x8xf32, #tpu.memory_space<vmem>>, vector<4x8x8xf32>,
      %71 = vector.extract_strided_slice %60 {offsets = [0, 64], sizes = [8, 32], strides = [1, 1]} : vector<8x96xf32> to vector<8x32xf32>
      %72 = vector.shape_cast %71 : vector<8x32xf32> to vector<1x8x4x8xf32>
      %73 = tpu.transpose %72, [0, 2, 1, 3] : vector<1x8x4x8xf32> -> vector<1x4x8x8xf32>
      %74 = vector.shape_cast %73 : vector<1x4x8x8xf32> to vector<4x8x8xf32>
      %c0_36 = arith.constant 0 : index
      %c0_37 = arith.constant 0 : index
      %c0_38 = arith.constant 0 : index
      %75 = vector.load %arg9[%c0_36, %c0_37, %c0_38] : memref<4x8x8xf32, #tpu.memory_space<vmem>>, vector<4x8x8xf32>
      tpu.vector_store %arg9[%c0_36, %c0_37, %c0_38], %74 {strides = array<i32>} : memref<4x8x8xf32, #tpu.memory_space<vmem>>, vector<4x8x8xf32>,
    } else {
    }
    %c8_i32 = arith.constant 8 : i32
    %8 = arith.muli %arg1, %c8_i32 : i32
    %9 = tpu.assume_multiple %8, 8 : i32
    %c0_2 = arith.constant 0 : index
    %10 = arith.index_cast %9 : i32 to index
    %c0_3 = arith.constant 0 : index
    %11 = vector.load %arg7[%c0_2, %10, %c0_3] : memref<4x8x8xf32, #tpu.memory_space<vmem>>, vector<4x8x8xf32>
    %c0_4 = arith.constant 0 : index
    %c0_5 = arith.constant 0 : index
    %c0_6 = arith.constant 0 : index
    %12 = vector.load %arg8[%c0_4, %c0_5, %c0_6] : memref<4x8x8xf32, #tpu.memory_space<vmem>>, vector<4x8x8xf32>
    "tpu.trace_start"() <{level = 10 : i32, message = "nqd,nkd->nqk"}> : () -> ()
    %cst = arith.constant dense<0.000000e+00> : vector<4x8x8xf32>
    %13 = tpu.matmul %11, %12, %cst {dimension_numbers = #tpu.dot_dimension_numbers<[2], [2], [1], [1], [0, 0, 0, 1, 1, 1], [0], [0]>} : vector<4x8x8xf32>, vector<4x8x8xf32>, vector<4x8x8xf32> -> vector<4x8x8xf32>
    "tpu.trace_stop"() : () -> ()
    %cst_7 = arith.constant dense<0xFF800000> : vector<4x8xf32>
    %14 = vector.multi_reduction <maximumf>, %13, %cst_7 [2] : vector<4x8x8xf32> to vector<4x8xf32>
    %15 = vector.shape_cast %14 : vector<4x8xf32> to vector<4x8x1xf32>
    %16 = vector.broadcast %15 : vector<4x8x1xf32> to vector<4x8x8xf32>
    %17 = arith.subf %13, %16 : vector<4x8x8xf32>
    %18 = math.exp %17 : vector<4x8x8xf32>
    %cst_8 = arith.constant dense<0.000000e+00> : vector<4x8xf32>
    %19 = vector.multi_reduction <add>, %18, %cst_8 [2] : vector<4x8x8xf32> to vector<4x8xf32>
    %20 = vector.shape_cast %19 : vector<4x8xf32> to vector<4x8x1xf32>
    %c0_9 = arith.constant 0 : index
    %c0_10 = arith.constant 0 : index
    %c0_11 = arith.constant 0 : index
    %21 = vector.load %arg9[%c0_9, %c0_10, %c0_11] : memref<4x8x8xf32, #tpu.memory_space<vmem>>, vector<4x8x8xf32>
    "tpu.trace_start"() <{level = 10 : i32, message = "nqk,nkd->nqd"}> : () -> ()
    %cst_12 = arith.constant dense<0.000000e+00> : vector<4x8x8xf32>
    %22 = tpu.matmul %18, %21, %cst_12 {dimension_numbers = #tpu.dot_dimension_numbers<[2], [1], [1], [2], [0, 0, 0, 1, 1, 2], [0], [0]>} : vector<4x8x8xf32>, vector<4x8x8xf32>, vector<4x8x8xf32> -> vector<4x8x8xf32>
    "tpu.trace_stop"() : () -> ()
    %23 = tpu.reciprocal %20 {approx = true} : vector<4x8x1xf32> -> vector<4x8x1xf32>
    %24 = vector.broadcast %23 : vector<4x8x1xf32> to vector<4x8x8xf32>
    %25 = arith.mulf %22, %24 : vector<4x8x8xf32>
    %26 = vector.shape_cast %25 : vector<4x8x8xf32> to vector<1x4x8x8xf32>
    %27 = tpu.transpose %26, [0, 2, 1, 3] : vector<1x4x8x8xf32> -> vector<1x8x4x8xf32>
    %28 = vector.shape_cast %27 : vector<1x8x4x8xf32> to vector<8x32xf32>
    %c0_13 = arith.constant 0 : index
    %c0_14 = arith.constant 0 : index
    %29 = vector.load %arg4[%c0_13, %c0_14] : memref<32x32xf32, #tpu.memory_space<vmem>>, vector<32x32xf32>
    %cst_15 = arith.constant dense<0.000000e+00> : vector<8x32xf32>
    %30 = tpu.matmul %28, %29, %cst_15 {dimension_numbers = #tpu.dot_dimension_numbers<[1], [0], [0], [1], [0, 0, 1, 1], [], []>} : vector<8x32xf32>, vector<32x32xf32>, vector<8x32xf32> -> vector<8x32xf32>
    %31 = vector.broadcast %2 : vector<1x32xf32> to vector<8x32xf32>
    %32 = arith.addf %30, %31 : vector<8x32xf32>
    %cst_16 = arith.constant dense<0.000000e+00> : vector<8xf32>
    %33 = vector.multi_reduction <add>, %32, %cst_16 [1] : vector<8x32xf32> to vector<8xf32>
    %34 = vector.shape_cast %33 : vector<8xf32> to vector<8x1xf32>
    %cst_17 = arith.constant 3.200000e+01 : f32
    %35 = vector.broadcast %cst_17 : f32 to vector<8x1xf32>
    %36 = arith.divf %34, %35 : vector<8x1xf32>
    %37 = vector.broadcast %36 : vector<8x1xf32> to vector<8x32xf32>
    %38 = arith.subf %32, %37 : vector<8x32xf32>
    %39 = arith.mulf %38, %38 : vector<8x32xf32>
    %cst_18 = arith.constant dense<0.000000e+00> : vector<8xf32>
    %40 = vector.multi_reduction <add>, %39, %cst_18 [1] : vector<8x32xf32> to vector<8xf32>
    %41 = vector.shape_cast %40 : vector<8xf32> to vector<8x1xf32>
    %cst_19 = arith.constant 3.200000e+01 : f32
    %42 = vector.broadcast %cst_19 : f32 to vector<8x1xf32>
    %43 = arith.divf %41, %42 : vector<8x1xf32>
    %cst_20 = arith.constant 9.99999996E-13 : f32
    %44 = vector.broadcast %cst_20 : f32 to vector<8x1xf32>
    %45 = arith.addf %43, %44 : vector<8x1xf32>
    %46 = math.rsqrt %45 : vector<8x1xf32>
    %47 = vector.broadcast %46 : vector<8x1xf32> to vector<8x32xf32>
    %48 = arith.mulf %38, %47 : vector<8x32xf32>
    %49 = vector.broadcast %3 : vector<1x32xf32> to vector<8x32xf32>
    %50 = arith.mulf %48, %49 : vector<8x32xf32>
    %51 = vector.broadcast %4 : vector<1x32xf32> to vector<8x32xf32>
    %52 = arith.addf %50, %51 : vector<8x32xf32>
    %53 = vector.shape_cast %52 : vector<8x32xf32> to vector<1x8x32xf32>
    %c0_21 = arith.constant 0 : index
    %c0_22 = arith.constant 0 : index
    %c0_23 = arith.constant 0 : index
    %54 = vector.load %arg6[%c0_21, %c0_22, %c0_23] : memref<1x8x32xf32, #tpu.memory_space<vmem>>, vector<1x8x32xf32>
    tpu.vector_store %arg6[%c0_21, %c0_22, %c0_23], %53 {strides = array<i32>} : memref<1x8x32xf32, #tpu.memory_space<vmem>>, vector<1x8x32xf32>,
    return
  }
  func.func @transform_0(%arg0: i32, %arg1: i32) -> (i32, i32, i32) {
    %c0_i32 = arith.constant 0 : i32
    %c0_i32_0 = arith.constant 0 : i32
    %c0_i32_1 = arith.constant 0 : i32
    return %arg0, %c0_i32, %c0_i32_0 : i32, i32, i32
  }
  func.func @transform_1(%arg0: i32, %arg1: i32) -> (i32, i32) {
    %c0_i32 = arith.constant 0 : i32
    %c0_i32_0 = arith.constant 0 : i32
    %c0_i32_1 = arith.constant 0 : i32
    return %c0_i32, %c0_i32_0 : i32, i32
  }
  func.func @transform_2(%arg0: i32, %arg1: i32) -> (i32, i32) {
    %c0_i32 = arith.constant 0 : i32
    %c0_i32_0 = arith.constant 0 : i32
    %c0_i32_1 = arith.constant 0 : i32
    return %c0_i32, %c0_i32_0 : i32, i32
  }
  func.func @transform_3(%arg0: i32, %arg1: i32) -> (i32, i32) {
    %c0_i32 = arith.constant 0 : i32
    %c0_i32_0 = arith.constant 0 : i32
    %c0_i32_1 = arith.constant 0 : i32
    return %c0_i32, %c0_i32_0 : i32, i32
  }
  func.func @transform_4(%arg0: i32, %arg1: i32) -> (i32, i32, i32) {
    %c0_i32 = arith.constant 0 : i32
    %c0_i32_0 = arith.constant 0 : i32
    return %arg0, %arg1, %c0_i32 : i32, i32, i32
  }
}

module attributes {stable_mosaic.version = 11 : i64} {
  func.func @_mhsa_kernel(%arg0: i32, %arg1: i32, %arg2: memref<1x8x32xf32, #tpu.memory_space<vmem>>, %arg3: memref<32x96xf32, #tpu.memory_space<vmem>>, %arg4: memref<32x32xf32, #tpu.memory_space<vmem>>, %arg5: memref<8x96xf32, #tpu.memory_space<vmem>>, %arg6: memref<1x8x32xf32, #tpu.memory_space<vmem>>, %arg7: memref<4x8x8xf32, #tpu.memory_space<vmem>>, %arg8: memref<4x8x8xf32, #tpu.memory_space<vmem>>, %arg9: memref<4x8x8xf32, #tpu.memory_space<vmem>>) attributes {dimension_semantics = [#tpu.dimension_semantics<parallel>, #tpu.dimension_semantics<arbitrary>], iteration_bounds = array<i64: 2, 1>, scalar_prefetch = 0 : i64, scratch_operands = 3 : i64, tpu.core_type = #tpu.core_type<tc>, window_params = [{transform_indices = @transform_0, window_bounds = array<i64: 1, 8, 32>}, {pipeline_mode = #tpu.pipeline_mode<synchronous>, transform_indices = @transform_1, window_bounds = array<i64: 32, 96>}, {pipeline_mode = #tpu.pipeline_mode<synchronous>, transform_indices = @transform_2, window_bounds = array<i64: 32, 32>}, {pipeline_mode = #tpu.pipeline_mode<synchronous>, transform_indices = @transform_3, window_bounds = array<i64: 8, 96>}, {transform_indices = @transform_4, window_bounds = array<i64: 1, 8, 32>}]} {
    %c0 = arith.constant 0 : index
    %c0_0 = arith.constant 0 : index
    %0 = vector.load %arg5[%c0, %c0_0] : memref<8x96xf32, #tpu.memory_space<vmem>>, vector<8x96xf32>
    %1 = vector.extract_strided_slice %0 {offsets = [0, 0], sizes = [1, 96], strides = [1, 1]} : vector<8x96xf32> to vector<1x96xf32>
    %2 = vector.extract_strided_slice %0 {offsets = [1, 0], sizes = [1, 32], strides = [1, 1]} : vector<8x96xf32> to vector<1x32xf32>
    %3 = vector.extract_strided_slice %0 {offsets = [2, 0], sizes = [1, 32], strides = [1, 1]} : vector<8x96xf32> to vector<1x32xf32>
    %4 = vector.extract_strided_slice %0 {offsets = [3, 0], sizes = [1, 32], strides = [1, 1]} : vector<8x96xf32> to vector<1x32xf32>
    %c0_i32 = arith.constant 0 : i32
    %5 = arith.cmpi eq, %arg1, %c0_i32 : i32
    %6 = arith.extui %5 : i1 to i32
    %c0_i32_1 = arith.constant 0 : i32
    %7 = arith.cmpi ne, %6, %c0_i32_1 : i32
    scf.if %7 {
      %c0_24 = arith.constant 0 : index
      %c0_25 = arith.constant 0 : index
      %c0_26 = arith.constant 0 : index
      %55 = vector.load %arg2[%c0_24, %c0_25, %c0_26] : memref<1x8x32xf32, #tpu.memory_space<vmem>>, vector<1x8x32xf32>
      %56 = vector.shape_cast %55 : vector<1x8x32xf32> to vector<8x32xf32>
      %c0_27 = arith.constant 0 : index
      %c0_28 = arith.constant 0 : index
      %57 = vector.load %arg3[%c0_27, %c0_28] : memref<32x96xf32, #tpu.memory_space<vmem>>, vector<32x96xf32>
      %cst_29 = arith.constant dense<0.000000e+00> : vector<8x96xf32>
      %58 = tpu.matmul %56, %57, %cst_29 {dimension_numbers = #tpu.dot_dimension_numbers<[1], [0], [0], [1], [0, 0, 1, 1], [], []>} : vector<8x32xf32>, vector<32x96xf32>, vector<8x96xf32> -> vector<8x96xf32>
      %59 = vector.broadcast %1 : vector<1x96xf32> to vector<8x96xf32>
      %60 = arith.addf %58, %59 : vector<8x96xf32>
      %61 = vector.extract_strided_slice %60 {offsets = [0, 0], sizes = [8, 32], strides = [1, 1]} : vector<8x96xf32> to vector<8x32xf32>
      %62 = vector.shape_cast %61 : vector<8x32xf32> to vector<1x8x4x8xf32>
      %63 = tpu.transpose %62, [0, 2, 1, 3] : vector<1x8x4x8xf32> -> vector<1x4x8x8xf32>
      %64 = vector.shape_cast %63 : vector<1x4x8x8xf32> to vector<4x8x8xf32>
      %c0_30 = arith.constant 0 : index
      %c0_31 = arith.constant 0 : index
      %c0_32 = arith.constant 0 : index
      %65 = vector.load %arg7[%c0_30, %c0_31, %c0_32] : memref<4x8x8xf32, #tpu.memory_space<vmem>>, vector<4x8x8xf32>
      tpu.vector_store %arg7[%c0_30, %c0_31, %c0_32], %64 {strides = array<i32>} : memref<4x8x8xf32, #tpu.memory_space<vmem>>, vector<4x8x8xf32>,
      %66 = vector.extract_strided_slice %60 {offsets = [0, 32], sizes = [8, 32], strides = [1, 1]} : vector<8x96xf32> to vector<8x32xf32>
      %67 = vector.shape_cast %66 : vector<8x32xf32> to vector<1x8x4x8xf32>
      %68 = tpu.transpose %67, [0, 2, 1, 3] : vector<1x8x4x8xf32> -> vector<1x4x8x8xf32>
      %69 = vector.shape_cast %68 : vector<1x4x8x8xf32> to vector<4x8x8xf32>
      %c0_33 = arith.constant 0 : index
      %c0_34 = arith.constant 0 : index
      %c0_35 = arith.constant 0 : index
      %70 = vector.load %arg8[%c0_33, %c0_34, %c0_35] : memref<4x8x8xf32, #tpu.memory_space<vmem>>, vector<4x8x8xf32>
      tpu.vector_store %arg8[%c0_33, %c0_34, %c0_35], %69 {strides = array<i32>} : memref<4x8x8xf32, #tpu.memory_space<vmem>>, vector<4x8x8xf32>,
      %71 = vector.extract_strided_slice %60 {offsets = [0, 64], sizes = [8, 32], strides = [1, 1]} : vector<8x96xf32> to vector<8x32xf32>
      %72 = vector.shape_cast %71 : vector<8x32xf32> to vector<1x8x4x8xf32>
      %73 = tpu.transpose %72, [0, 2, 1, 3] : vector<1x8x4x8xf32> -> vector<1x4x8x8xf32>
      %74 = vector.shape_cast %73 : vector<1x4x8x8xf32> to vector<4x8x8xf32>
      %c0_36 = arith.constant 0 : index
      %c0_37 = arith.constant 0 : index
      %c0_38 = arith.constant 0 : index
      %75 = vector.load %arg9[%c0_36, %c0_37, %c0_38] : memref<4x8x8xf32, #tpu.memory_space<vmem>>, vector<4x8x8xf32>
      tpu.vector_store %arg9[%c0_36, %c0_37, %c0_38], %74 {strides = array<i32>} : memref<4x8x8xf32, #tpu.memory_space<vmem>>, vector<4x8x8xf32>,
    } else {
    }
    %c8_i32 = arith.constant 8 : i32
    %8 = arith.muli %arg1, %c8_i32 : i32
    %9 = tpu.assume_multiple %8, 8 : i32
    %c0_2 = arith.constant 0 : index
    %10 = arith.index_cast %9 : i32 to index
    %c0_3 = arith.constant 0 : index
    %11 = vector.load %arg7[%c0_2, %10, %c0_3] : memref<4x8x8xf32, #tpu.memory_space<vmem>>, vector<4x8x8xf32>
    %c0_4 = arith.constant 0 : index
    %c0_5 = arith.constant 0 : index
    %c0_6 = arith.constant 0 : index
    %12 = vector.load %arg8[%c0_4, %c0_5, %c0_6] : memref<4x8x8xf32, #tpu.memory_space<vmem>>, vector<4x8x8xf32>
    "tpu.trace_start"() <{level = 10 : i32, message = "nqd,nkd->nqk"}> : () -> ()
    %cst = arith.constant dense<0.000000e+00> : vector<4x8x8xf32>
    %13 = tpu.matmul %11, %12, %cst {dimension_numbers = #tpu.dot_dimension_numbers<[2], [2], [1], [1], [0, 0, 0, 1, 1, 1], [0], [0]>} : vector<4x8x8xf32>, vector<4x8x8xf32>, vector<4x8x8xf32> -> vector<4x8x8xf32>
    "tpu.trace_stop"() : () -> ()
    %cst_7 = arith.constant dense<0xFF800000> : vector<4x8xf32>
    %14 = vector.multi_reduction <maximumf>, %13, %cst_7 [2] : vector<4x8x8xf32> to vector<4x8xf32>
    %15 = vector.shape_cast %14 : vector<4x8xf32> to vector<4x8x1xf32>
    %16 = vector.broadcast %15 : vector<4x8x1xf32> to vector<4x8x8xf32>
    %17 = arith.subf %13, %16 : vector<4x8x8xf32>
    %18 = math.exp %17 : vector<4x8x8xf32>
    %cst_8 = arith.constant dense<0.000000e+00> : vector<4x8xf32>
    %19 = vector.multi_reduction <add>, %18, %cst_8 [2] : vector<4x8x8xf32> to vector<4x8xf32>
    %20 = vector.shape_cast %19 : vector<4x8xf32> to vector<4x8x1xf32>
    %c0_9 = arith.constant 0 : index
    %c0_10 = arith.constant 0 : index
    %c0_11 = arith.constant 0 : index
    %21 = vector.load %arg9[%c0_9, %c0_10, %c0_11] : memref<4x8x8xf32, #tpu.memory_space<vmem>>, vector<4x8x8xf32>
    "tpu.trace_start"() <{level = 10 : i32, message = "nqk,nkd->nqd"}> : () -> ()
    %cst_12 = arith.constant dense<0.000000e+00> : vector<4x8x8xf32>
    %22 = tpu.matmul %18, %21, %cst_12 {dimension_numbers = #tpu.dot_dimension_numbers<[2], [1], [1], [2], [0, 0, 0, 1, 1, 2], [0], [0]>} : vector<4x8x8xf32>, vector<4x8x8xf32>, vector<4x8x8xf32> -> vector<4x8x8xf32>
    "tpu.trace_stop"() : () -> ()
    %23 = tpu.reciprocal %20 {approx = true} : vector<4x8x1xf32> -> vector<4x8x1xf32>
    %24 = vector.broadcast %23 : vector<4x8x1xf32> to vector<4x8x8xf32>
    %25 = arith.mulf %22, %24 : vector<4x8x8xf32>
    %26 = vector.shape_cast %25 : vector<4x8x8xf32> to vector<1x4x8x8xf32>
    %27 = tpu.transpose %26, [0, 2, 1, 3] : vector<1x4x8x8xf32> -> vector<1x8x4x8xf32>
    %28 = vector.shape_cast %27 : vector<1x8x4x8xf32> to vector<8x32xf32>
    %c0_13 = arith.constant 0 : index
    %c0_14 = arith.constant 0 : index
    %29 = vector.load %arg4[%c0_13, %c0_14] : memref<32x32xf32, #tpu.memory_space<vmem>>, vector<32x32xf32>
    %cst_15 = arith.constant dense<0.000000e+00> : vector<8x32xf32>
    %30 = tpu.matmul %28, %29, %cst_15 {dimension_numbers = #tpu.dot_dimension_numbers<[1], [0], [0], [1], [0, 0, 1, 1], [], []>} : vector<8x32xf32>, vector<32x32xf32>, vector<8x32xf32> -> vector<8x32xf32>
    %31 = vector.broadcast %2 : vector<1x32xf32> to vector<8x32xf32>
    %32 = arith.addf %30, %31 : vector<8x32xf32>
    %cst_16 = arith.constant dense<0.000000e+00> : vector<8xf32>
    %33 = vector.multi_reduction <add>, %32, %cst_16 [1] : vector<8x32xf32> to vector<8xf32>
    %34 = vector.shape_cast %33 : vector<8xf32> to vector<8x1xf32>
    %cst_17 = arith.constant 3.200000e+01 : f32
    %35 = vector.broadcast %cst_17 : f32 to vector<8x1xf32>
    %36 = arith.divf %34, %35 : vector<8x1xf32>
    %37 = vector.broadcast %36 : vector<8x1xf32> to vector<8x32xf32>
    %38 = arith.subf %32, %37 : vector<8x32xf32>
    %39 = arith.mulf %38, %38 : vector<8x32xf32>
    %cst_18 = arith.constant dense<0.000000e+00> : vector<8xf32>
    %40 = vector.multi_reduction <add>, %39, %cst_18 [1] : vector<8x32xf32> to vector<8xf32>
    %41 = vector.shape_cast %40 : vector<8xf32> to vector<8x1xf32>
    %cst_19 = arith.constant 3.200000e+01 : f32
    %42 = vector.broadcast %cst_19 : f32 to vector<8x1xf32>
    %43 = arith.divf %41, %42 : vector<8x1xf32>
    %cst_20 = arith.constant 9.99999996E-13 : f32
    %44 = vector.broadcast %cst_20 : f32 to vector<8x1xf32>
    %45 = arith.addf %43, %44 : vector<8x1xf32>
    %46 = math.rsqrt %45 : vector<8x1xf32>
    %47 = vector.broadcast %46 : vector<8x1xf32> to vector<8x32xf32>
    %48 = arith.mulf %38, %47 : vector<8x32xf32>
    %49 = vector.broadcast %3 : vector<1x32xf32> to vector<8x32xf32>
    %50 = arith.mulf %48, %49 : vector<8x32xf32>
    %51 = vector.broadcast %4 : vector<1x32xf32> to vector<8x32xf32>
    %52 = arith.addf %50, %51 : vector<8x32xf32>
    %53 = vector.shape_cast %52 : vector<8x32xf32> to vector<1x8x32xf32>
    %c0_21 = arith.constant 0 : index
    %c0_22 = arith.constant 0 : index
    %c0_23 = arith.constant 0 : index
    %54 = vector.load %arg6[%c0_21, %c0_22, %c0_23] : memref<1x8x32xf32, #tpu.memory_space<vmem>>, vector<1x8x32xf32>
    tpu.vector_store %arg6[%c0_21, %c0_22, %c0_23], %53 {strides = array<i32>} : memref<1x8x32xf32, #tpu.memory_space<vmem>>, vector<1x8x32xf32>,
    return
  }
  func.func @transform_0(%arg0: i32, %arg1: i32) -> (i32, i32, i32) {
    %c0_i32 = arith.constant 0 : i32
    %c0_i32_0 = arith.constant 0 : i32
    %c0_i32_1 = arith.constant 0 : i32
    return %arg0, %c0_i32, %c0_i32_0 : i32, i32, i32
  }
  func.func @transform_1(%arg0: i32, %arg1: i32) -> (i32, i32) {
    %c0_i32 = arith.constant 0 : i32
    %c0_i32_0 = arith.constant 0 : i32
    %c0_i32_1 = arith.constant 0 : i32
    return %c0_i32, %c0_i32_0 : i32, i32
  }
  func.func @transform_2(%arg0: i32, %arg1: i32) -> (i32, i32) {
    %c0_i32 = arith.constant 0 : i32
    %c0_i32_0 = arith.constant 0 : i32
    %c0_i32_1 = arith.constant 0 : i32
    return %c0_i32, %c0_i32_0 : i32, i32
  }
  func.func @transform_3(%arg0: i32, %arg1: i32) -> (i32, i32) {
    %c0_i32 = arith.constant 0 : i32
    %c0_i32_0 = arith.constant 0 : i32
    %c0_i32_1 = arith.constant 0 : i32
    return %c0_i32, %c0_i32_0 : i32, i32
  }
  func.func @transform_4(%arg0: i32, %arg1: i32) -> (i32, i32, i32) {
    %c0_i32 = arith.constant 0 : i32
    %c0_i32_0 = arith.constant 0 : i32
    return %arg0, %arg1, %c0_i32 : i32, i32, i32
  }
}

</mosaic_0001>

<llo_original>
// kernel: tpu_custom_call.1
$region0: #{tpu_custom_call.1}
  #allocation0 [shape = 'u32[]', space=smem, size = 0x4, offset = 0x4, fixed_abs, tag = 'smem constant byte address 0x4 - core index']
  #allocation1 [shape = 'u32[144,128]{1,0:T(1,128)}', space=vmem, size = 0x12000, scoped, tag = 'internal scratch']
  #allocation2 [shape = 'f32[4,8,8]{2,1,0:T(8,128)}', space=vmem, size = 0x4000, scoped, tag = 'scratch operand']
  #allocation3 [shape = 'f32[4,8,8]{2,1,0:T(8,128)}', space=vmem, size = 0x4000, scoped, tag = 'scratch operand']
  #allocation4 [shape = 'f32[4,8,8]{2,1,0:T(8,128)}', space=vmem, size = 0x4000, scoped, tag = 'scratch operand']
  %s0 = inlined_call_operand.hbm [shape: f32[2,8,32], index: 0, kind: input, shape index: {}]
  %s1 = inlined_call_operand.hbm [shape: f32[32,96], index: 1, kind: input, shape index: {}]
  %s2 = inlined_call_operand.hbm [shape: f32[32,32], index: 2, kind: input, shape index: {}]
  %s3 = inlined_call_operand.hbm [shape: f32[8,96], index: 3, kind: input, shape index: {}]
  %s4 = inlined_call_operand.hbm [shape: f32[2,8,32], index: 4, kind: output, shape index: {}]
  %s5 = sld [smem:[#allocation0]]
  $region69: #{tpu_custom_call.1} parent=0
    _
  %s7 = ssub.s32 1, %s5
  %s8 = scalar_select 0, %s7, %s5
  $region1: #{tpu_custom_call.1} parent=0
    #allocation5 [shape = 'u8[8192]{0}', space=vmem, size = 0x2000, scoped, tag = 'input window, operand 0']
    #allocation6 [shape = 's32[2]{0}', space=sflag, size = 0x8, scoped, tag = 'scoped memory for tpu_custom_call.1']
    #allocation7 [shape = 's32[2]{0}', space=sflag, size = 0x8, scoped, tag = 'scoped memory for tpu_custom_call.1']
    #allocation8 [shape = 'u8[16384]{0}', space=vmem, size = 0x4000, scoped, tag = 'input window, operand 1, single buffered']
    #allocation9 [shape = 's32[1]{0}', space=sflag, size = 0x4, scoped, tag = 'scoped memory for tpu_custom_call.1']
    #allocation10 [shape = 'u8[16384]{0}', space=vmem, size = 0x4000, scoped, tag = 'input window, operand 2, single buffered']
    #allocation11 [shape = 'u8[4096]{0}', space=vmem, size = 0x1000, scoped, tag = 'input window, operand 3, single buffered']
    #allocation12 [shape = 's32[1]{0}', space=sflag, size = 0x4, scoped, tag = 'scoped memory for tpu_custom_call.1']
    #allocation13 [shape = 'u8[8192]{0}', space=vmem, size = 0x2000, scoped, tag = 'output window, operand 0']
    %9 = vsyncpa [#allocation6], 0
    %s10 = scalar_lea.sflag [#allocation6], 1
    %11 = vsyncpa %s10, 0
    %12 = vsyncpa [#allocation9], 0
    %13 = vsyncpa [#allocation12], 0
    %14 = vsyncpa [#allocation7], 0
    %s15 = scalar_lea.sflag [#allocation7], 1
    %16 = vsyncpa %s15, 0
    loop: start=0, step=1, limit=4
    $region2: #{tpu_custom_call.1} parent=1 // loop_pre_header
      _
    $region3: #{tpu_custom_call.1} parent=1 // loop_header
      %s18 = sphi 0, %s22
      %p19 = scmp.ge.s32.totalorder %s18, 4
      %s25 = sphi 0, %s37
      %s26 = sphi 0, %s33
      %s27 = sphi 0, %s25
      %s28 = sphi 0, %s26
      %s29 = sphi 0, %s27
      %s30 = sphi 0, %s28
      %s40 = sphi 0, %s42
      %s43 = sphi 0, %s40
      %s44 = sphi 0, %s43
      %s60 = sphi 0, %s44
      %s64 = sphi 0, %s64
      %s66 = sphi 0, %s64
      %s67 = sphi 0, %s66
      %s81 = sphi 0, %s67
      %s85 = sphi 0, %s85
      %s87 = sphi 0, %s85
      %s88 = sphi 0, %s87
      %s102 = sphi 0, %s88
      %s106 = sphi 0, %s106
      %s108 = sphi 0, %s106
      %s109 = sphi 0, %s108
      %s123 = sphi 0, %s109
      %s131 = sphi 0, %s133
      %s134 = sphi 0, %s131
      %s135 = sphi 0, %s134
      %s151 = sphi 0, %s135
    $region4: #{tpu_custom_call.1} parent=1 // loop_header_branch
      %21 = sbr.rel (%p19) target = $region8
    $region5: #{tpu_custom_call.1} parent=1 // loop_body
      %s23 = ssub.s32 %s18, 1
      %s24 = ssub.s32 %s18, 2
      %s31 = sadd.s32 1, %s26
      %p32 = scmp.ge.s32.totalorder %s31, 1
      %s33 = scalar_select %p32, 0, %s31
      %s34 = sadd.s32 1, %s25
      %s35 = scalar_select %p32, %s34, %s25
      %p36 = scmp.ge.s32.totalorder %s35, 2
      %s37 = scalar_select %p36, 0, %s35
      %s38 = ssub.s32 %s25, %s37
      %p39 = scmp.eq.s32.totalorder %s38, 0
      %s41 = sadd.s32 %s40, 1
      %s42 = scalar_select %p39, %s40, %s41
      %p45 = pneg %p39
      %p46 = scmp.eq.s32.totalorder %s18, 1
      %p47 = por %p45, %p46
      %p48 = scmp.ne.s32.totalorder %s40, %s43
      %p49 = scmp.eq.s32.totalorder %s18, 0
      %p50 = por %p48, %p49
      %p51 = scmp.ne.s32.totalorder %s40, %s43
      %p52 = scmp.eq.s32.totalorder %s23, 1
      %p53 = por %p51, %p52
      %p54 = scmp.ne.s32.totalorder %s43, %s44
      %p55 = scmp.eq.s32.totalorder %s23, 0
      %p56 = por %p54, %p55
      %p57 = scmp.ne.s32.totalorder %s43, %s44
      %p58 = scmp.eq.s32.totalorder %s24, 1
      %p59 = por %p57, %p58
      %p61 = scmp.ne.s32.totalorder %s44, %s60
      %p62 = scmp.eq.s32.totalorder %s24, 0
      %p63 = por %p61, %p62
      %s65 = sadd.s32 %s64, 1
      %p68 = scmp.eq.s32.totalorder %s18, 1
      %p69 = scmp.ne.s32.totalorder %s64, %s66
      %p70 = scmp.eq.s32.totalorder %s18, 0
      %p71 = por %p69, %p70
      %p72 = scmp.ne.s32.totalorder %s64, %s66
      %p73 = scmp.eq.s32.totalorder %s23, 1
      %p74 = por %p72, %p73
      %p75 = scmp.ne.s32.totalorder %s66, %s67
      %p76 = scmp.eq.s32.totalorder %s23, 0
      %p77 = por %p75, %p76
      %p78 = scmp.ne.s32.totalorder %s66, %s67
      %p79 = scmp.eq.s32.totalorder %s24, 1
      %p80 = por %p78, %p79
      %p82 = scmp.ne.s32.totalorder %s67, %s81
      %p83 = scmp.eq.s32.totalorder %s24, 0
      %p84 = por %p82, %p83
      %s86 = sadd.s32 %s85, 1
      %p89 = scmp.eq.s32.totalorder %s18, 1
      %p90 = scmp.ne.s32.totalorder %s85, %s87
      %p91 = scmp.eq.s32.totalorder %s18, 0
      %p92 = por %p90, %p91
      %p93 = scmp.ne.s32.totalorder %s85, %s87
      %p94 = scmp.eq.s32.totalorder %s23, 1
      %p95 = por %p93, %p94
      %p96 = scmp.ne.s32.totalorder %s87, %s88
      %p97 = scmp.eq.s32.totalorder %s23, 0
      %p98 = por %p96, %p97
      %p99 = scmp.ne.s32.totalorder %s87, %s88
      %p100 = scmp.eq.s32.totalorder %s24, 1
      %p101 = por %p99, %p100
      %p103 = scmp.ne.s32.totalorder %s88, %s102
      %p104 = scmp.eq.s32.totalorder %s24, 0
      %p105 = por %p103, %p104
      %s107 = sadd.s32 %s106, 1
      %p110 = scmp.eq.s32.totalorder %s18, 1
      %p111 = scmp.ne.s32.totalorder %s106, %s108
      %p112 = scmp.eq.s32.totalorder %s18, 0
      %p113 = por %p111, %p112
      %p114 = scmp.ne.s32.totalorder %s106, %s108
      %p115 = scmp.eq.s32.totalorder %s23, 1
      %p116 = por %p114, %p115
      %p117 = scmp.ne.s32.totalorder %s108, %s109
      %p118 = scmp.eq.s32.totalorder %s23, 0
      %p119 = por %p117, %p118
      %p120 = scmp.ne.s32.totalorder %s108, %s109
      %p121 = scmp.eq.s32.totalorder %s24, 1
      %p122 = por %p120, %p121
      %p124 = scmp.ne.s32.totalorder %s109, %s123
      %p125 = scmp.eq.s32.totalorder %s24, 0
      %p126 = por %p124, %p125
      %s127 = ssub.s32 %s25, %s37
      %s128 = ssub.s32 %s26, %s33
      %s129 = sor.u32 %s127, %s128
      %p130 = scmp.eq.s32.totalorder %s129, 0
      %s132 = sadd.s32 %s131, 1
      %s133 = scalar_select %p130, %s131, %s132
      %p136 = pneg %p130
      %p137 = scmp.eq.s32.totalorder %s18, 1
      %p138 = por %p136, %p137
      %p139 = scmp.ne.s32.totalorder %s131, %s134
      %p140 = scmp.eq.s32.totalorder %s18, 0
      %p141 = por %p139, %p140
      %p142 = scmp.ne.s32.totalorder %s131, %s134
      %p143 = scmp.eq.s32.totalorder %s23, 1
      %p144 = por %p142, %p143
      %p145 = scmp.ne.s32.totalorder %s134, %s135
      %p146 = scmp.eq.s32.totalorder %s23, 0
      %p147 = por %p145, %p146
      %p148 = scmp.ne.s32.totalorder %s134, %s135
      %p149 = scmp.eq.s32.totalorder %s24, 1
      %p150 = por %p148, %p149
      %p152 = scmp.ne.s32.totalorder %s135, %s151
      %p153 = scmp.eq.s32.totalorder %s24, 0
      %p154 = por %p152, %p153
      %p155 = scmp.le.s32.totalorder 1, %s18
      %p156 = scmp.lt.s32.totalorder %s18, 3
      %p157 = pnand %p155, %p156
      %p158 = pneg %p157
      // Predicated region
      $region9: #{tpu_custom_call.1} parent=5 // pred_check
        _
      $region10: #{tpu_custom_call.1} parent=5 // pred_check_branch
        %160 = sbr.rel (%p157) target = $region12
      $region11: #{tpu_custom_call.1} parent=5 // pred_region
        %s161 = ssub.s32 %s18, 1
        // Predicated region
        $region13: #{tpu_custom_call.1} parent=11 // pred_check
          %p162 = pneg %p77
        $region14: #{tpu_custom_call.1} parent=11 // pred_check_branch
          %164 = sbr.rel (%p162) target = $region16
        $region15: #{tpu_custom_call.1} parent=11 // pred_region
          %s166 = ssub.s32 512, 512
          %167 = vsyncadd [#allocation9], %s166
          %s168 = sshll.u32 [#allocation8], 4
          %s169 = int_to_ptr.vmem [resolvable:$true] %s168
          %174 = dma.hbm_to_vmem [thread:$0]  %s1, 512, %s169, [#allocation9], 128, 128, 8
        $region16: #{tpu_custom_call.1} parent=11 // pred_fallthru
          _
        // Predicated region
        $region17: #{tpu_custom_call.1} parent=11 // pred_check
          %p175 = pneg %p98
        $region18: #{tpu_custom_call.1} parent=11 // pred_check_branch
          %177 = sbr.rel (%p175) target = $region20
        $region19: #{tpu_custom_call.1} parent=11 // pred_region
          %s179 = ssub.s32 512, 512
          %180 = vsyncadd [#allocation9], %s179
          %s181 = sshll.u32 [#allocation10], 4
          %s182 = int_to_ptr.vmem [resolvable:$true] %s181
          %187 = dma.hbm_to_vmem [thread:$0]  %s2, 512, %s182, [#allocation9], 128, 128, 8
        $region20: #{tpu_custom_call.1} parent=11 // pred_fallthru
          _
        // Predicated region
        $region21: #{tpu_custom_call.1} parent=11 // pred_check
          %p188 = pneg %p119
        $region22: #{tpu_custom_call.1} parent=11 // pred_check_branch
          %190 = sbr.rel (%p188) target = $region24
        $region23: #{tpu_custom_call.1} parent=11 // pred_region
          %s192 = ssub.s32 128, 128
          %193 = vsyncadd [#allocation12], %s192
          %s195 = sshll.u32 [#allocation11], 4
          %s196 = int_to_ptr.vmem [resolvable:$true] %s195
          %198 = dma.hbm_to_vmem [thread:$0]  %s3, 128, %s196, [#allocation12]
        $region24: #{tpu_custom_call.1} parent=11 // pred_fallthru
          _
      $region12: #{tpu_custom_call.1} parent=5 // pred_fallthru
        _
      %p199 = scmp.lt.s32.totalorder %s18, 2
      // Predicated region
      $region25: #{tpu_custom_call.1} parent=5 // pred_check
        %p200 = pneg %p199
      $region26: #{tpu_custom_call.1} parent=5 // pred_check_branch
        %202 = sbr.rel (%p200) target = $region28
      $region27: #{tpu_custom_call.1} parent=5 // pred_region
        // Predicated region
        $region29: #{tpu_custom_call.1} parent=27 // pred_check
          %p203 = pneg %p50
        $region30: #{tpu_custom_call.1} parent=27 // pred_check_branch
          %205 = sbr.rel (%p203) target = $region32
        $region31: #{tpu_custom_call.1} parent=27 // pred_region
          %s206 = sand.u32 %s40, 1
          %s207 = scalar_lea.sflag [#allocation6], %s206
          %s208 = sand.u32 %s40, 1
          %s209 = smul.addr %s208, 8
          %s210 = scalar_lea.vmem [#allocation5], %s209
          %s212 = ssub.s32 128, 128
          %213 = vsyncadd %s207, %s212
          %s214 = smul.addr %s25, 128
          %s215 = scalar_lea.hbm %s0, %s214
          %s217 = sshll.u32 %s210, 4
          %s218 = int_to_ptr.vmem [resolvable:$true] %s217
          %220 = dma.hbm_to_vmem [thread:$0]  %s215, 128, %s218, %s207
        $region32: #{tpu_custom_call.1} parent=27 // pred_fallthru
          _
      $region28: #{tpu_custom_call.1} parent=5 // pred_fallthru
        _
      %p221 = scmp.le.s32.totalorder 1, %s18
      %p222 = scmp.lt.s32.totalorder %s18, 3
      %p223 = pnand %p221, %p222
      %p224 = pneg %p223
      // Predicated region
      $region33: #{tpu_custom_call.1} parent=5 // pred_check
        _
      $region34: #{tpu_custom_call.1} parent=5 // pred_check_branch
        %226 = sbr.rel (%p223) target = $region36
      $region35: #{tpu_custom_call.1} parent=5 // pred_region
        %s227 = ssub.s32 %s18, 1
        %s228 = sand.u32 %s43, 1
        %s229 = scalar_lea.sflag [#allocation6], %s228
        %s230 = sand.u32 %s43, 1
        %s231 = smul.addr %s230, 8
        %s232 = scalar_lea.vmem [#allocation5], %s231
        // Predicated region
        $region37: #{tpu_custom_call.1} parent=35 // pred_check
          %p233 = pneg %p56
        $region38: #{tpu_custom_call.1} parent=35 // pred_check_branch
          %235 = sbr.rel (%p233) target = $region40
        $region39: #{tpu_custom_call.1} parent=35 // pred_region
          %236 = dma.done %s229, 128
        $region40: #{tpu_custom_call.1} parent=35 // pred_fallthru
          _
        // Predicated region
        $region41: #{tpu_custom_call.1} parent=35 // pred_check
          %p237 = pneg %p77
        $region42: #{tpu_custom_call.1} parent=35 // pred_check_branch
          %239 = sbr.rel (%p237) target = $region44
        $region43: #{tpu_custom_call.1} parent=35 // pred_region
          %240 = dma.done [#allocation9], 512
        $region44: #{tpu_custom_call.1} parent=35 // pred_fallthru
          _
        // Predicated region
        $region45: #{tpu_custom_call.1} parent=35 // pred_check
          %p241 = pneg %p98
        $region46: #{tpu_custom_call.1} parent=35 // pred_check_branch
          %243 = sbr.rel (%p241) target = $region48
        $region47: #{tpu_custom_call.1} parent=35 // pred_region
          %244 = dma.done [#allocation9], 512
        $region48: #{tpu_custom_call.1} parent=35 // pred_fallthru
          _
        // Predicated region
        $region49: #{tpu_custom_call.1} parent=35 // pred_check
          %p245 = pneg %p119
        $region50: #{tpu_custom_call.1} parent=35 // pred_check_branch
          %247 = sbr.rel (%p245) target = $region52
        $region51: #{tpu_custom_call.1} parent=35 // pred_region
          %248 = dma.done [#allocation12], 128
        $region52: #{tpu_custom_call.1} parent=35 // pred_fallthru
          _
        %s249 = sand.u32 %s43, 1
        %s250 = scalar_lea.sflag [#allocation6], %s249
        %s251 = sand.u32 %s43, 1
        %s252 = smul.addr %s251, 8
        %s253 = scalar_lea.vmem [#allocation5], %s252
        %p254 = pneg %p56
        %p255 = pneg %p53
        %p256 = pneg %p77
        %p257 = pneg %p74
        %p258 = pneg %p98
        %p259 = pneg %p95
        %p260 = pneg %p119
        %p261 = pneg %p116
        %p262 = pneg %p147
        %p263 = pneg %p144
        %s264 = sand.u32 %s134, 1
        %s265 = scalar_lea.sflag [#allocation7], %s264
        %s266 = sand.u32 %s134, 1
        %s267 = smul.addr %s266, 8
        %s268 = scalar_lea.vmem [#allocation13], %s267
        %v269 = vld [vmem:[#allocation11] sm:$0xff]
        %p270 = scmp.eq.s32.totalorder %s28, 0
        // Predicated region
        $region53: #{tpu_custom_call.1} parent=35 // pred_check
          %p271 = pneg %p270
        $region54: #{tpu_custom_call.1} parent=35 // pred_check_branch
          %273 = sbr.rel (%p271) target = $region56
        $region55: #{tpu_custom_call.1} parent=35 // pred_region
          %v274 = vld [vmem:[%s232] sm:$0xff]
          %v275 = vld [vmem:[#allocation8] sm:$0xff]
          %v276 = vld [vmem:[#allocation8 + $0x8] sm:$0xff]
          %v277 = vld [vmem:[#allocation8 + $0x10] sm:$0xff]
          %v278 = vld [vmem:[#allocation8 + $0x18] sm:$0xff]
          %v279 = vlaneseq
          %v280 = vshrl.u32 %v279, 7
          %v281 = vsub.s32 0, %v280
          %v282 = vrot.slane %v269, %v281
          %vm283 = vcmask 261120
          %v285 = vsel %vm283, %v274, 0
          %287 = vmatprep.subr.mxu0 0.0
          %288 = vmatpush1.msra.mxu0 0.0
          %289 = vmatprep.subr.mxu0 0.0
          %290 = vmatpush1.msra.mxu0 0.0
          %291 = vmatprep.subr.mxu0 0.0
          %292 = vmatpush1.msra.mxu0 0.0
          %293 = vmatprep.subr.mxu0 0.0
          %294 = vmatpush1.msra.mxu0 0.0
          %295 = vmatprep.subr.mxu0 0.0
          %296 = vmatpush1.msra.mxu0 0.0
          %297 = vmatprep.subr.mxu0 0.0
          %298 = vmatpush1.msra.mxu0 0.0
          %299 = vmatprep.subr.mxu0 0.0
          %300 = vmatpush1.msra.mxu0 0.0
          %301 = vmatprep.subr.mxu0 0.0
          %302 = vmatpush1.msra.mxu0 0.0
          %303 = vmatprep.subr.mxu0 0.0
          %304 = vmatpush1.msra.mxu0 0.0
          %305 = vmatprep.subr.mxu0 0.0
          %306 = vmatpush1.msra.mxu0 0.0
          %307 = vmatprep.subr.mxu0 0.0
          %308 = vmatpush1.msra.mxu0 0.0
          %309 = vmatprep.subr.mxu0 0.0
          %310 = vmatpush1.msra.mxu0 0.0
          %311 = vmatprep.subr.mxu0 0.0
          %312 = vmatpush1.msra.mxu0 %v278
          %313 = vmatprep.subr.mxu0 0.0
          %314 = vmatpush1.msra.mxu0 %v277
          %315 = vmatprep.subr.mxu0 0.0
          %316 = vmatpush1.msra.mxu0 %v276
          %317 = vmatprep.subr.mxu0 0.0
          %318 = vmatpush1.msra.mxu0 %v275
          %319 = vmatprep.subr.mxu0 0.0
          %320 = vmatpush2.msra.mxu0 0.0
          %321 = vmatprep.subr.mxu0 0.0
          %322 = vmatpush2.msra.mxu0 0.0
          %323 = vmatprep.subr.mxu0 0.0
          %324 = vmatpush2.msra.mxu0 0.0
          %325 = vmatprep.subr.mxu0 0.0
          %326 = vmatpush2.msra.mxu0 0.0
          %327 = vmatprep.subr.mxu0 0.0
          %328 = vmatpush2.msra.mxu0 0.0
          %329 = vmatprep.subr.mxu0 0.0
          %330 = vmatpush2.msra.mxu0 0.0
          %331 = vmatprep.subr.mxu0 0.0
          %332 = vmatpush2.msra.mxu0 0.0
          %333 = vmatprep.subr.mxu0 0.0
          %334 = vmatpush2.msra.mxu0 0.0
          %335 = vmatprep.subr.mxu0 0.0
          %336 = vmatpush2.msra.mxu0 0.0
          %337 = vmatprep.subr.mxu0 0.0
          %338 = vmatpush2.msra.mxu0 0.0
          %339 = vmatprep.subr.mxu0 0.0
          %340 = vmatpush2.msra.mxu0 0.0
          %341 = vmatprep.subr.mxu0 0.0
          %342 = vmatpush2.msra.mxu0 0.0
          %343 = vmatprep.subr.mxu0 0.0
          %344 = vmatpush2.msra.mxu0 0.0
          %345 = vmatprep.subr.mxu0 0.0
          %346 = vmatpush2.msra.mxu0 0.0
          %347 = vmatprep.subr.mxu0 0.0
          %348 = vmatpush2.msra.mxu0 0.0
          %349 = vmatprep.subr.mxu0 0.0
          %350 = vmatpush2.msra.mxu0 0.0
          %351 = vmatprep.mubr.f32.mxu0 0.0
          %352 = vmatmul.mubr.f32.gmra.mxu0 %v285
          %v353 = vpop.f32.mrf.mxu0
          %v354 = vadd.f32 %v282, %v353
          %v355 = vpop.f32.mrf.mxu0
          %356 = vdwg.mxu0
          %358 = vrot.lane.b32.xlu0 %v354, 120
          %v359 = vpop.permute.xlu0 %358
          %361 = vrot.lane.b32.xlu0 %v354, 112
          %v362 = vpop.permute.xlu0 %361
          %364 = vrot.lane.b32.xlu0 %v354, 104
          %v365 = vpop.permute.xlu0 %364
          %v367 = vcombine.low %v354, %v362
          %v368 = vcombine.high %v354, %v362
          %v370 = vunpack.c.l.s4 1983009808
          %v371 = vunpack.c.0.s8 %v370
          %v372 = vlaneseq
          %v373 = vshrl.u32 %v372, 7
          %v374 = vsub.s32 %v371, %v373
          %v375 = vrot.slane %v367, %v374
          %v377 = vunpack.c.l.s4 1983009808
          %v378 = vunpack.c.0.s8 %v377
          %v379 = vlaneseq
          %v380 = vshrl.u32 %v379, 7
          %v381 = vsub.s32 %v378, %v380
          %v382 = vrot.slane %v368, %v381
          %v383 = vcombine.low %v359, %v365
          %v384 = vcombine.high %v359, %v365
          %v386 = vunpack.c.l.s4 1983009808
          %v387 = vunpack.c.0.s8 %v386
          %v388 = vlaneseq
          %v389 = vshrl.u32 %v388, 7
          %v390 = vsub.s32 %v387, %v389
          %v391 = vrot.slane %v383, %v390
          %v393 = vunpack.c.l.s4 1983009808
          %v394 = vunpack.c.0.s8 %v393
          %v395 = vlaneseq
          %v396 = vshrl.u32 %v395, 7
          %v397 = vsub.s32 %v394, %v396
          %v398 = vrot.slane %v384, %v397
          %v399 = vcombine.low %v375, %v391
          %v400 = vcombine.high %v375, %v391
          %v402 = vunpack.c.l.s4 1934713408
          %v403 = vunpack.c.0.s8 %v402
          %v404 = vlaneseq
          %v405 = vshrl.u32 %v404, 7
          %v406 = vsub.s32 %v403, %v405
          %v407 = vrot.slane %v399, %v406
          %v409 = vunpack.c.l.s4 1934713408
          %v410 = vunpack.c.0.s8 %v409
          %v411 = vlaneseq
          %v412 = vshrl.u32 %v411, 7
          %v413 = vsub.s32 %v410, %v412
          %v414 = vrot.slane %v400, %v413
          %v415 = vcombine.low %v382, %v398
          %v416 = vcombine.high %v382, %v398
          %v418 = vunpack.c.l.s4 1934713408
          %v419 = vunpack.c.0.s8 %v418
          %v420 = vlaneseq
          %v421 = vshrl.u32 %v420, 7
          %v422 = vsub.s32 %v419, %v421
          %v423 = vrot.slane %v415, %v422
          %v425 = vunpack.c.l.s4 1934713408
          %v426 = vunpack.c.0.s8 %v425
          %v427 = vlaneseq
          %v428 = vshrl.u32 %v427, 7
          %v429 = vsub.s32 %v426, %v428
          %v430 = vrot.slane %v416, %v429
          %v431 = vcombine.high %v407, 0.0
          %v432 = vcombine.high %v414, 0.0
          %v433 = vcombine.high %v423, 0.0
          %v434 = vcombine.high %v430, 0.0
          %v435 = vcombine.low %v407, %v414
          %v437 = vunpack.c.l.s4 1983009808
          %v438 = vunpack.c.0.s8 %v437
          %v439 = vlaneseq
          %v440 = vshrl.u32 %v439, 7
          %v441 = vsub.s32 %v438, %v440
          %v442 = vrot.slane %v435, %v441
          %v443 = vcombine.low %v431, %v432
          %v445 = vunpack.c.l.s4 1983009808
          %v446 = vunpack.c.0.s8 %v445
          %v447 = vlaneseq
          %v448 = vshrl.u32 %v447, 7
          %v449 = vsub.s32 %v446, %v448
          %v450 = vrot.slane %v443, %v449
          %v451 = vcombine.low %v423, %v430
          %v453 = vunpack.c.l.s4 1983009808
          %v454 = vunpack.c.0.s8 %v453
          %v455 = vlaneseq
          %v456 = vshrl.u32 %v455, 7
          %v457 = vsub.s32 %v454, %v456
          %v458 = vrot.slane %v451, %v457
          %v459 = vcombine.low %v433, %v434
          %v461 = vunpack.c.l.s4 1983009808
          %v462 = vunpack.c.0.s8 %v461
          %v463 = vlaneseq
          %v464 = vshrl.u32 %v463, 7
          %v465 = vsub.s32 %v462, %v464
          %v466 = vrot.slane %v459, %v465
          %v467 = vcombine.low %v442, %v450
          %v468 = vcombine.high %v442, %v450
          %v470 = vunpack.c.l.s4 1934713408
          %v471 = vunpack.c.0.s8 %v470
          %v472 = vlaneseq
          %v473 = vshrl.u32 %v472, 7
          %v474 = vsub.s32 %v471, %v473
          %v475 = vrot.slane %v467, %v474
          %v477 = vunpack.c.l.s4 1934713408
          %v478 = vunpack.c.0.s8 %v477
          %v479 = vlaneseq
          %v480 = vshrl.u32 %v479, 7
          %v481 = vsub.s32 %v478, %v480
          %v482 = vrot.slane %v468, %v481
          %v483 = vcombine.low %v458, %v466
          %v484 = vcombine.high %v458, %v466
          %v486 = vunpack.c.l.s4 1934713408
          %v487 = vunpack.c.0.s8 %v486
          %v488 = vlaneseq
          %v489 = vshrl.u32 %v488, 7
          %v490 = vsub.s32 %v487, %v489
          %v491 = vrot.slane %v483, %v490
          %v493 = vunpack.c.l.s4 1934713408
          %v494 = vunpack.c.0.s8 %v493
          %v495 = vlaneseq
          %v496 = vshrl.u32 %v495, 7
          %v497 = vsub.s32 %v494, %v496
          %v498 = vrot.slane %v484, %v497
          %v499 = vcombine.low %v475, %v491
          %v500 = vcombine.high %v475, %v491
          %v501 = vcombine.low %v482, %v498
          %v502 = vcombine.high %v482, %v498
          %vm503 = vcmask 64512
          %504 = vst.msk [vmem:[#allocation2] sm:$0xff] %vm503, %v499
          %505 = vst.msk [vmem:[#allocation2 + $0x8] sm:$0xff] %vm503, %v500
          %506 = vst.msk [vmem:[#allocation2 + $0x10] sm:$0xff] %vm503, %v501
          %507 = vst.msk [vmem:[#allocation2 + $0x18] sm:$0xff] %vm503, %v502
          %508 = vrot.lane.b32.xlu0 %v354, 96
          %v509 = vpop.permute.xlu0 %508
          %510 = vrot.lane.b32.xlu0 %v359, 96
          %v511 = vpop.permute.xlu0 %510
          %512 = vrot.lane.b32.xlu0 %v362, 96
          %v513 = vpop.permute.xlu0 %512
          %514 = vrot.lane.b32.xlu0 %v365, 96
          %v515 = vpop.permute.xlu0 %514
          %v520 = vcombine.low %v509, %v513
          %v521 = vcombine.high %v509, %v513
          %v523 = vunpack.c.l.s4 1983009808
          %v524 = vunpack.c.0.s8 %v523
          %v525 = vlaneseq
          %v526 = vshrl.u32 %v525, 7
          %v527 = vsub.s32 %v524, %v526
          %v528 = vrot.slane %v520, %v527
          %v530 = vunpack.c.l.s4 1983009808
          %v531 = vunpack.c.0.s8 %v530
          %v532 = vlaneseq
          %v533 = vshrl.u32 %v532, 7
          %v534 = vsub.s32 %v531, %v533
          %v535 = vrot.slane %v521, %v534
          %v536 = vcombine.low %v511, %v515
          %v537 = vcombine.high %v511, %v515
          %v539 = vunpack.c.l.s4 1983009808
          %v540 = vunpack.c.0.s8 %v539
          %v541 = vlaneseq
          %v542 = vshrl.u32 %v541, 7
          %v543 = vsub.s32 %v540, %v542
          %v544 = vrot.slane %v536, %v543
          %v546 = vunpack.c.l.s4 1983009808
          %v547 = vunpack.c.0.s8 %v546
          %v548 = vlaneseq
          %v549 = vshrl.u32 %v548, 7
          %v550 = vsub.s32 %v547, %v549
          %v551 = vrot.slane %v537, %v550
          %v552 = vcombine.low %v528, %v544
          %v553 = vcombine.high %v528, %v544
          %v555 = vunpack.c.l.s4 1934713408
          %v556 = vunpack.c.0.s8 %v555
          %v557 = vlaneseq
          %v558 = vshrl.u32 %v557, 7
          %v559 = vsub.s32 %v556, %v558
          %v560 = vrot.slane %v552, %v559
          %v562 = vunpack.c.l.s4 1934713408
          %v563 = vunpack.c.0.s8 %v562
          %v564 = vlaneseq
          %v565 = vshrl.u32 %v564, 7
          %v566 = vsub.s32 %v563, %v565
          %v567 = vrot.slane %v553, %v566
          %v568 = vcombine.low %v535, %v551
          %v569 = vcombine.high %v535, %v551
          %v571 = vunpack.c.l.s4 1934713408
          %v572 = vunpack.c.0.s8 %v571
          %v573 = vlaneseq
          %v574 = vshrl.u32 %v573, 7
          %v575 = vsub.s32 %v572, %v574
          %v576 = vrot.slane %v568, %v575
          %v578 = vunpack.c.l.s4 1934713408
          %v579 = vunpack.c.0.s8 %v578
          %v580 = vlaneseq
          %v581 = vshrl.u32 %v580, 7
          %v582 = vsub.s32 %v579, %v581
          %v583 = vrot.slane %v569, %v582
          %v584 = vcombine.high %v560, 0.0
          %v585 = vcombine.high %v567, 0.0
          %v586 = vcombine.high %v576, 0.0
          %v587 = vcombine.high %v583, 0.0
          %v588 = vcombine.low %v560, %v567
          %v590 = vunpack.c.l.s4 1983009808
          %v591 = vunpack.c.0.s8 %v590
          %v592 = vlaneseq
          %v593 = vshrl.u32 %v592, 7
          %v594 = vsub.s32 %v591, %v593
          %v595 = vrot.slane %v588, %v594
          %v596 = vcombine.low %v584, %v585
          %v598 = vunpack.c.l.s4 1983009808
          %v599 = vunpack.c.0.s8 %v598
          %v600 = vlaneseq
          %v601 = vshrl.u32 %v600, 7
          %v602 = vsub.s32 %v599, %v601
          %v603 = vrot.slane %v596, %v602
          %v604 = vcombine.low %v576, %v583
          %v606 = vunpack.c.l.s4 1983009808
          %v607 = vunpack.c.0.s8 %v606
          %v608 = vlaneseq
          %v609 = vshrl.u32 %v608, 7
          %v610 = vsub.s32 %v607, %v609
          %v611 = vrot.slane %v604, %v610
          %v612 = vcombine.low %v586, %v587
          %v614 = vunpack.c.l.s4 1983009808
          %v615 = vunpack.c.0.s8 %v614
          %v616 = vlaneseq
          %v617 = vshrl.u32 %v616, 7
          %v618 = vsub.s32 %v615, %v617
          %v619 = vrot.slane %v612, %v618
          %v620 = vcombine.low %v595, %v603
          %v621 = vcombine.high %v595, %v603
          %v623 = vunpack.c.l.s4 1934713408
          %v624 = vunpack.c.0.s8 %v623
          %v625 = vlaneseq
          %v626 = vshrl.u32 %v625, 7
          %v627 = vsub.s32 %v624, %v626
          %v628 = vrot.slane %v620, %v627
          %v630 = vunpack.c.l.s4 1934713408
          %v631 = vunpack.c.0.s8 %v630
          %v632 = vlaneseq
          %v633 = vshrl.u32 %v632, 7
          %v634 = vsub.s32 %v631, %v633
          %v635 = vrot.slane %v621, %v634
          %v636 = vcombine.low %v611, %v619
          %v637 = vcombine.high %v611, %v619
          %v639 = vunpack.c.l.s4 1934713408
          %v640 = vunpack.c.0.s8 %v639
          %v641 = vlaneseq
          %v642 = vshrl.u32 %v641, 7
          %v643 = vsub.s32 %v640, %v642
          %v644 = vrot.slane %v636, %v643
          %v646 = vunpack.c.l.s4 1934713408
          %v647 = vunpack.c.0.s8 %v646
          %v648 = vlaneseq
          %v649 = vshrl.u32 %v648, 7
          %v650 = vsub.s32 %v647, %v649
          %v651 = vrot.slane %v637, %v650
          %v652 = vcombine.low %v628, %v644
          %v653 = vcombine.high %v628, %v644
          %v654 = vcombine.low %v635, %v651
          %v655 = vcombine.high %v635, %v651
          %656 = vst.msk [vmem:[#allocation3] sm:$0xff] %vm503, %v652
          %657 = vst.msk [vmem:[#allocation3 + $0x8] sm:$0xff] %vm503, %v653
          %658 = vst.msk [vmem:[#allocation3 + $0x10] sm:$0xff] %vm503, %v654
          %659 = vst.msk [vmem:[#allocation3 + $0x18] sm:$0xff] %vm503, %v655
          %660 = vrot.lane.b32.xlu0 %v354, 64
          %v661 = vpop.permute.xlu0 %660
          %662 = vrot.lane.b32.xlu0 %v359, 64
          %v663 = vpop.permute.xlu0 %662
          %664 = vrot.lane.b32.xlu0 %v362, 64
          %v665 = vpop.permute.xlu0 %664
          %666 = vrot.lane.b32.xlu0 %v365, 64
          %v667 = vpop.permute.xlu0 %666
          %v672 = vcombine.low %v661, %v665
          %v673 = vcombine.high %v661, %v665
          %v675 = vunpack.c.l.s4 1983009808
          %v676 = vunpack.c.0.s8 %v675
          %v677 = vlaneseq
          %v678 = vshrl.u32 %v677, 7
          %v679 = vsub.s32 %v676, %v678
          %v680 = vrot.slane %v672, %v679
          %v682 = vunpack.c.l.s4 1983009808
          %v683 = vunpack.c.0.s8 %v682
          %v684 = vlaneseq
          %v685 = vshrl.u32 %v684, 7
          %v686 = vsub.s32 %v683, %v685
          %v687 = vrot.slane %v673, %v686
          %v688 = vcombine.low %v663, %v667
          %v689 = vcombine.high %v663, %v667
          %v691 = vunpack.c.l.s4 1983009808
          %v692 = vunpack.c.0.s8 %v691
          %v693 = vlaneseq
          %v694 = vshrl.u32 %v693, 7
          %v695 = vsub.s32 %v692, %v694
          %v696 = vrot.slane %v688, %v695
          %v698 = vunpack.c.l.s4 1983009808
          %v699 = vunpack.c.0.s8 %v698
          %v700 = vlaneseq
          %v701 = vshrl.u32 %v700, 7
          %v702 = vsub.s32 %v699, %v701
          %v703 = vrot.slane %v689, %v702
          %v704 = vcombine.low %v680, %v696
          %v705 = vcombine.high %v680, %v696
          %v707 = vunpack.c.l.s4 1934713408
          %v708 = vunpack.c.0.s8 %v707
          %v709 = vlaneseq
          %v710 = vshrl.u32 %v709, 7
          %v711 = vsub.s32 %v708, %v710
          %v712 = vrot.slane %v704, %v711
          %v714 = vunpack.c.l.s4 1934713408
          %v715 = vunpack.c.0.s8 %v714
          %v716 = vlaneseq
          %v717 = vshrl.u32 %v716, 7
          %v718 = vsub.s32 %v715, %v717
          %v719 = vrot.slane %v705, %v718
          %v720 = vcombine.low %v687, %v703
          %v721 = vcombine.high %v687, %v703
          %v723 = vunpack.c.l.s4 1934713408
          %v724 = vunpack.c.0.s8 %v723
          %v725 = vlaneseq
          %v726 = vshrl.u32 %v725, 7
          %v727 = vsub.s32 %v724, %v726
          %v728 = vrot.slane %v720, %v727
          %v730 = vunpack.c.l.s4 1934713408
          %v731 = vunpack.c.0.s8 %v730
          %v732 = vlaneseq
          %v733 = vshrl.u32 %v732, 7
          %v734 = vsub.s32 %v731, %v733
          %v735 = vrot.slane %v721, %v734
          %v736 = vcombine.high %v712, 0.0
          %v737 = vcombine.high %v719, 0.0
          %v738 = vcombine.high %v728, 0.0
          %v739 = vcombine.high %v735, 0.0
          %v740 = vcombine.low %v712, %v719
          %v742 = vunpack.c.l.s4 1983009808
          %v743 = vunpack.c.0.s8 %v742
          %v744 = vlaneseq
          %v745 = vshrl.u32 %v744, 7
          %v746 = vsub.s32 %v743, %v745
          %v747 = vrot.slane %v740, %v746
          %v748 = vcombine.low %v736, %v737
          %v750 = vunpack.c.l.s4 1983009808
          %v751 = vunpack.c.0.s8 %v750
          %v752 = vlaneseq
          %v753 = vshrl.u32 %v752, 7
          %v754 = vsub.s32 %v751, %v753
          %v755 = vrot.slane %v748, %v754
          %v756 = vcombine.low %v728, %v735
          %v758 = vunpack.c.l.s4 1983009808
          %v759 = vunpack.c.0.s8 %v758
          %v760 = vlaneseq
          %v761 = vshrl.u32 %v760, 7
          %v762 = vsub.s32 %v759, %v761
          %v763 = vrot.slane %v756, %v762
          %v764 = vcombine.low %v738, %v739
          %v766 = vunpack.c.l.s4 1983009808
          %v767 = vunpack.c.0.s8 %v766
          %v768 = vlaneseq
          %v769 = vshrl.u32 %v768, 7
          %v770 = vsub.s32 %v767, %v769
          %v771 = vrot.slane %v764, %v770
          %v772 = vcombine.low %v747, %v755
          %v773 = vcombine.high %v747, %v755
          %v775 = vunpack.c.l.s4 1934713408
          %v776 = vunpack.c.0.s8 %v775
          %v777 = vlaneseq
          %v778 = vshrl.u32 %v777, 7
          %v779 = vsub.s32 %v776, %v778
          %v780 = vrot.slane %v772, %v779
          %v782 = vunpack.c.l.s4 1934713408
          %v783 = vunpack.c.0.s8 %v782
          %v784 = vlaneseq
          %v785 = vshrl.u32 %v784, 7
          %v786 = vsub.s32 %v783, %v785
          %v787 = vrot.slane %v773, %v786
          %v788 = vcombine.low %v763, %v771
          %v789 = vcombine.high %v763, %v771
          %v791 = vunpack.c.l.s4 1934713408
          %v792 = vunpack.c.0.s8 %v791
          %v793 = vlaneseq
          %v794 = vshrl.u32 %v793, 7
          %v795 = vsub.s32 %v792, %v794
          %v796 = vrot.slane %v788, %v795
          %v798 = vunpack.c.l.s4 1934713408
          %v799 = vunpack.c.0.s8 %v798
          %v800 = vlaneseq
          %v801 = vshrl.u32 %v800, 7
          %v802 = vsub.s32 %v799, %v801
          %v803 = vrot.slane %v789, %v802
          %v804 = vcombine.low %v780, %v796
          %v805 = vcombine.high %v780, %v796
          %v806 = vcombine.low %v787, %v803
          %v807 = vcombine.high %v787, %v803
          %808 = vst.msk [vmem:[#allocation4] sm:$0xff] %vm503, %v804
          %809 = vst.msk [vmem:[#allocation4 + $0x8] sm:$0xff] %vm503, %v805
          %810 = vst.msk [vmem:[#allocation4 + $0x10] sm:$0xff] %vm503, %v806
          %811 = vst.msk [vmem:[#allocation4 + $0x18] sm:$0xff] %vm503, %v807
        $region56: #{tpu_custom_call.1} parent=35 // pred_fallthru
          _
        %s812 = smul.u32 %s28, 8
        %s813 = scalar_lea.vmem [#allocation2], %s812
        %v814 = vld [vmem:[%s813] sm:$0xff]
        %v815 = vld [vmem:[%s813 + $0x8] sm:$0xff]
        %v816 = vld [vmem:[%s813 + $0x10] sm:$0xff]
        %v817 = vld [vmem:[%s813 + $0x18] sm:$0xff]
        %v818 = vld [vmem:[#allocation3] sm:$0xff]
        %v819 = vld [vmem:[#allocation3 + $0x8] sm:$0xff]
        %v820 = vld [vmem:[#allocation3 + $0x10] sm:$0xff]
        %v821 = vld [vmem:[#allocation3 + $0x18] sm:$0xff]
        %vm822 = vcmask 64512
        %v824 = vsel %vm822, %v814, 0
        %v827 = vsel %vm822, %v818, 0
        %829 = vmatprep.subr.mxu0 0.0
        %830 = vmatpush1.xpose.msra.mxu0 0.0
        %831 = vmatprep.subr.mxu0 0.0
        %832 = vmatpush1.xpose.msra.mxu0 0.0
        %833 = vmatprep.subr.mxu0 0.0
        %834 = vmatpush1.xpose.msra.mxu0 0.0
        %835 = vmatprep.subr.mxu0 0.0
        %836 = vmatpush1.xpose.msra.mxu0 0.0
        %837 = vmatprep.subr.mxu0 0.0
        %838 = vmatpush1.xpose.msra.mxu0 0.0
        %839 = vmatprep.subr.mxu0 0.0
        %840 = vmatpush1.xpose.msra.mxu0 0.0
        %841 = vmatprep.subr.mxu0 0.0
        %842 = vmatpush1.xpose.msra.mxu0 0.0
        %843 = vmatprep.subr.mxu0 0.0
        %844 = vmatpush1.xpose.msra.mxu0 0.0
        %845 = vmatprep.subr.mxu0 0.0
        %846 = vmatpush1.xpose.msra.mxu0 0.0
        %847 = vmatprep.subr.mxu0 0.0
        %848 = vmatpush1.xpose.msra.mxu0 0.0
        %849 = vmatprep.subr.mxu0 0.0
        %850 = vmatpush1.xpose.msra.mxu0 0.0
        %851 = vmatprep.subr.mxu0 0.0
        %852 = vmatpush1.xpose.msra.mxu0 0.0
        %853 = vmatprep.subr.mxu0 0.0
        %854 = vmatpush1.xpose.msra.mxu0 0.0
        %855 = vmatprep.subr.mxu0 0.0
        %856 = vmatpush1.xpose.msra.mxu0 0.0
        %857 = vmatprep.subr.mxu0 0.0
        %858 = vmatpush1.xpose.msra.mxu0 0.0
        %859 = vmatprep.subr.mxu0 0.0
        %860 = vmatpush1.xpose.msra.mxu0 %v827
        %861 = vmatprep.subr.mxu0 0.0
        %862 = vmatpush2.xpose.msra.mxu0 0.0
        %863 = vmatprep.subr.mxu0 0.0
        %864 = vmatpush2.xpose.msra.mxu0 0.0
        %865 = vmatprep.subr.mxu0 0.0
        %866 = vmatpush2.xpose.msra.mxu0 0.0
        %867 = vmatprep.subr.mxu0 0.0
        %868 = vmatpush2.xpose.msra.mxu0 0.0
        %869 = vmatprep.subr.mxu0 0.0
        %870 = vmatpush2.xpose.msra.mxu0 0.0
        %871 = vmatprep.subr.mxu0 0.0
        %872 = vmatpush2.xpose.msra.mxu0 0.0
        %873 = vmatprep.subr.mxu0 0.0
        %874 = vmatpush2.xpose.msra.mxu0 0.0
        %875 = vmatprep.subr.mxu0 0.0
        %876 = vmatpush2.xpose.msra.mxu0 0.0
        %877 = vmatprep.subr.mxu0 0.0
        %878 = vmatpush2.xpose.msra.mxu0 0.0
        %879 = vmatprep.subr.mxu0 0.0
        %880 = vmatpush2.xpose.msra.mxu0 0.0
        %881 = vmatprep.subr.mxu0 0.0
        %882 = vmatpush2.xpose.msra.mxu0 0.0
        %883 = vmatprep.subr.mxu0 0.0
        %884 = vmatpush2.xpose.msra.mxu0 0.0
        %885 = vmatprep.subr.mxu0 0.0
        %886 = vmatpush2.xpose.msra.mxu0 0.0
        %887 = vmatprep.subr.mxu0 0.0
        %888 = vmatpush2.xpose.msra.mxu0 0.0
        %889 = vmatprep.subr.mxu0 0.0
        %890 = vmatpush2.xpose.msra.mxu0 0.0
        %891 = vmatprep.subr.mxu0 0.0
        %892 = vmatpush2.xpose.msra.mxu0 0.0
        %893 = vmatprep.mubr.f32.mxu0 0.0
        %894 = vmatmul.mubr.f32.gmra.mxu0 %v824
        %v895 = vpop.f32.mrf.mxu0
        %v896 = vadd.f32 0.0, %v895
        %v897 = vpop.f32.mrf.mxu0
        %898 = vdwg.mxu0
        %v900 = vsel %vm822, %v815, 0
        %v903 = vsel %vm822, %v819, 0
        %905 = vmatprep.subr.mxu0 0.0
        %906 = vmatpush1.xpose.msra.mxu0 0.0
        %907 = vmatprep.subr.mxu0 0.0
        %908 = vmatpush1.xpose.msra.mxu0 0.0
        %909 = vmatprep.subr.mxu0 0.0
        %910 = vmatpush1.xpose.msra.mxu0 0.0
        %911 = vmatprep.subr.mxu0 0.0
        %912 = vmatpush1.xpose.msra.mxu0 0.0
        %913 = vmatprep.subr.mxu0 0.0
        %914 = vmatpush1.xpose.msra.mxu0 0.0
        %915 = vmatprep.subr.mxu0 0.0
        %916 = vmatpush1.xpose.msra.mxu0 0.0
        %917 = vmatprep.subr.mxu0 0.0
        %918 = vmatpush1.xpose.msra.mxu0 0.0
        %919 = vmatprep.subr.mxu0 0.0
        %920 = vmatpush1.xpose.msra.mxu0 0.0
        %921 = vmatprep.subr.mxu0 0.0
        %922 = vmatpush1.xpose.msra.mxu0 0.0
        %923 = vmatprep.subr.mxu0 0.0
        %924 = vmatpush1.xpose.msra.mxu0 0.0
        %925 = vmatprep.subr.mxu0 0.0
        %926 = vmatpush1.xpose.msra.mxu0 0.0
        %927 = vmatprep.subr.mxu0 0.0
        %928 = vmatpush1.xpose.msra.mxu0 0.0
        %929 = vmatprep.subr.mxu0 0.0
        %930 = vmatpush1.xpose.msra.mxu0 0.0
        %931 = vmatprep.subr.mxu0 0.0
        %932 = vmatpush1.xpose.msra.mxu0 0.0
        %933 = vmatprep.subr.mxu0 0.0
        %934 = vmatpush1.xpose.msra.mxu0 0.0
        %935 = vmatprep.subr.mxu0 0.0
        %936 = vmatpush1.xpose.msra.mxu0 %v903
        %937 = vmatprep.subr.mxu0 0.0
        %938 = vmatpush2.xpose.msra.mxu0 0.0
        %939 = vmatprep.subr.mxu0 0.0
        %940 = vmatpush2.xpose.msra.mxu0 0.0
        %941 = vmatprep.subr.mxu0 0.0
        %942 = vmatpush2.xpose.msra.mxu0 0.0
        %943 = vmatprep.subr.mxu0 0.0
        %944 = vmatpush2.xpose.msra.mxu0 0.0
        %945 = vmatprep.subr.mxu0 0.0
        %946 = vmatpush2.xpose.msra.mxu0 0.0
        %947 = vmatprep.subr.mxu0 0.0
        %948 = vmatpush2.xpose.msra.mxu0 0.0
        %949 = vmatprep.subr.mxu0 0.0
        %950 = vmatpush2.xpose.msra.mxu0 0.0
        %951 = vmatprep.subr.mxu0 0.0
        %952 = vmatpush2.xpose.msra.mxu0 0.0
        %953 = vmatprep.subr.mxu0 0.0
        %954 = vmatpush2.xpose.msra.mxu0 0.0
        %955 = vmatprep.subr.mxu0 0.0
        %956 = vmatpush2.xpose.msra.mxu0 0.0
        %957 = vmatprep.subr.mxu0 0.0
        %958 = vmatpush2.xpose.msra.mxu0 0.0
        %959 = vmatprep.subr.mxu0 0.0
        %960 = vmatpush2.xpose.msra.mxu0 0.0
        %961 = vmatprep.subr.mxu0 0.0
        %962 = vmatpush2.xpose.msra.mxu0 0.0
        %963 = vmatprep.subr.mxu0 0.0
        %964 = vmatpush2.xpose.msra.mxu0 0.0
        %965 = vmatprep.subr.mxu0 0.0
        %966 = vmatpush2.xpose.msra.mxu0 0.0
        %967 = vmatprep.subr.mxu0 0.0
        %968 = vmatpush2.xpose.msra.mxu0 0.0
        %969 = vmatprep.mubr.f32.mxu0 0.0
        %970 = vmatmul.mubr.f32.gmra.mxu0 %v900
        %v971 = vpop.f32.mrf.mxu0
        %v972 = vadd.f32 0.0, %v971
        %v973 = vpop.f32.mrf.mxu0
        %974 = vdwg.mxu0
        %v976 = vsel %vm822, %v816, 0
        %v979 = vsel %vm822, %v820, 0
        %981 = vmatprep.subr.mxu0 0.0
        %982 = vmatpush1.xpose.msra.mxu0 0.0
        %983 = vmatprep.subr.mxu0 0.0
        %984 = vmatpush1.xpose.msra.mxu0 0.0
        %985 = vmatprep.subr.mxu0 0.0
        %986 = vmatpush1.xpose.msra.mxu0 0.0
        %987 = vmatprep.subr.mxu0 0.0
        %988 = vmatpush1.xpose.msra.mxu0 0.0
        %989 = vmatprep.subr.mxu0 0.0
        %990 = vmatpush1.xpose.msra.mxu0 0.0
        %991 = vmatprep.subr.mxu0 0.0
        %992 = vmatpush1.xpose.msra.mxu0 0.0
        %993 = vmatprep.subr.mxu0 0.0
        %994 = vmatpush1.xpose.msra.mxu0 0.0
        %995 = vmatprep.subr.mxu0 0.0
        %996 = vmatpush1.xpose.msra.mxu0 0.0
        %997 = vmatprep.subr.mxu0 0.0
        %998 = vmatpush1.xpose.msra.mxu0 0.0
        %999 = vmatprep.subr.mxu0 0.0
        %1000 = vmatpush1.xpose.msra.mxu0 0.0
        %1001 = vmatprep.subr.mxu0 0.0
        %1002 = vmatpush1.xpose.msra.mxu0 0.0
        %1003 = vmatprep.subr.mxu0 0.0
        %1004 = vmatpush1.xpose.msra.mxu0 0.0
        %1005 = vmatprep.subr.mxu0 0.0
        %1006 = vmatpush1.xpose.msra.mxu0 0.0
        %1007 = vmatprep.subr.mxu0 0.0
        %1008 = vmatpush1.xpose.msra.mxu0 0.0
        %1009 = vmatprep.subr.mxu0 0.0
        %1010 = vmatpush1.xpose.msra.mxu0 0.0
        %1011 = vmatprep.subr.mxu0 0.0
        %1012 = vmatpush1.xpose.msra.mxu0 %v979
        %1013 = vmatprep.subr.mxu0 0.0
        %1014 = vmatpush2.xpose.msra.mxu0 0.0
        %1015 = vmatprep.subr.mxu0 0.0
        %1016 = vmatpush2.xpose.msra.mxu0 0.0
        %1017 = vmatprep.subr.mxu0 0.0
        %1018 = vmatpush2.xpose.msra.mxu0 0.0
        %1019 = vmatprep.subr.mxu0 0.0
        %1020 = vmatpush2.xpose.msra.mxu0 0.0
        %1021 = vmatprep.subr.mxu0 0.0
        %1022 = vmatpush2.xpose.msra.mxu0 0.0
        %1023 = vmatprep.subr.mxu0 0.0
        %1024 = vmatpush2.xpose.msra.mxu0 0.0
        %1025 = vmatprep.subr.mxu0 0.0
        %1026 = vmatpush2.xpose.msra.mxu0 0.0
        %1027 = vmatprep.subr.mxu0 0.0
        %1028 = vmatpush2.xpose.msra.mxu0 0.0
        %1029 = vmatprep.subr.mxu0 0.0
        %1030 = vmatpush2.xpose.msra.mxu0 0.0
        %1031 = vmatprep.subr.mxu0 0.0
        %1032 = vmatpush2.xpose.msra.mxu0 0.0
        %1033 = vmatprep.subr.mxu0 0.0
        %1034 = vmatpush2.xpose.msra.mxu0 0.0
        %1035 = vmatprep.subr.mxu0 0.0
        %1036 = vmatpush2.xpose.msra.mxu0 0.0
        %1037 = vmatprep.subr.mxu0 0.0
        %1038 = vmatpush2.xpose.msra.mxu0 0.0
        %1039 = vmatprep.subr.mxu0 0.0
        %1040 = vmatpush2.xpose.msra.mxu0 0.0
        %1041 = vmatprep.subr.mxu0 0.0
        %1042 = vmatpush2.xpose.msra.mxu0 0.0
        %1043 = vmatprep.subr.mxu0 0.0
        %1044 = vmatpush2.xpose.msra.mxu0 0.0
        %1045 = vmatprep.mubr.f32.mxu0 0.0
        %1046 = vmatmul.mubr.f32.gmra.mxu0 %v976
        %v1047 = vpop.f32.mrf.mxu0
        %v1048 = vadd.f32 0.0, %v1047
        %v1049 = vpop.f32.mrf.mxu0
        %1050 = vdwg.mxu0
        %v1052 = vsel %vm822, %v817, 0
        %v1055 = vsel %vm822, %v821, 0
        %1057 = vmatprep.subr.mxu0 0.0
        %1058 = vmatpush1.xpose.msra.mxu0 0.0
        %1059 = vmatprep.subr.mxu0 0.0
        %1060 = vmatpush1.xpose.msra.mxu0 0.0
        %1061 = vmatprep.subr.mxu0 0.0
        %1062 = vmatpush1.xpose.msra.mxu0 0.0
        %1063 = vmatprep.subr.mxu0 0.0
        %1064 = vmatpush1.xpose.msra.mxu0 0.0
        %1065 = vmatprep.subr.mxu0 0.0
        %1066 = vmatpush1.xpose.msra.mxu0 0.0
        %1067 = vmatprep.subr.mxu0 0.0
        %1068 = vmatpush1.xpose.msra.mxu0 0.0
        %1069 = vmatprep.subr.mxu0 0.0
        %1070 = vmatpush1.xpose.msra.mxu0 0.0
        %1071 = vmatprep.subr.mxu0 0.0
        %1072 = vmatpush1.xpose.msra.mxu0 0.0
        %1073 = vmatprep.subr.mxu0 0.0
        %1074 = vmatpush1.xpose.msra.mxu0 0.0
        %1075 = vmatprep.subr.mxu0 0.0
        %1076 = vmatpush1.xpose.msra.mxu0 0.0
        %1077 = vmatprep.subr.mxu0 0.0
        %1078 = vmatpush1.xpose.msra.mxu0 0.0
        %1079 = vmatprep.subr.mxu0 0.0
        %1080 = vmatpush1.xpose.msra.mxu0 0.0
        %1081 = vmatprep.subr.mxu0 0.0
        %1082 = vmatpush1.xpose.msra.mxu0 0.0
        %1083 = vmatprep.subr.mxu0 0.0
        %1084 = vmatpush1.xpose.msra.mxu0 0.0
        %1085 = vmatprep.subr.mxu0 0.0
        %1086 = vmatpush1.xpose.msra.mxu0 0.0
        %1087 = vmatprep.subr.mxu0 0.0
        %1088 = vmatpush1.xpose.msra.mxu0 %v1055
        %1089 = vmatprep.subr.mxu0 0.0
        %1090 = vmatpush2.xpose.msra.mxu0 0.0
        %1091 = vmatprep.subr.mxu0 0.0
        %1092 = vmatpush2.xpose.msra.mxu0 0.0
        %1093 = vmatprep.subr.mxu0 0.0
        %1094 = vmatpush2.xpose.msra.mxu0 0.0
        %1095 = vmatprep.subr.mxu0 0.0
        %1096 = vmatpush2.xpose.msra.mxu0 0.0
        %1097 = vmatprep.subr.mxu0 0.0
        %1098 = vmatpush2.xpose.msra.mxu0 0.0
        %1099 = vmatprep.subr.mxu0 0.0
        %1100 = vmatpush2.xpose.msra.mxu0 0.0
        %1101 = vmatprep.subr.mxu0 0.0
        %1102 = vmatpush2.xpose.msra.mxu0 0.0
        %1103 = vmatprep.subr.mxu0 0.0
        %1104 = vmatpush2.xpose.msra.mxu0 0.0
        %1105 = vmatprep.subr.mxu0 0.0
        %1106 = vmatpush2.xpose.msra.mxu0 0.0
        %1107 = vmatprep.subr.mxu0 0.0
        %1108 = vmatpush2.xpose.msra.mxu0 0.0
        %1109 = vmatprep.subr.mxu0 0.0
        %1110 = vmatpush2.xpose.msra.mxu0 0.0
        %1111 = vmatprep.subr.mxu0 0.0
        %1112 = vmatpush2.xpose.msra.mxu0 0.0
        %1113 = vmatprep.subr.mxu0 0.0
        %1114 = vmatpush2.xpose.msra.mxu0 0.0
        %1115 = vmatprep.subr.mxu0 0.0
        %1116 = vmatpush2.xpose.msra.mxu0 0.0
        %1117 = vmatprep.subr.mxu0 0.0
        %1118 = vmatpush2.xpose.msra.mxu0 0.0
        %1119 = vmatprep.subr.mxu0 0.0
        %1120 = vmatpush2.xpose.msra.mxu0 0.0
        %1121 = vmatprep.mubr.f32.mxu0 0.0
        %1122 = vmatmul.mubr.f32.gmra.mxu0 %v1052
        %v1123 = vpop.f32.mrf.mxu0
        %v1124 = vadd.f32 0.0, %v1123
        %v1125 = vpop.f32.mrf.mxu0
        %1126 = vdwg.mxu0
        %v1127 = vsel %vm822, %v896, -inf
        %1128 = vmax.xlane.f32.xlu0 %v1127
        %v1129 = vpop.xlane.xlu0 %1128
        %v1130 = vsel %vm822, %v972, -inf
        %1131 = vmax.xlane.f32.xlu0 %v1130
        %v1132 = vpop.xlane.xlu0 %1131
        %v1133 = vsel %vm822, %v1048, -inf
        %1134 = vmax.xlane.f32.xlu0 %v1133
        %v1135 = vpop.xlane.xlu0 %1134
        %v1136 = vsel %vm822, %v1124, -inf
        %1137 = vmax.xlane.f32.xlu0 %v1136
        %v1138 = vpop.xlane.xlu0 %1137
        %v1139 = vsub.f32 %v896, %v1129
        %v1140 = vsub.f32 %v972, %v1132
        %v1141 = vsub.f32 %v1048, %v1135
        %v1142 = vsub.f32 %v1124, %v1138
        %v1143 = vmul.f32 %v1139, 1.442695
        %v1144 = vpow.pop %v1143
        %v1145 = vmul.f32 %v1140, 1.442695
        %v1146 = vpow.pop %v1145
        %v1147 = vmul.f32 %v1141, 1.442695
        %v1148 = vpow.pop %v1147
        %v1149 = vmul.f32 %v1142, 1.442695
        %v1150 = vpow.pop %v1149
        %v1151 = vsel %vm822, %v1144, 0.0
        %1152 = vadd.xlane.f32.xlu0 %v1151
        %v1153 = vpop.xlane.xlu0 %1152
        %v1154 = vsel %vm822, %v1146, 0.0
        %1155 = vadd.xlane.f32.xlu0 %v1154
        %v1156 = vpop.xlane.xlu0 %1155
        %v1157 = vsel %vm822, %v1148, 0.0
        %1158 = vadd.xlane.f32.xlu0 %v1157
        %v1159 = vpop.xlane.xlu0 %1158
        %v1160 = vsel %vm822, %v1150, 0.0
        %1161 = vadd.xlane.f32.xlu0 %v1160
        %v1162 = vpop.xlane.xlu0 %1161
        %v1163 = vld [vmem:[#allocation4] sm:$0xff]
        %v1164 = vld [vmem:[#allocation4 + $0x8] sm:$0xff]
        %v1165 = vld [vmem:[#allocation4 + $0x10] sm:$0xff]
        %v1166 = vld [vmem:[#allocation4 + $0x18] sm:$0xff]
        %v1168 = vsel %vm822, %v1144, 0
        %1170 = vmatprep.subr.mxu0 0.0
        %1171 = vmatpush1.msra.mxu0 0.0
        %1172 = vmatprep.subr.mxu0 0.0
        %1173 = vmatpush1.msra.mxu0 0.0
        %1174 = vmatprep.subr.mxu0 0.0
        %1175 = vmatpush1.msra.mxu0 0.0
        %1176 = vmatprep.subr.mxu0 0.0
        %1177 = vmatpush1.msra.mxu0 0.0
        %1178 = vmatprep.subr.mxu0 0.0
        %1179 = vmatpush1.msra.mxu0 0.0
        %1180 = vmatprep.subr.mxu0 0.0
        %1181 = vmatpush1.msra.mxu0 0.0
        %1182 = vmatprep.subr.mxu0 0.0
        %1183 = vmatpush1.msra.mxu0 0.0
        %1184 = vmatprep.subr.mxu0 0.0
        %1185 = vmatpush1.msra.mxu0 0.0
        %1186 = vmatprep.subr.mxu0 0.0
        %1187 = vmatpush1.msra.mxu0 0.0
        %1188 = vmatprep.subr.mxu0 0.0
        %1189 = vmatpush1.msra.mxu0 0.0
        %1190 = vmatprep.subr.mxu0 0.0
        %1191 = vmatpush1.msra.mxu0 0.0
        %1192 = vmatprep.subr.mxu0 0.0
        %1193 = vmatpush1.msra.mxu0 0.0
        %1194 = vmatprep.subr.mxu0 0.0
        %1195 = vmatpush1.msra.mxu0 0.0
        %1196 = vmatprep.subr.mxu0 0.0
        %1197 = vmatpush1.msra.mxu0 0.0
        %1198 = vmatprep.subr.mxu0 0.0
        %1199 = vmatpush1.msra.mxu0 0.0
        %1200 = vmatprep.subr.mxu0 0.0
        %1201 = vmatpush1.msra.mxu0 %v1163
        %1202 = vmatprep.subr.mxu0 0.0
        %1203 = vmatpush2.msra.mxu0 0.0
        %1204 = vmatprep.subr.mxu0 0.0
        %1205 = vmatpush2.msra.mxu0 0.0
        %1206 = vmatprep.subr.mxu0 0.0
        %1207 = vmatpush2.msra.mxu0 0.0
        %1208 = vmatprep.subr.mxu0 0.0
        %1209 = vmatpush2.msra.mxu0 0.0
        %1210 = vmatprep.subr.mxu0 0.0
        %1211 = vmatpush2.msra.mxu0 0.0
        %1212 = vmatprep.subr.mxu0 0.0
        %1213 = vmatpush2.msra.mxu0 0.0
        %1214 = vmatprep.subr.mxu0 0.0
        %1215 = vmatpush2.msra.mxu0 0.0
        %1216 = vmatprep.subr.mxu0 0.0
        %1217 = vmatpush2.msra.mxu0 0.0
        %1218 = vmatprep.subr.mxu0 0.0
        %1219 = vmatpush2.msra.mxu0 0.0
        %1220 = vmatprep.subr.mxu0 0.0
        %1221 = vmatpush2.msra.mxu0 0.0
        %1222 = vmatprep.subr.mxu0 0.0
        %1223 = vmatpush2.msra.mxu0 0.0
        %1224 = vmatprep.subr.mxu0 0.0
        %1225 = vmatpush2.msra.mxu0 0.0
        %1226 = vmatprep.subr.mxu0 0.0
        %1227 = vmatpush2.msra.mxu0 0.0
        %1228 = vmatprep.subr.mxu0 0.0
        %1229 = vmatpush2.msra.mxu0 0.0
        %1230 = vmatprep.subr.mxu0 0.0
        %1231 = vmatpush2.msra.mxu0 0.0
        %1232 = vmatprep.subr.mxu0 0.0
        %1233 = vmatpush2.msra.mxu0 0.0
        %1234 = vmatprep.mubr.f32.mxu0 0.0
        %1235 = vmatmul.mubr.f32.gmra.mxu0 %v1168
        %v1236 = vpop.f32.mrf.mxu0
        %v1237 = vadd.f32 0.0, %v1236
        %v1238 = vpop.f32.mrf.mxu0
        %1239 = vdwg.mxu0
        %v1241 = vsel %vm822, %v1146, 0
        %1243 = vmatprep.subr.mxu0 0.0
        %1244 = vmatpush1.msra.mxu0 0.0
        %1245 = vmatprep.subr.mxu0 0.0
        %1246 = vmatpush1.msra.mxu0 0.0
        %1247 = vmatprep.subr.mxu0 0.0
        %1248 = vmatpush1.msra.mxu0 0.0
        %1249 = vmatprep.subr.mxu0 0.0
        %1250 = vmatpush1.msra.mxu0 0.0
        %1251 = vmatprep.subr.mxu0 0.0
        %1252 = vmatpush1.msra.mxu0 0.0
        %1253 = vmatprep.subr.mxu0 0.0
        %1254 = vmatpush1.msra.mxu0 0.0
        %1255 = vmatprep.subr.mxu0 0.0
        %1256 = vmatpush1.msra.mxu0 0.0
        %1257 = vmatprep.subr.mxu0 0.0
        %1258 = vmatpush1.msra.mxu0 0.0
        %1259 = vmatprep.subr.mxu0 0.0
        %1260 = vmatpush1.msra.mxu0 0.0
        %1261 = vmatprep.subr.mxu0 0.0
        %1262 = vmatpush1.msra.mxu0 0.0
        %1263 = vmatprep.subr.mxu0 0.0
        %1264 = vmatpush1.msra.mxu0 0.0
        %1265 = vmatprep.subr.mxu0 0.0
        %1266 = vmatpush1.msra.mxu0 0.0
        %1267 = vmatprep.subr.mxu0 0.0
        %1268 = vmatpush1.msra.mxu0 0.0
        %1269 = vmatprep.subr.mxu0 0.0
        %1270 = vmatpush1.msra.mxu0 0.0
        %1271 = vmatprep.subr.mxu0 0.0
        %1272 = vmatpush1.msra.mxu0 0.0
        %1273 = vmatprep.subr.mxu0 0.0
        %1274 = vmatpush1.msra.mxu0 %v1164
        %1275 = vmatprep.subr.mxu0 0.0
        %1276 = vmatpush2.msra.mxu0 0.0
        %1277 = vmatprep.subr.mxu0 0.0
        %1278 = vmatpush2.msra.mxu0 0.0
        %1279 = vmatprep.subr.mxu0 0.0
        %1280 = vmatpush2.msra.mxu0 0.0
        %1281 = vmatprep.subr.mxu0 0.0
        %1282 = vmatpush2.msra.mxu0 0.0
        %1283 = vmatprep.subr.mxu0 0.0
        %1284 = vmatpush2.msra.mxu0 0.0
        %1285 = vmatprep.subr.mxu0 0.0
        %1286 = vmatpush2.msra.mxu0 0.0
        %1287 = vmatprep.subr.mxu0 0.0
        %1288 = vmatpush2.msra.mxu0 0.0
        %1289 = vmatprep.subr.mxu0 0.0
        %1290 = vmatpush2.msra.mxu0 0.0
        %1291 = vmatprep.subr.mxu0 0.0
        %1292 = vmatpush2.msra.mxu0 0.0
        %1293 = vmatprep.subr.mxu0 0.0
        %1294 = vmatpush2.msra.mxu0 0.0
        %1295 = vmatprep.subr.mxu0 0.0
        %1296 = vmatpush2.msra.mxu0 0.0
        %1297 = vmatprep.subr.mxu0 0.0
        %1298 = vmatpush2.msra.mxu0 0.0
        %1299 = vmatprep.subr.mxu0 0.0
        %1300 = vmatpush2.msra.mxu0 0.0
        %1301 = vmatprep.subr.mxu0 0.0
        %1302 = vmatpush2.msra.mxu0 0.0
        %1303 = vmatprep.subr.mxu0 0.0
        %1304 = vmatpush2.msra.mxu0 0.0
        %1305 = vmatprep.subr.mxu0 0.0
        %1306 = vmatpush2.msra.mxu0 0.0
        %1307 = vmatprep.mubr.f32.mxu0 0.0
        %1308 = vmatmul.mubr.f32.gmra.mxu0 %v1241
        %v1309 = vpop.f32.mrf.mxu0
        %v1310 = vadd.f32 0.0, %v1309
        %v1311 = vpop.f32.mrf.mxu0
        %1312 = vdwg.mxu0
        %v1314 = vsel %vm822, %v1148, 0
        %1316 = vmatprep.subr.mxu0 0.0
        %1317 = vmatpush1.msra.mxu0 0.0
        %1318 = vmatprep.subr.mxu0 0.0
        %1319 = vmatpush1.msra.mxu0 0.0
        %1320 = vmatprep.subr.mxu0 0.0
        %1321 = vmatpush1.msra.mxu0 0.0
        %1322 = vmatprep.subr.mxu0 0.0
        %1323 = vmatpush1.msra.mxu0 0.0
        %1324 = vmatprep.subr.mxu0 0.0
        %1325 = vmatpush1.msra.mxu0 0.0
        %1326 = vmatprep.subr.mxu0 0.0
        %1327 = vmatpush1.msra.mxu0 0.0
        %1328 = vmatprep.subr.mxu0 0.0
        %1329 = vmatpush1.msra.mxu0 0.0
        %1330 = vmatprep.subr.mxu0 0.0
        %1331 = vmatpush1.msra.mxu0 0.0
        %1332 = vmatprep.subr.mxu0 0.0
        %1333 = vmatpush1.msra.mxu0 0.0
        %1334 = vmatprep.subr.mxu0 0.0
        %1335 = vmatpush1.msra.mxu0 0.0
        %1336 = vmatprep.subr.mxu0 0.0
        %1337 = vmatpush1.msra.mxu0 0.0
        %1338 = vmatprep.subr.mxu0 0.0
        %1339 = vmatpush1.msra.mxu0 0.0
        %1340 = vmatprep.subr.mxu0 0.0
        %1341 = vmatpush1.msra.mxu0 0.0
        %1342 = vmatprep.subr.mxu0 0.0
        %1343 = vmatpush1.msra.mxu0 0.0
        %1344 = vmatprep.subr.mxu0 0.0
        %1345 = vmatpush1.msra.mxu0 0.0
        %1346 = vmatprep.subr.mxu0 0.0
        %1347 = vmatpush1.msra.mxu0 %v1165
        %1348 = vmatprep.subr.mxu0 0.0
        %1349 = vmatpush2.msra.mxu0 0.0
        %1350 = vmatprep.subr.mxu0 0.0
        %1351 = vmatpush2.msra.mxu0 0.0
        %1352 = vmatprep.subr.mxu0 0.0
        %1353 = vmatpush2.msra.mxu0 0.0
        %1354 = vmatprep.subr.mxu0 0.0
        %1355 = vmatpush2.msra.mxu0 0.0
        %1356 = vmatprep.subr.mxu0 0.0
        %1357 = vmatpush2.msra.mxu0 0.0
        %1358 = vmatprep.subr.mxu0 0.0
        %1359 = vmatpush2.msra.mxu0 0.0
        %1360 = vmatprep.subr.mxu0 0.0
        %1361 = vmatpush2.msra.mxu0 0.0
        %1362 = vmatprep.subr.mxu0 0.0
        %1363 = vmatpush2.msra.mxu0 0.0
        %1364 = vmatprep.subr.mxu0 0.0
        %1365 = vmatpush2.msra.mxu0 0.0
        %1366 = vmatprep.subr.mxu0 0.0
        %1367 = vmatpush2.msra.mxu0 0.0
        %1368 = vmatprep.subr.mxu0 0.0
        %1369 = vmatpush2.msra.mxu0 0.0
        %1370 = vmatprep.subr.mxu0 0.0
        %1371 = vmatpush2.msra.mxu0 0.0
        %1372 = vmatprep.subr.mxu0 0.0
        %1373 = vmatpush2.msra.mxu0 0.0
        %1374 = vmatprep.subr.mxu0 0.0
        %1375 = vmatpush2.msra.mxu0 0.0
        %1376 = vmatprep.subr.mxu0 0.0
        %1377 = vmatpush2.msra.mxu0 0.0
        %1378 = vmatprep.subr.mxu0 0.0
        %1379 = vmatpush2.msra.mxu0 0.0
        %1380 = vmatprep.mubr.f32.mxu0 0.0
        %1381 = vmatmul.mubr.f32.gmra.mxu0 %v1314
        %v1382 = vpop.f32.mrf.mxu0
        %v1383 = vadd.f32 0.0, %v1382
        %v1384 = vpop.f32.mrf.mxu0
        %1385 = vdwg.mxu0
        %v1387 = vsel %vm822, %v1150, 0
        %1389 = vmatprep.subr.mxu0 0.0
        %1390 = vmatpush1.msra.mxu0 0.0
        %1391 = vmatprep.subr.mxu0 0.0
        %1392 = vmatpush1.msra.mxu0 0.0
        %1393 = vmatprep.subr.mxu0 0.0
        %1394 = vmatpush1.msra.mxu0 0.0
        %1395 = vmatprep.subr.mxu0 0.0
        %1396 = vmatpush1.msra.mxu0 0.0
        %1397 = vmatprep.subr.mxu0 0.0
        %1398 = vmatpush1.msra.mxu0 0.0
        %1399 = vmatprep.subr.mxu0 0.0
        %1400 = vmatpush1.msra.mxu0 0.0
        %1401 = vmatprep.subr.mxu0 0.0
        %1402 = vmatpush1.msra.mxu0 0.0
        %1403 = vmatprep.subr.mxu0 0.0
        %1404 = vmatpush1.msra.mxu0 0.0
        %1405 = vmatprep.subr.mxu0 0.0
        %1406 = vmatpush1.msra.mxu0 0.0
        %1407 = vmatprep.subr.mxu0 0.0
        %1408 = vmatpush1.msra.mxu0 0.0
        %1409 = vmatprep.subr.mxu0 0.0
        %1410 = vmatpush1.msra.mxu0 0.0
        %1411 = vmatprep.subr.mxu0 0.0
        %1412 = vmatpush1.msra.mxu0 0.0
        %1413 = vmatprep.subr.mxu0 0.0
        %1414 = vmatpush1.msra.mxu0 0.0
        %1415 = vmatprep.subr.mxu0 0.0
        %1416 = vmatpush1.msra.mxu0 0.0
        %1417 = vmatprep.subr.mxu0 0.0
        %1418 = vmatpush1.msra.mxu0 0.0
        %1419 = vmatprep.subr.mxu0 0.0
        %1420 = vmatpush1.msra.mxu0 %v1166
        %1421 = vmatprep.subr.mxu0 0.0
        %1422 = vmatpush2.msra.mxu0 0.0
        %1423 = vmatprep.subr.mxu0 0.0
        %1424 = vmatpush2.msra.mxu0 0.0
        %1425 = vmatprep.subr.mxu0 0.0
        %1426 = vmatpush2.msra.mxu0 0.0
        %1427 = vmatprep.subr.mxu0 0.0
        %1428 = vmatpush2.msra.mxu0 0.0
        %1429 = vmatprep.subr.mxu0 0.0
        %1430 = vmatpush2.msra.mxu0 0.0
        %1431 = vmatprep.subr.mxu0 0.0
        %1432 = vmatpush2.msra.mxu0 0.0
        %1433 = vmatprep.subr.mxu0 0.0
        %1434 = vmatpush2.msra.mxu0 0.0
        %1435 = vmatprep.subr.mxu0 0.0
        %1436 = vmatpush2.msra.mxu0 0.0
        %1437 = vmatprep.subr.mxu0 0.0
        %1438 = vmatpush2.msra.mxu0 0.0
        %1439 = vmatprep.subr.mxu0 0.0
        %1440 = vmatpush2.msra.mxu0 0.0
        %1441 = vmatprep.subr.mxu0 0.0
        %1442 = vmatpush2.msra.mxu0 0.0
        %1443 = vmatprep.subr.mxu0 0.0
        %1444 = vmatpush2.msra.mxu0 0.0
        %1445 = vmatprep.subr.mxu0 0.0
        %1446 = vmatpush2.msra.mxu0 0.0
        %1447 = vmatprep.subr.mxu0 0.0
        %1448 = vmatpush2.msra.mxu0 0.0
        %1449 = vmatprep.subr.mxu0 0.0
        %1450 = vmatpush2.msra.mxu0 0.0
        %1451 = vmatprep.subr.mxu0 0.0
        %1452 = vmatpush2.msra.mxu0 0.0
        %1453 = vmatprep.mubr.f32.mxu0 0.0
        %1454 = vmatmul.mubr.f32.gmra.mxu0 %v1387
        %v1455 = vpop.f32.mrf.mxu0
        %v1456 = vadd.f32 0.0, %v1455
        %v1457 = vpop.f32.mrf.mxu0
        %1458 = vdwg.mxu0
        %v1459 = vrcp.pop %v1153
        %v1460 = vrcp.pop %v1156
        %v1461 = vrcp.pop %v1159
        %v1462 = vrcp.pop %v1162
        %v1463 = vmul.f32 %v1237, %v1459
        %v1464 = vmul.f32 %v1310, %v1460
        %v1465 = vmul.f32 %v1383, %v1461
        %v1466 = vmul.f32 %v1456, %v1462
        %v1467 = vcombine.low %v1463, %v1465
        %v1468 = vcombine.high %v1463, %v1465
        %v1470 = vunpack.c.l.s4 1983009808
        %v1471 = vunpack.c.0.s8 %v1470
        %v1472 = vlaneseq
        %v1473 = vshrl.u32 %v1472, 7
        %v1474 = vsub.s32 %v1471, %v1473
        %v1475 = vrot.slane %v1467, %v1474
        %v1477 = vunpack.c.l.s4 1983009808
        %v1478 = vunpack.c.0.s8 %v1477
        %v1479 = vlaneseq
        %v1480 = vshrl.u32 %v1479, 7
        %v1481 = vsub.s32 %v1478, %v1480
        %v1482 = vrot.slane %v1468, %v1481
        %v1483 = vcombine.low %v1464, %v1466
        %v1484 = vcombine.high %v1464, %v1466
        %v1486 = vunpack.c.l.s4 1983009808
        %v1487 = vunpack.c.0.s8 %v1486
        %v1488 = vlaneseq
        %v1489 = vshrl.u32 %v1488, 7
        %v1490 = vsub.s32 %v1487, %v1489
        %v1491 = vrot.slane %v1483, %v1490
        %v1493 = vunpack.c.l.s4 1983009808
        %v1494 = vunpack.c.0.s8 %v1493
        %v1495 = vlaneseq
        %v1496 = vshrl.u32 %v1495, 7
        %v1497 = vsub.s32 %v1494, %v1496
        %v1498 = vrot.slane %v1484, %v1497
        %v1499 = vcombine.low %v1475, %v1491
        %v1500 = vcombine.high %v1475, %v1491
        %v1502 = vunpack.c.l.s4 1934713408
        %v1503 = vunpack.c.0.s8 %v1502
        %v1504 = vlaneseq
        %v1505 = vshrl.u32 %v1504, 7
        %v1506 = vsub.s32 %v1503, %v1505
        %v1507 = vrot.slane %v1499, %v1506
        %v1509 = vunpack.c.l.s4 1934713408
        %v1510 = vunpack.c.0.s8 %v1509
        %v1511 = vlaneseq
        %v1512 = vshrl.u32 %v1511, 7
        %v1513 = vsub.s32 %v1510, %v1512
        %v1514 = vrot.slane %v1500, %v1513
        %v1515 = vcombine.low %v1482, %v1498
        %v1516 = vcombine.high %v1482, %v1498
        %v1518 = vunpack.c.l.s4 1934713408
        %v1519 = vunpack.c.0.s8 %v1518
        %v1520 = vlaneseq
        %v1521 = vshrl.u32 %v1520, 7
        %v1522 = vsub.s32 %v1519, %v1521
        %v1523 = vrot.slane %v1515, %v1522
        %v1525 = vunpack.c.l.s4 1934713408
        %v1526 = vunpack.c.0.s8 %v1525
        %v1527 = vlaneseq
        %v1528 = vshrl.u32 %v1527, 7
        %v1529 = vsub.s32 %v1526, %v1528
        %v1530 = vrot.slane %v1516, %v1529
        %v1531 = vcombine.high %v1507, 0.0
        %v1532 = vcombine.high %v1514, 0.0
        %v1533 = vcombine.high %v1523, 0.0
        %v1534 = vcombine.high %v1530, 0.0
        %v1535 = vcombine.low %v1507, %v1514
        %v1537 = vunpack.c.l.s4 1983009808
        %v1538 = vunpack.c.0.s8 %v1537
        %v1539 = vlaneseq
        %v1540 = vshrl.u32 %v1539, 7
        %v1541 = vsub.s32 %v1538, %v1540
        %v1542 = vrot.slane %v1535, %v1541
        %v1543 = vcombine.low %v1531, %v1532
        %v1545 = vunpack.c.l.s4 1983009808
        %v1546 = vunpack.c.0.s8 %v1545
        %v1547 = vlaneseq
        %v1548 = vshrl.u32 %v1547, 7
        %v1549 = vsub.s32 %v1546, %v1548
        %v1550 = vrot.slane %v1543, %v1549
        %v1551 = vcombine.low %v1523, %v1530
        %v1553 = vunpack.c.l.s4 1983009808
        %v1554 = vunpack.c.0.s8 %v1553
        %v1555 = vlaneseq
        %v1556 = vshrl.u32 %v1555, 7
        %v1557 = vsub.s32 %v1554, %v1556
        %v1558 = vrot.slane %v1551, %v1557
        %v1559 = vcombine.low %v1533, %v1534
        %v1561 = vunpack.c.l.s4 1983009808
        %v1562 = vunpack.c.0.s8 %v1561
        %v1563 = vlaneseq
        %v1564 = vshrl.u32 %v1563, 7
        %v1565 = vsub.s32 %v1562, %v1564
        %v1566 = vrot.slane %v1559, %v1565
        %v1567 = vcombine.low %v1542, %v1550
        %v1568 = vcombine.high %v1542, %v1550
        %v1570 = vunpack.c.l.s4 1934713408
        %v1571 = vunpack.c.0.s8 %v1570
        %v1572 = vlaneseq
        %v1573 = vshrl.u32 %v1572, 7
        %v1574 = vsub.s32 %v1571, %v1573
        %v1575 = vrot.slane %v1567, %v1574
        %v1577 = vunpack.c.l.s4 1934713408
        %v1578 = vunpack.c.0.s8 %v1577
        %v1579 = vlaneseq
        %v1580 = vshrl.u32 %v1579, 7
        %v1581 = vsub.s32 %v1578, %v1580
        %v1582 = vrot.slane %v1568, %v1581
        %v1583 = vcombine.low %v1558, %v1566
        %v1584 = vcombine.high %v1558, %v1566
        %v1586 = vunpack.c.l.s4 1934713408
        %v1587 = vunpack.c.0.s8 %v1586
        %v1588 = vlaneseq
        %v1589 = vshrl.u32 %v1588, 7
        %v1590 = vsub.s32 %v1587, %v1589
        %v1591 = vrot.slane %v1583, %v1590
        %v1593 = vunpack.c.l.s4 1934713408
        %v1594 = vunpack.c.0.s8 %v1593
        %v1595 = vlaneseq
        %v1596 = vshrl.u32 %v1595, 7
        %v1597 = vsub.s32 %v1594, %v1596
        %v1598 = vrot.slane %v1584, %v1597
        %v1599 = vcombine.low %v1575, %v1591
        %v1600 = vcombine.high %v1575, %v1591
        %v1601 = vcombine.low %v1582, %v1598
        %v1602 = vcombine.high %v1582, %v1598
        %1604 = vrot.lane.b32.xlu0 %v1600, 8
        %v1605 = vpop.permute.xlu0 %1604
        %1608 = vrot.lane.b32.xlu0 %v1601, 16
        %v1609 = vpop.permute.xlu0 %1608
        %1612 = vrot.lane.b32.xlu0 %v1602, 24
        %v1613 = vpop.permute.xlu0 %1612
        %v1615 = vsel %vm822, %v1599, %v1605
        %vm1616 = vcmask 130048
        %v1617 = vsel %vm1616, %v1615, %v1609
        %vm1618 = vcmask 195584
        %v1619 = vsel %vm1618, %v1617, %v1613
        %v1620 = vld [vmem:[#allocation10] sm:$0xff]
        %v1621 = vld [vmem:[#allocation10 + $0x8] sm:$0xff]
        %v1622 = vld [vmem:[#allocation10 + $0x10] sm:$0xff]
        %v1623 = vld [vmem:[#allocation10 + $0x18] sm:$0xff]
        %v1624 = vlaneseq
        %v1625 = vshrl.u32 %v1624, 7
        %v1626 = vsub.s32 1, %v1625
        %v1627 = vrot.slane %v269, %v1626
        %vm1628 = vcmask 261120
        %v1630 = vsel %vm1628, %v1619, 0
        %1632 = vmatprep.subr.mxu0 0.0
        %1633 = vmatpush1.msra.mxu0 0.0
        %1634 = vmatprep.subr.mxu0 0.0
        %1635 = vmatpush1.msra.mxu0 0.0
        %1636 = vmatprep.subr.mxu0 0.0
        %1637 = vmatpush1.msra.mxu0 0.0
        %1638 = vmatprep.subr.mxu0 0.0
        %1639 = vmatpush1.msra.mxu0 0.0
        %1640 = vmatprep.subr.mxu0 0.0
        %1641 = vmatpush1.msra.mxu0 0.0
        %1642 = vmatprep.subr.mxu0 0.0
        %1643 = vmatpush1.msra.mxu0 0.0
        %1644 = vmatprep.subr.mxu0 0.0
        %1645 = vmatpush1.msra.mxu0 0.0
        %1646 = vmatprep.subr.mxu0 0.0
        %1647 = vmatpush1.msra.mxu0 0.0
        %1648 = vmatprep.subr.mxu0 0.0
        %1649 = vmatpush1.msra.mxu0 0.0
        %1650 = vmatprep.subr.mxu0 0.0
        %1651 = vmatpush1.msra.mxu0 0.0
        %1652 = vmatprep.subr.mxu0 0.0
        %1653 = vmatpush1.msra.mxu0 0.0
        %1654 = vmatprep.subr.mxu0 0.0
        %1655 = vmatpush1.msra.mxu0 0.0
        %1656 = vmatprep.subr.mxu0 0.0
        %1657 = vmatpush1.msra.mxu0 %v1623
        %1658 = vmatprep.subr.mxu0 0.0
        %1659 = vmatpush1.msra.mxu0 %v1622
        %1660 = vmatprep.subr.mxu0 0.0
        %1661 = vmatpush1.msra.mxu0 %v1621
        %1662 = vmatprep.subr.mxu0 0.0
        %1663 = vmatpush1.msra.mxu0 %v1620
        %1664 = vmatprep.subr.mxu0 0.0
        %1665 = vmatpush2.msra.mxu0 0.0
        %1666 = vmatprep.subr.mxu0 0.0
        %1667 = vmatpush2.msra.mxu0 0.0
        %1668 = vmatprep.subr.mxu0 0.0
        %1669 = vmatpush2.msra.mxu0 0.0
        %1670 = vmatprep.subr.mxu0 0.0
        %1671 = vmatpush2.msra.mxu0 0.0
        %1672 = vmatprep.subr.mxu0 0.0
        %1673 = vmatpush2.msra.mxu0 0.0
        %1674 = vmatprep.subr.mxu0 0.0
        %1675 = vmatpush2.msra.mxu0 0.0
        %1676 = vmatprep.subr.mxu0 0.0
        %1677 = vmatpush2.msra.mxu0 0.0
        %1678 = vmatprep.subr.mxu0 0.0
        %1679 = vmatpush2.msra.mxu0 0.0
        %1680 = vmatprep.subr.mxu0 0.0
        %1681 = vmatpush2.msra.mxu0 0.0
        %1682 = vmatprep.subr.mxu0 0.0
        %1683 = vmatpush2.msra.mxu0 0.0
        %1684 = vmatprep.subr.mxu0 0.0
        %1685 = vmatpush2.msra.mxu0 0.0
        %1686 = vmatprep.subr.mxu0 0.0
        %1687 = vmatpush2.msra.mxu0 0.0
        %1688 = vmatprep.subr.mxu0 0.0
        %1689 = vmatpush2.msra.mxu0 0.0
        %1690 = vmatprep.subr.mxu0 0.0
        %1691 = vmatpush2.msra.mxu0 0.0
        %1692 = vmatprep.subr.mxu0 0.0
        %1693 = vmatpush2.msra.mxu0 0.0
        %1694 = vmatprep.subr.mxu0 0.0
        %1695 = vmatpush2.msra.mxu0 0.0
        %1696 = vmatprep.mubr.f32.mxu0 0.0
        %1697 = vmatmul.mubr.f32.gmra.mxu0 %v1630
        %v1698 = vpop.f32.mrf.mxu0
        %v1699 = vadd.f32 %v1627, %v1698
        %v1700 = vpop.f32.mrf.mxu0
        %1701 = vdwg.mxu0
        %v1702 = vsel %vm1628, %v1699, 0.0
        %1703 = vadd.xlane.f32.xlu0 %v1702
        %v1704 = vpop.xlane.xlu0 %1703
        %v1705 = vrcp.pop 32.0
        %v1706 = vmul.f32 %v1704, %v1705
        %v1707 = vsub.f32 %v1699, %v1706
        %v1708 = vmul.f32 %v1707, %v1707
        %v1709 = vsel %vm1628, %v1708, 0.0
        %1710 = vadd.xlane.f32.xlu0 %v1709
        %v1711 = vpop.xlane.xlu0 %1710
        %v1712 = vmul.f32 %v1711, %v1705
        %v1713 = vadd.f32 %v1712, 1e-12
        %v1714 = vrsqrt.pop %v1713
        %v1715 = vmul.f32 %v1707, %v1714
        %v1716 = vlaneseq
        %v1717 = vshrl.u32 %v1716, 7
        %v1718 = vsub.s32 2, %v1717
        %v1719 = vrot.slane %v269, %v1718
        %v1720 = vmul.f32 %v1715, %v1719
        %v1721 = vlaneseq
        %v1722 = vshrl.u32 %v1721, 7
        %v1723 = vsub.s32 3, %v1722
        %v1724 = vrot.slane %v269, %v1723
        %v1725 = vadd.f32 %v1720, %v1724
        %1726 = vst.msk [vmem:[%s268] sm:$0xff] %vm1628, %v1725
        %s1727 = sand.u32 %s134, 1
        %s1728 = scalar_lea.sflag [#allocation7], %s1727
        %s1729 = sand.u32 %s134, 1
        %s1730 = smul.addr %s1729, 8
        %s1731 = scalar_lea.vmem [#allocation13], %s1730
        // Predicated region
        $region57: #{tpu_custom_call.1} parent=35 // pred_check
          %p1732 = pneg %p144
        $region58: #{tpu_custom_call.1} parent=35 // pred_check_branch
          %1734 = sbr.rel (%p1732) target = $region60
        $region59: #{tpu_custom_call.1} parent=35 // pred_region
          %s1736 = ssub.s32 128, 128
          %1737 = vsyncadd %s1728, %s1736
          %s1738 = sadd.s32 %s28, %s27
          %s1739 = smul.addr %s1738, 128
          %s1740 = scalar_lea.hbm %s4, %s1739
          %s1742 = sshll.u32 %s1731, 4
          %s1743 = int_to_ptr.vmem [resolvable:$true] %s1742
          %1745 = dma.vmem_to_hbm [thread:$0]  %s1743, 128, %s1740, %s1728
        $region60: #{tpu_custom_call.1} parent=35 // pred_fallthru
          _
      $region36: #{tpu_custom_call.1} parent=5 // pred_fallthru
        _
      %p1746 = scmp.le.s32.totalorder 2, %s18
      // Predicated region
      $region61: #{tpu_custom_call.1} parent=5 // pred_check
        %p1747 = pneg %p1746
      $region62: #{tpu_custom_call.1} parent=5 // pred_check_branch
        %1749 = sbr.rel (%p1747) target = $region64
      $region63: #{tpu_custom_call.1} parent=5 // pred_region
        %s1750 = ssub.s32 %s18, 2
        // Predicated region
        $region65: #{tpu_custom_call.1} parent=63 // pred_check
          %p1751 = pneg %p150
        $region66: #{tpu_custom_call.1} parent=63 // pred_check_branch
          %1753 = sbr.rel (%p1751) target = $region68
        $region67: #{tpu_custom_call.1} parent=63 // pred_region
          %s1754 = sand.u32 %s135, 1
          %s1755 = scalar_lea.sflag [#allocation7], %s1754
          %s1756 = sand.u32 %s135, 1
          %s1757 = smul.addr %s1756, 8
          %s1758 = scalar_lea.vmem [#allocation13], %s1757
          %1759 = dma.done %s1755, 128
        $region68: #{tpu_custom_call.1} parent=63 // pred_fallthru
          _
      $region64: #{tpu_custom_call.1} parent=5 // pred_fallthru
        _
    $region6: #{tpu_custom_call.1} parent=1 // loop_footer
      %s22 = sadd.s32 1, %s18
    $region7: #{tpu_custom_call.1} parent=1 // loop_footer_branch
      %17 = sbr.rel target = $region3
    $region8: #{tpu_custom_call.1} parent=1 // loop_exit
      _
    %1760 = vsyncpa [#allocation6], 1
    %s1761 = scalar_lea.sflag [#allocation6], 1
    %1762 = vsyncpa %s1761, 1
    %1763 = vsyncpa [#allocation9], 1
    %1764 = vsyncpa [#allocation12], 1
    %1765 = vsyncpa [#allocation7], 1
    %s1766 = scalar_lea.sflag [#allocation7], 1
    %1767 = vsyncpa %s1766, 1

// kernel: tpu_custom_call.1
$region0: #{tpu_custom_call.1}
  #allocation0 [shape = 'u32[]', space=smem, size = 0x4, offset = 0x4, fixed_abs, tag = 'smem constant byte address 0x4 - core index']
  #allocation1 [shape = 'u32[144,128]{1,0:T(1,128)}', space=vmem, size = 0x12000, scoped, tag = 'internal scratch']
  #allocation2 [shape = 'f32[4,8,8]{2,1,0:T(8,128)}', space=vmem, size = 0x4000, scoped, tag = 'scratch operand']
  #allocation3 [shape = 'f32[4,8,8]{2,1,0:T(8,128)}', space=vmem, size = 0x4000, scoped, tag = 'scratch operand']
  #allocation4 [shape = 'f32[4,8,8]{2,1,0:T(8,128)}', space=vmem, size = 0x4000, scoped, tag = 'scratch operand']
  %s0 = inlined_call_operand.hbm [shape: f32[2,8,32], index: 0, kind: input, shape index: {}]
  %s1 = inlined_call_operand.hbm [shape: f32[32,96], index: 1, kind: input, shape index: {}]
  %s2 = inlined_call_operand.hbm [shape: f32[32,32], index: 2, kind: input, shape index: {}]
  %s3 = inlined_call_operand.hbm [shape: f32[8,96], index: 3, kind: input, shape index: {}]
  %s4 = inlined_call_operand.hbm [shape: f32[2,8,32], index: 4, kind: output, shape index: {}]
  %s5 = sld [smem:[#allocation0]]
  $region69: #{tpu_custom_call.1} parent=0
    _
  %s7 = ssub.s32 1, %s5
  %s8 = scalar_select 0, %s7, %s5
  $region1: #{tpu_custom_call.1} parent=0
    #allocation5 [shape = 'u8[8192]{0}', space=vmem, size = 0x2000, scoped, tag = 'input window, operand 0']
    #allocation6 [shape = 's32[2]{0}', space=sflag, size = 0x8, scoped, tag = 'scoped memory for tpu_custom_call.1']
    #allocation7 [shape = 's32[2]{0}', space=sflag, size = 0x8, scoped, tag = 'scoped memory for tpu_custom_call.1']
    #allocation8 [shape = 'u8[16384]{0}', space=vmem, size = 0x4000, scoped, tag = 'input window, operand 1, single buffered']
    #allocation9 [shape = 's32[1]{0}', space=sflag, size = 0x4, scoped, tag = 'scoped memory for tpu_custom_call.1']
    #allocation10 [shape = 'u8[16384]{0}', space=vmem, size = 0x4000, scoped, tag = 'input window, operand 2, single buffered']
    #allocation11 [shape = 'u8[4096]{0}', space=vmem, size = 0x1000, scoped, tag = 'input window, operand 3, single buffered']
    #allocation12 [shape = 's32[1]{0}', space=sflag, size = 0x4, scoped, tag = 'scoped memory for tpu_custom_call.1']
    #allocation13 [shape = 'u8[8192]{0}', space=vmem, size = 0x2000, scoped, tag = 'output window, operand 0']
    %9 = vsyncpa [#allocation6], 0
    %s10 = scalar_lea.sflag [#allocation6], 1
    %11 = vsyncpa %s10, 0
    %12 = vsyncpa [#allocation9], 0
    %13 = vsyncpa [#allocation12], 0
    %14 = vsyncpa [#allocation7], 0
    %s15 = scalar_lea.sflag [#allocation7], 1
    %16 = vsyncpa %s15, 0
    loop: start=0, step=1, limit=4
    $region2: #{tpu_custom_call.1} parent=1 // loop_pre_header
      _
    $region3: #{tpu_custom_call.1} parent=1 // loop_header
      %s18 = sphi 0, %s22
      %p19 = scmp.ge.s32.totalorder %s18, 4
      %s25 = sphi 0, %s37
      %s26 = sphi 0, %s33
      %s27 = sphi 0, %s25
      %s28 = sphi 0, %s26
      %s29 = sphi 0, %s27
      %s30 = sphi 0, %s28
      %s40 = sphi 0, %s42
      %s43 = sphi 0, %s40
      %s44 = sphi 0, %s43
      %s60 = sphi 0, %s44
      %s64 = sphi 0, %s64
      %s66 = sphi 0, %s64
      %s67 = sphi 0, %s66
      %s81 = sphi 0, %s67
      %s85 = sphi 0, %s85
      %s87 = sphi 0, %s85
      %s88 = sphi 0, %s87
      %s102 = sphi 0, %s88
      %s106 = sphi 0, %s106
      %s108 = sphi 0, %s106
      %s109 = sphi 0, %s108
      %s123 = sphi 0, %s109
      %s131 = sphi 0, %s133
      %s134 = sphi 0, %s131
      %s135 = sphi 0, %s134
      %s151 = sphi 0, %s135
    $region4: #{tpu_custom_call.1} parent=1 // loop_header_branch
      %21 = sbr.rel (%p19) target = $region8
    $region5: #{tpu_custom_call.1} parent=1 // loop_body
      %s23 = ssub.s32 %s18, 1
      %s24 = ssub.s32 %s18, 2
      %s31 = sadd.s32 1, %s26
      %p32 = scmp.ge.s32.totalorder %s31, 1
      %s33 = scalar_select %p32, 0, %s31
      %s34 = sadd.s32 1, %s25
      %s35 = scalar_select %p32, %s34, %s25
      %p36 = scmp.ge.s32.totalorder %s35, 2
      %s37 = scalar_select %p36, 0, %s35
      %s38 = ssub.s32 %s25, %s37
      %p39 = scmp.eq.s32.totalorder %s38, 0
      %s41 = sadd.s32 %s40, 1
      %s42 = scalar_select %p39, %s40, %s41
      %p45 = pneg %p39
      %p46 = scmp.eq.s32.totalorder %s18, 1
      %p47 = por %p45, %p46
      %p48 = scmp.ne.s32.totalorder %s40, %s43
      %p49 = scmp.eq.s32.totalorder %s18, 0
      %p50 = por %p48, %p49
      %p51 = scmp.ne.s32.totalorder %s40, %s43
      %p52 = scmp.eq.s32.totalorder %s23, 1
      %p53 = por %p51, %p52
      %p54 = scmp.ne.s32.totalorder %s43, %s44
      %p55 = scmp.eq.s32.totalorder %s23, 0
      %p56 = por %p54, %p55
      %p57 = scmp.ne.s32.totalorder %s43, %s44
      %p58 = scmp.eq.s32.totalorder %s24, 1
      %p59 = por %p57, %p58
      %p61 = scmp.ne.s32.totalorder %s44, %s60
      %p62 = scmp.eq.s32.totalorder %s24, 0
      %p63 = por %p61, %p62
      %s65 = sadd.s32 %s64, 1
      %p68 = scmp.eq.s32.totalorder %s18, 1
      %p69 = scmp.ne.s32.totalorder %s64, %s66
      %p70 = scmp.eq.s32.totalorder %s18, 0
      %p71 = por %p69, %p70
      %p72 = scmp.ne.s32.totalorder %s64, %s66
      %p73 = scmp.eq.s32.totalorder %s23, 1
      %p74 = por %p72, %p73
      %p75 = scmp.ne.s32.totalorder %s66, %s67
      %p76 = scmp.eq.s32.totalorder %s23, 0
      %p77 = por %p75, %p76
      %p78 = scmp.ne.s32.totalorder %s66, %s67
      %p79 = scmp.eq.s32.totalorder %s24, 1
      %p80 = por %p78, %p79
      %p82 = scmp.ne.s32.totalorder %s67, %s81
      %p83 = scmp.eq.s32.totalorder %s24, 0
      %p84 = por %p82, %p83
      %s86 = sadd.s32 %s85, 1
      %p89 = scmp.eq.s32.totalorder %s18, 1
      %p90 = scmp.ne.s32.totalorder %s85, %s87
      %p91 = scmp.eq.s32.totalorder %s18, 0
      %p92 = por %p90, %p91
      %p93 = scmp.ne.s32.totalorder %s85, %s87
      %p94 = scmp.eq.s32.totalorder %s23, 1
      %p95 = por %p93, %p94
      %p96 = scmp.ne.s32.totalorder %s87, %s88
      %p97 = scmp.eq.s32.totalorder %s23, 0
      %p98 = por %p96, %p97
      %p99 = scmp.ne.s32.totalorder %s87, %s88
      %p100 = scmp.eq.s32.totalorder %s24, 1
      %p101 = por %p99, %p100
      %p103 = scmp.ne.s32.totalorder %s88, %s102
      %p104 = scmp.eq.s32.totalorder %s24, 0
      %p105 = por %p103, %p104
      %s107 = sadd.s32 %s106, 1
      %p110 = scmp.eq.s32.totalorder %s18, 1
      %p111 = scmp.ne.s32.totalorder %s106, %s108
      %p112 = scmp.eq.s32.totalorder %s18, 0
      %p113 = por %p111, %p112
      %p114 = scmp.ne.s32.totalorder %s106, %s108
      %p115 = scmp.eq.s32.totalorder %s23, 1
      %p116 = por %p114, %p115
      %p117 = scmp.ne.s32.totalorder %s108, %s109
      %p118 = scmp.eq.s32.totalorder %s23, 0
      %p119 = por %p117, %p118
      %p120 = scmp.ne.s32.totalorder %s108, %s109
      %p121 = scmp.eq.s32.totalorder %s24, 1
      %p122 = por %p120, %p121
      %p124 = scmp.ne.s32.totalorder %s109, %s123
      %p125 = scmp.eq.s32.totalorder %s24, 0
      %p126 = por %p124, %p125
      %s127 = ssub.s32 %s25, %s37
      %s128 = ssub.s32 %s26, %s33
      %s129 = sor.u32 %s127, %s128
      %p130 = scmp.eq.s32.totalorder %s129, 0
      %s132 = sadd.s32 %s131, 1
      %s133 = scalar_select %p130, %s131, %s132
      %p136 = pneg %p130
      %p137 = scmp.eq.s32.totalorder %s18, 1
      %p138 = por %p136, %p137
      %p139 = scmp.ne.s32.totalorder %s131, %s134
      %p140 = scmp.eq.s32.totalorder %s18, 0
      %p141 = por %p139, %p140
      %p142 = scmp.ne.s32.totalorder %s131, %s134
      %p143 = scmp.eq.s32.totalorder %s23, 1
      %p144 = por %p142, %p143
      %p145 = scmp.ne.s32.totalorder %s134, %s135
      %p146 = scmp.eq.s32.totalorder %s23, 0
      %p147 = por %p145, %p146
      %p148 = scmp.ne.s32.totalorder %s134, %s135
      %p149 = scmp.eq.s32.totalorder %s24, 1
      %p150 = por %p148, %p149
      %p152 = scmp.ne.s32.totalorder %s135, %s151
      %p153 = scmp.eq.s32.totalorder %s24, 0
      %p154 = por %p152, %p153
      %p155 = scmp.le.s32.totalorder 1, %s18
      %p156 = scmp.lt.s32.totalorder %s18, 3
      %p157 = pnand %p155, %p156
      %p158 = pneg %p157
      // Predicated region
      $region9: #{tpu_custom_call.1} parent=5 // pred_check
        _
      $region10: #{tpu_custom_call.1} parent=5 // pred_check_branch
        %160 = sbr.rel (%p157) target = $region12
      $region11: #{tpu_custom_call.1} parent=5 // pred_region
        %s161 = ssub.s32 %s18, 1
        // Predicated region
        $region13: #{tpu_custom_call.1} parent=11 // pred_check
          %p162 = pneg %p77
        $region14: #{tpu_custom_call.1} parent=11 // pred_check_branch
          %164 = sbr.rel (%p162) target = $region16
        $region15: #{tpu_custom_call.1} parent=11 // pred_region
          %s166 = ssub.s32 512, 512
          %167 = vsyncadd [#allocation9], %s166
          %s168 = sshll.u32 [#allocation8], 4
          %s169 = int_to_ptr.vmem [resolvable:$true] %s168
          %174 = dma.hbm_to_vmem [thread:$0]  %s1, 512, %s169, [#allocation9], 128, 128, 8
        $region16: #{tpu_custom_call.1} parent=11 // pred_fallthru
          _
        // Predicated region
        $region17: #{tpu_custom_call.1} parent=11 // pred_check
          %p175 = pneg %p98
        $region18: #{tpu_custom_call.1} parent=11 // pred_check_branch
          %177 = sbr.rel (%p175) target = $region20
        $region19: #{tpu_custom_call.1} parent=11 // pred_region
          %s179 = ssub.s32 512, 512
          %180 = vsyncadd [#allocation9], %s179
          %s181 = sshll.u32 [#allocation10], 4
          %s182 = int_to_ptr.vmem [resolvable:$true] %s181
          %187 = dma.hbm_to_vmem [thread:$0]  %s2, 512, %s182, [#allocation9], 128, 128, 8
        $region20: #{tpu_custom_call.1} parent=11 // pred_fallthru
          _
        // Predicated region
        $region21: #{tpu_custom_call.1} parent=11 // pred_check
          %p188 = pneg %p119
        $region22: #{tpu_custom_call.1} parent=11 // pred_check_branch
          %190 = sbr.rel (%p188) target = $region24
        $region23: #{tpu_custom_call.1} parent=11 // pred_region
          %s192 = ssub.s32 128, 128
          %193 = vsyncadd [#allocation12], %s192
          %s195 = sshll.u32 [#allocation11], 4
          %s196 = int_to_ptr.vmem [resolvable:$true] %s195
          %198 = dma.hbm_to_vmem [thread:$0]  %s3, 128, %s196, [#allocation12]
        $region24: #{tpu_custom_call.1} parent=11 // pred_fallthru
          _
      $region12: #{tpu_custom_call.1} parent=5 // pred_fallthru
        _
      %p199 = scmp.lt.s32.totalorder %s18, 2
      // Predicated region
      $region25: #{tpu_custom_call.1} parent=5 // pred_check
        %p200 = pneg %p199
      $region26: #{tpu_custom_call.1} parent=5 // pred_check_branch
        %202 = sbr.rel (%p200) target = $region28
      $region27: #{tpu_custom_call.1} parent=5 // pred_region
        // Predicated region
        $region29: #{tpu_custom_call.1} parent=27 // pred_check
          %p203 = pneg %p50
        $region30: #{tpu_custom_call.1} parent=27 // pred_check_branch
          %205 = sbr.rel (%p203) target = $region32
        $region31: #{tpu_custom_call.1} parent=27 // pred_region
          %s206 = sand.u32 %s40, 1
          %s207 = scalar_lea.sflag [#allocation6], %s206
          %s208 = sand.u32 %s40, 1
          %s209 = smul.addr %s208, 8
          %s210 = scalar_lea.vmem [#allocation5], %s209
          %s212 = ssub.s32 128, 128
          %213 = vsyncadd %s207, %s212
          %s214 = smul.addr %s25, 128
          %s215 = scalar_lea.hbm %s0, %s214
          %s217 = sshll.u32 %s210, 4
          %s218 = int_to_ptr.vmem [resolvable:$true] %s217
          %220 = dma.hbm_to_vmem [thread:$0]  %s215, 128, %s218, %s207
        $region32: #{tpu_custom_call.1} parent=27 // pred_fallthru
          _
      $region28: #{tpu_custom_call.1} parent=5 // pred_fallthru
        _
      %p221 = scmp.le.s32.totalorder 1, %s18
      %p222 = scmp.lt.s32.totalorder %s18, 3
      %p223 = pnand %p221, %p222
      %p224 = pneg %p223
      // Predicated region
      $region33: #{tpu_custom_call.1} parent=5 // pred_check
        _
      $region34: #{tpu_custom_call.1} parent=5 // pred_check_branch
        %226 = sbr.rel (%p223) target = $region36
      $region35: #{tpu_custom_call.1} parent=5 // pred_region
        %s227 = ssub.s32 %s18, 1
        %s228 = sand.u32 %s43, 1
        %s229 = scalar_lea.sflag [#allocation6], %s228
        %s230 = sand.u32 %s43, 1
        %s231 = smul.addr %s230, 8
        %s232 = scalar_lea.vmem [#allocation5], %s231
        // Predicated region
        $region37: #{tpu_custom_call.1} parent=35 // pred_check
          %p233 = pneg %p56
        $region38: #{tpu_custom_call.1} parent=35 // pred_check_branch
          %235 = sbr.rel (%p233) target = $region40
        $region39: #{tpu_custom_call.1} parent=35 // pred_region
          %236 = dma.done %s229, 128
        $region40: #{tpu_custom_call.1} parent=35 // pred_fallthru
          _
        // Predicated region
        $region41: #{tpu_custom_call.1} parent=35 // pred_check
          %p237 = pneg %p77
        $region42: #{tpu_custom_call.1} parent=35 // pred_check_branch
          %239 = sbr.rel (%p237) target = $region44
        $region43: #{tpu_custom_call.1} parent=35 // pred_region
          %240 = dma.done [#allocation9], 512
        $region44: #{tpu_custom_call.1} parent=35 // pred_fallthru
          _
        // Predicated region
        $region45: #{tpu_custom_call.1} parent=35 // pred_check
          %p241 = pneg %p98
        $region46: #{tpu_custom_call.1} parent=35 // pred_check_branch
          %243 = sbr.rel (%p241) target = $region48
        $region47: #{tpu_custom_call.1} parent=35 // pred_region
          %244 = dma.done [#allocation9], 512
        $region48: #{tpu_custom_call.1} parent=35 // pred_fallthru
          _
        // Predicated region
        $region49: #{tpu_custom_call.1} parent=35 // pred_check
          %p245 = pneg %p119
        $region50: #{tpu_custom_call.1} parent=35 // pred_check_branch
          %247 = sbr.rel (%p245) target = $region52
        $region51: #{tpu_custom_call.1} parent=35 // pred_region
          %248 = dma.done [#allocation12], 128
        $region52: #{tpu_custom_call.1} parent=35 // pred_fallthru
          _
        %s249 = sand.u32 %s43, 1
        %s250 = scalar_lea.sflag [#allocation6], %s249
        %s251 = sand.u32 %s43, 1
        %s252 = smul.addr %s251, 8
        %s253 = scalar_lea.vmem [#allocation5], %s252
        %p254 = pneg %p56
        %p255 = pneg %p53
        %p256 = pneg %p77
        %p257 = pneg %p74
        %p258 = pneg %p98
        %p259 = pneg %p95
        %p260 = pneg %p119
        %p261 = pneg %p116
        %p262 = pneg %p147
        %p263 = pneg %p144
        %s264 = sand.u32 %s134, 1
        %s265 = scalar_lea.sflag [#allocation7], %s264
        %s266 = sand.u32 %s134, 1
        %s267 = smul.addr %s266, 8
        %s268 = scalar_lea.vmem [#allocation13], %s267
        %v269 = vld [vmem:[#allocation11] sm:$0xff]
        %p270 = scmp.eq.s32.totalorder %s28, 0
        // Predicated region
        $region53: #{tpu_custom_call.1} parent=35 // pred_check
          %p271 = pneg %p270
        $region54: #{tpu_custom_call.1} parent=35 // pred_check_branch
          %273 = sbr.rel (%p271) target = $region56
        $region55: #{tpu_custom_call.1} parent=35 // pred_region
          %v274 = vld [vmem:[%s232] sm:$0xff]
          %v275 = vld [vmem:[#allocation8] sm:$0xff]
          %v276 = vld [vmem:[#allocation8 + $0x8] sm:$0xff]
          %v277 = vld [vmem:[#allocation8 + $0x10] sm:$0xff]
          %v278 = vld [vmem:[#allocation8 + $0x18] sm:$0xff]
          %v279 = vlaneseq
          %v280 = vshrl.u32 %v279, 7
          %v281 = vsub.s32 0, %v280
          %v282 = vrot.slane %v269, %v281
          %vm283 = vcmask 261120
          %v285 = vsel %vm283, %v274, 0
          %287 = vmatprep.subr.mxu0 0.0
          %288 = vmatpush1.msra.mxu0 0.0
          %289 = vmatprep.subr.mxu0 0.0
          %290 = vmatpush1.msra.mxu0 0.0
          %291 = vmatprep.subr.mxu0 0.0
          %292 = vmatpush1.msra.mxu0 0.0
          %293 = vmatprep.subr.mxu0 0.0
          %294 = vmatpush1.msra.mxu0 0.0
          %295 = vmatprep.subr.mxu0 0.0
          %296 = vmatpush1.msra.mxu0 0.0
          %297 = vmatprep.subr.mxu0 0.0
          %298 = vmatpush1.msra.mxu0 0.0
          %299 = vmatprep.subr.mxu0 0.0
          %300 = vmatpush1.msra.mxu0 0.0
          %301 = vmatprep.subr.mxu0 0.0
          %302 = vmatpush1.msra.mxu0 0.0
          %303 = vmatprep.subr.mxu0 0.0
          %304 = vmatpush1.msra.mxu0 0.0
          %305 = vmatprep.subr.mxu0 0.0
          %306 = vmatpush1.msra.mxu0 0.0
          %307 = vmatprep.subr.mxu0 0.0
          %308 = vmatpush1.msra.mxu0 0.0
          %309 = vmatprep.subr.mxu0 0.0
          %310 = vmatpush1.msra.mxu0 0.0
          %311 = vmatprep.subr.mxu0 0.0
          %312 = vmatpush1.msra.mxu0 %v278
          %313 = vmatprep.subr.mxu0 0.0
          %314 = vmatpush1.msra.mxu0 %v277
          %315 = vmatprep.subr.mxu0 0.0
          %316 = vmatpush1.msra.mxu0 %v276
          %317 = vmatprep.subr.mxu0 0.0
          %318 = vmatpush1.msra.mxu0 %v275
          %319 = vmatprep.subr.mxu0 0.0
          %320 = vmatpush2.msra.mxu0 0.0
          %321 = vmatprep.subr.mxu0 0.0
          %322 = vmatpush2.msra.mxu0 0.0
          %323 = vmatprep.subr.mxu0 0.0
          %324 = vmatpush2.msra.mxu0 0.0
          %325 = vmatprep.subr.mxu0 0.0
          %326 = vmatpush2.msra.mxu0 0.0
          %327 = vmatprep.subr.mxu0 0.0
          %328 = vmatpush2.msra.mxu0 0.0
          %329 = vmatprep.subr.mxu0 0.0
          %330 = vmatpush2.msra.mxu0 0.0
          %331 = vmatprep.subr.mxu0 0.0
          %332 = vmatpush2.msra.mxu0 0.0
          %333 = vmatprep.subr.mxu0 0.0
          %334 = vmatpush2.msra.mxu0 0.0
          %335 = vmatprep.subr.mxu0 0.0
          %336 = vmatpush2.msra.mxu0 0.0
          %337 = vmatprep.subr.mxu0 0.0
          %338 = vmatpush2.msra.mxu0 0.0
          %339 = vmatprep.subr.mxu0 0.0
          %340 = vmatpush2.msra.mxu0 0.0
          %341 = vmatprep.subr.mxu0 0.0
          %342 = vmatpush2.msra.mxu0 0.0
          %343 = vmatprep.subr.mxu0 0.0
          %344 = vmatpush2.msra.mxu0 0.0
          %345 = vmatprep.subr.mxu0 0.0
          %346 = vmatpush2.msra.mxu0 0.0
          %347 = vmatprep.subr.mxu0 0.0
          %348 = vmatpush2.msra.mxu0 0.0
          %349 = vmatprep.subr.mxu0 0.0
          %350 = vmatpush2.msra.mxu0 0.0
          %351 = vmatprep.mubr.f32.mxu0 0.0
          %352 = vmatmul.mubr.f32.gmra.mxu0 %v285
          %v353 = vpop.f32.mrf.mxu0
          %v354 = vadd.f32 %v282, %v353
          %v355 = vpop.f32.mrf.mxu0
          %356 = vdwg.mxu0
          %358 = vrot.lane.b32.xlu0 %v354, 120
          %v359 = vpop.permute.xlu0 %358
          %361 = vrot.lane.b32.xlu0 %v354, 112
          %v362 = vpop.permute.xlu0 %361
          %364 = vrot.lane.b32.xlu0 %v354, 104
          %v365 = vpop.permute.xlu0 %364
          %v367 = vcombine.low %v354, %v362
          %v368 = vcombine.high %v354, %v362
          %v370 = vunpack.c.l.s4 1983009808
          %v371 = vunpack.c.0.s8 %v370
          %v372 = vlaneseq
          %v373 = vshrl.u32 %v372, 7
          %v374 = vsub.s32 %v371, %v373
          %v375 = vrot.slane %v367, %v374
          %v377 = vunpack.c.l.s4 1983009808
          %v378 = vunpack.c.0.s8 %v377
          %v379 = vlaneseq
          %v380 = vshrl.u32 %v379, 7
          %v381 = vsub.s32 %v378, %v380
          %v382 = vrot.slane %v368, %v381
          %v383 = vcombine.low %v359, %v365
          %v384 = vcombine.high %v359, %v365
          %v386 = vunpack.c.l.s4 1983009808
          %v387 = vunpack.c.0.s8 %v386
          %v388 = vlaneseq
          %v389 = vshrl.u32 %v388, 7
          %v390 = vsub.s32 %v387, %v389
          %v391 = vrot.slane %v383, %v390
          %v393 = vunpack.c.l.s4 1983009808
          %v394 = vunpack.c.0.s8 %v393
          %v395 = vlaneseq
          %v396 = vshrl.u32 %v395, 7
          %v397 = vsub.s32 %v394, %v396
          %v398 = vrot.slane %v384, %v397
          %v399 = vcombine.low %v375, %v391
          %v400 = vcombine.high %v375, %v391
          %v402 = vunpack.c.l.s4 1934713408
          %v403 = vunpack.c.0.s8 %v402
          %v404 = vlaneseq
          %v405 = vshrl.u32 %v404, 7
          %v406 = vsub.s32 %v403, %v405
          %v407 = vrot.slane %v399, %v406
          %v409 = vunpack.c.l.s4 1934713408
          %v410 = vunpack.c.0.s8 %v409
          %v411 = vlaneseq
          %v412 = vshrl.u32 %v411, 7
          %v413 = vsub.s32 %v410, %v412
          %v414 = vrot.slane %v400, %v413
          %v415 = vcombine.low %v382, %v398
          %v416 = vcombine.high %v382, %v398
          %v418 = vunpack.c.l.s4 1934713408
          %v419 = vunpack.c.0.s8 %v418
          %v420 = vlaneseq
          %v421 = vshrl.u32 %v420, 7
          %v422 = vsub.s32 %v419, %v421
          %v423 = vrot.slane %v415, %v422
          %v425 = vunpack.c.l.s4 1934713408
          %v426 = vunpack.c.0.s8 %v425
          %v427 = vlaneseq
          %v428 = vshrl.u32 %v427, 7
          %v429 = vsub.s32 %v426, %v428
          %v430 = vrot.slane %v416, %v429
          %v431 = vcombine.high %v407, 0.0
          %v432 = vcombine.high %v414, 0.0
          %v433 = vcombine.high %v423, 0.0
          %v434 = vcombine.high %v430, 0.0
          %v435 = vcombine.low %v407, %v414
          %v437 = vunpack.c.l.s4 1983009808
          %v438 = vunpack.c.0.s8 %v437
          %v439 = vlaneseq
          %v440 = vshrl.u32 %v439, 7
          %v441 = vsub.s32 %v438, %v440
          %v442 = vrot.slane %v435, %v441
          %v443 = vcombine.low %v431, %v432
          %v445 = vunpack.c.l.s4 1983009808
          %v446 = vunpack.c.0.s8 %v445
          %v447 = vlaneseq
          %v448 = vshrl.u32 %v447, 7
          %v449 = vsub.s32 %v446, %v448
          %v450 = vrot.slane %v443, %v449
          %v451 = vcombine.low %v423, %v430
          %v453 = vunpack.c.l.s4 1983009808
          %v454 = vunpack.c.0.s8 %v453
          %v455 = vlaneseq
          %v456 = vshrl.u32 %v455, 7
          %v457 = vsub.s32 %v454, %v456
          %v458 = vrot.slane %v451, %v457
          %v459 = vcombine.low %v433, %v434
          %v461 = vunpack.c.l.s4 1983009808
          %v462 = vunpack.c.0.s8 %v461
          %v463 = vlaneseq
          %v464 = vshrl.u32 %v463, 7
          %v465 = vsub.s32 %v462, %v464
          %v466 = vrot.slane %v459, %v465
          %v467 = vcombine.low %v442, %v450
          %v468 = vcombine.high %v442, %v450
          %v470 = vunpack.c.l.s4 1934713408
          %v471 = vunpack.c.0.s8 %v470
          %v472 = vlaneseq
          %v473 = vshrl.u32 %v472, 7
          %v474 = vsub.s32 %v471, %v473
          %v475 = vrot.slane %v467, %v474
          %v477 = vunpack.c.l.s4 1934713408
          %v478 = vunpack.c.0.s8 %v477
          %v479 = vlaneseq
          %v480 = vshrl.u32 %v479, 7
          %v481 = vsub.s32 %v478, %v480
          %v482 = vrot.slane %v468, %v481
          %v483 = vcombine.low %v458, %v466
          %v484 = vcombine.high %v458, %v466
          %v486 = vunpack.c.l.s4 1934713408
          %v487 = vunpack.c.0.s8 %v486
          %v488 = vlaneseq
          %v489 = vshrl.u32 %v488, 7
          %v490 = vsub.s32 %v487, %v489
          %v491 = vrot.slane %v483, %v490
          %v493 = vunpack.c.l.s4 1934713408
          %v494 = vunpack.c.0.s8 %v493
          %v495 = vlaneseq
          %v496 = vshrl.u32 %v495, 7
          %v497 = vsub.s32 %v494, %v496
          %v498 = vrot.slane %v484, %v497
          %v499 = vcombine.low %v475, %v491
          %v500 = vcombine.high %v475, %v491
          %v501 = vcombine.low %v482, %v498
          %v502 = vcombine.high %v482, %v498
          %vm503 = vcmask 64512
          %504 = vst.msk [vmem:[#allocation2] sm:$0xff] %vm503, %v499
          %505 = vst.msk [vmem:[#allocation2 + $0x8] sm:$0xff] %vm503, %v500
          %506 = vst.msk [vmem:[#allocation2 + $0x10] sm:$0xff] %vm503, %v501
          %507 = vst.msk [vmem:[#allocation2 + $0x18] sm:$0xff] %vm503, %v502
          %508 = vrot.lane.b32.xlu0 %v354, 96
          %v509 = vpop.permute.xlu0 %508
          %510 = vrot.lane.b32.xlu0 %v359, 96
          %v511 = vpop.permute.xlu0 %510
          %512 = vrot.lane.b32.xlu0 %v362, 96
          %v513 = vpop.permute.xlu0 %512
          %514 = vrot.lane.b32.xlu0 %v365, 96
          %v515 = vpop.permute.xlu0 %514
          %v520 = vcombine.low %v509, %v513
          %v521 = vcombine.high %v509, %v513
          %v523 = vunpack.c.l.s4 1983009808
          %v524 = vunpack.c.0.s8 %v523
          %v525 = vlaneseq
          %v526 = vshrl.u32 %v525, 7
          %v527 = vsub.s32 %v524, %v526
          %v528 = vrot.slane %v520, %v527
          %v530 = vunpack.c.l.s4 1983009808
          %v531 = vunpack.c.0.s8 %v530
          %v532 = vlaneseq
          %v533 = vshrl.u32 %v532, 7
          %v534 = vsub.s32 %v531, %v533
          %v535 = vrot.slane %v521, %v534
          %v536 = vcombine.low %v511, %v515
          %v537 = vcombine.high %v511, %v515
          %v539 = vunpack.c.l.s4 1983009808
          %v540 = vunpack.c.0.s8 %v539
          %v541 = vlaneseq
          %v542 = vshrl.u32 %v541, 7
          %v543 = vsub.s32 %v540, %v542
          %v544 = vrot.slane %v536, %v543
          %v546 = vunpack.c.l.s4 1983009808
          %v547 = vunpack.c.0.s8 %v546
          %v548 = vlaneseq
          %v549 = vshrl.u32 %v548, 7
          %v550 = vsub.s32 %v547, %v549
          %v551 = vrot.slane %v537, %v550
          %v552 = vcombine.low %v528, %v544
          %v553 = vcombine.high %v528, %v544
          %v555 = vunpack.c.l.s4 1934713408
          %v556 = vunpack.c.0.s8 %v555
          %v557 = vlaneseq
          %v558 = vshrl.u32 %v557, 7
          %v559 = vsub.s32 %v556, %v558
          %v560 = vrot.slane %v552, %v559
          %v562 = vunpack.c.l.s4 1934713408
          %v563 = vunpack.c.0.s8 %v562
          %v564 = vlaneseq
          %v565 = vshrl.u32 %v564, 7
          %v566 = vsub.s32 %v563, %v565
          %v567 = vrot.slane %v553, %v566
          %v568 = vcombine.low %v535, %v551
          %v569 = vcombine.high %v535, %v551
          %v571 = vunpack.c.l.s4 1934713408
          %v572 = vunpack.c.0.s8 %v571
          %v573 = vlaneseq
          %v574 = vshrl.u32 %v573, 7
          %v575 = vsub.s32 %v572, %v574
          %v576 = vrot.slane %v568, %v575
          %v578 = vunpack.c.l.s4 1934713408
          %v579 = vunpack.c.0.s8 %v578
          %v580 = vlaneseq
          %v581 = vshrl.u32 %v580, 7
          %v582 = vsub.s32 %v579, %v581
          %v583 = vrot.slane %v569, %v582
          %v584 = vcombine.high %v560, 0.0
          %v585 = vcombine.high %v567, 0.0
          %v586 = vcombine.high %v576, 0.0
          %v587 = vcombine.high %v583, 0.0
          %v588 = vcombine.low %v560, %v567
          %v590 = vunpack.c.l.s4 1983009808
          %v591 = vunpack.c.0.s8 %v590
          %v592 = vlaneseq
          %v593 = vshrl.u32 %v592, 7
          %v594 = vsub.s32 %v591, %v593
          %v595 = vrot.slane %v588, %v594
          %v596 = vcombine.low %v584, %v585
          %v598 = vunpack.c.l.s4 1983009808
          %v599 = vunpack.c.0.s8 %v598
          %v600 = vlaneseq
          %v601 = vshrl.u32 %v600, 7
          %v602 = vsub.s32 %v599, %v601
          %v603 = vrot.slane %v596, %v602
          %v604 = vcombine.low %v576, %v583
          %v606 = vunpack.c.l.s4 1983009808
          %v607 = vunpack.c.0.s8 %v606
          %v608 = vlaneseq
          %v609 = vshrl.u32 %v608, 7
          %v610 = vsub.s32 %v607, %v609
          %v611 = vrot.slane %v604, %v610
          %v612 = vcombine.low %v586, %v587
          %v614 = vunpack.c.l.s4 1983009808
          %v615 = vunpack.c.0.s8 %v614
          %v616 = vlaneseq
          %v617 = vshrl.u32 %v616, 7
          %v618 = vsub.s32 %v615, %v617
          %v619 = vrot.slane %v612, %v618
          %v620 = vcombine.low %v595, %v603
          %v621 = vcombine.high %v595, %v603
          %v623 = vunpack.c.l.s4 1934713408
          %v624 = vunpack.c.0.s8 %v623
          %v625 = vlaneseq
          %v626 = vshrl.u32 %v625, 7
          %v627 = vsub.s32 %v624, %v626
          %v628 = vrot.slane %v620, %v627
          %v630 = vunpack.c.l.s4 1934713408
          %v631 = vunpack.c.0.s8 %v630
          %v632 = vlaneseq
          %v633 = vshrl.u32 %v632, 7
          %v634 = vsub.s32 %v631, %v633
          %v635 = vrot.slane %v621, %v634
          %v636 = vcombine.low %v611, %v619
          %v637 = vcombine.high %v611, %v619
          %v639 = vunpack.c.l.s4 1934713408
          %v640 = vunpack.c.0.s8 %v639
          %v641 = vlaneseq
          %v642 = vshrl.u32 %v641, 7
          %v643 = vsub.s32 %v640, %v642
          %v644 = vrot.slane %v636, %v643
          %v646 = vunpack.c.l.s4 1934713408
          %v647 = vunpack.c.0.s8 %v646
          %v648 = vlaneseq
          %v649 = vshrl.u32 %v648, 7
          %v650 = vsub.s32 %v647, %v649
          %v651 = vrot.slane %v637, %v650
          %v652 = vcombine.low %v628, %v644
          %v653 = vcombine.high %v628, %v644
          %v654 = vcombine.low %v635, %v651
          %v655 = vcombine.high %v635, %v651
          %656 = vst.msk [vmem:[#allocation3] sm:$0xff] %vm503, %v652
          %657 = vst.msk [vmem:[#allocation3 + $0x8] sm:$0xff] %vm503, %v653
          %658 = vst.msk [vmem:[#allocation3 + $0x10] sm:$0xff] %vm503, %v654
          %659 = vst.msk [vmem:[#allocation3 + $0x18] sm:$0xff] %vm503, %v655
          %660 = vrot.lane.b32.xlu0 %v354, 64
          %v661 = vpop.permute.xlu0 %660
          %662 = vrot.lane.b32.xlu0 %v359, 64
          %v663 = vpop.permute.xlu0 %662
          %664 = vrot.lane.b32.xlu0 %v362, 64
          %v665 = vpop.permute.xlu0 %664
          %666 = vrot.lane.b32.xlu0 %v365, 64
          %v667 = vpop.permute.xlu0 %666
          %v672 = vcombine.low %v661, %v665
          %v673 = vcombine.high %v661, %v665
          %v675 = vunpack.c.l.s4 1983009808
          %v676 = vunpack.c.0.s8 %v675
          %v677 = vlaneseq
          %v678 = vshrl.u32 %v677, 7
          %v679 = vsub.s32 %v676, %v678
          %v680 = vrot.slane %v672, %v679
          %v682 = vunpack.c.l.s4 1983009808
          %v683 = vunpack.c.0.s8 %v682
          %v684 = vlaneseq
          %v685 = vshrl.u32 %v684, 7
          %v686 = vsub.s32 %v683, %v685
          %v687 = vrot.slane %v673, %v686
          %v688 = vcombine.low %v663, %v667
          %v689 = vcombine.high %v663, %v667
          %v691 = vunpack.c.l.s4 1983009808
          %v692 = vunpack.c.0.s8 %v691
          %v693 = vlaneseq
          %v694 = vshrl.u32 %v693, 7
          %v695 = vsub.s32 %v692, %v694
          %v696 = vrot.slane %v688, %v695
          %v698 = vunpack.c.l.s4 1983009808
          %v699 = vunpack.c.0.s8 %v698
          %v700 = vlaneseq
          %v701 = vshrl.u32 %v700, 7
          %v702 = vsub.s32 %v699, %v701
          %v703 = vrot.slane %v689, %v702
          %v704 = vcombine.low %v680, %v696
          %v705 = vcombine.high %v680, %v696
          %v707 = vunpack.c.l.s4 1934713408
          %v708 = vunpack.c.0.s8 %v707
          %v709 = vlaneseq
          %v710 = vshrl.u32 %v709, 7
          %v711 = vsub.s32 %v708, %v710
          %v712 = vrot.slane %v704, %v711
          %v714 = vunpack.c.l.s4 1934713408
          %v715 = vunpack.c.0.s8 %v714
          %v716 = vlaneseq
          %v717 = vshrl.u32 %v716, 7
          %v718 = vsub.s32 %v715, %v717
          %v719 = vrot.slane %v705, %v718
          %v720 = vcombine.low %v687, %v703
          %v721 = vcombine.high %v687, %v703
          %v723 = vunpack.c.l.s4 1934713408
          %v724 = vunpack.c.0.s8 %v723
          %v725 = vlaneseq
          %v726 = vshrl.u32 %v725, 7
          %v727 = vsub.s32 %v724, %v726
          %v728 = vrot.slane %v720, %v727
          %v730 = vunpack.c.l.s4 1934713408
          %v731 = vunpack.c.0.s8 %v730
          %v732 = vlaneseq
          %v733 = vshrl.u32 %v732, 7
          %v734 = vsub.s32 %v731, %v733
          %v735 = vrot.slane %v721, %v734
          %v736 = vcombine.high %v712, 0.0
          %v737 = vcombine.high %v719, 0.0
          %v738 = vcombine.high %v728, 0.0
          %v739 = vcombine.high %v735, 0.0
          %v740 = vcombine.low %v712, %v719
          %v742 = vunpack.c.l.s4 1983009808
          %v743 = vunpack.c.0.s8 %v742
          %v744 = vlaneseq
          %v745 = vshrl.u32 %v744, 7
          %v746 = vsub.s32 %v743, %v745
          %v747 = vrot.slane %v740, %v746
          %v748 = vcombine.low %v736, %v737
          %v750 = vunpack.c.l.s4 1983009808
          %v751 = vunpack.c.0.s8 %v750
          %v752 = vlaneseq
          %v753 = vshrl.u32 %v752, 7
          %v754 = vsub.s32 %v751, %v753
          %v755 = vrot.slane %v748, %v754
          %v756 = vcombine.low %v728, %v735
          %v758 = vunpack.c.l.s4 1983009808
          %v759 = vunpack.c.0.s8 %v758
          %v760 = vlaneseq
          %v761 = vshrl.u32 %v760, 7
          %v762 = vsub.s32 %v759, %v761
          %v763 = vrot.slane %v756, %v762
          %v764 = vcombine.low %v738, %v739
          %v766 = vunpack.c.l.s4 1983009808
          %v767 = vunpack.c.0.s8 %v766
          %v768 = vlaneseq
          %v769 = vshrl.u32 %v768, 7
          %v770 = vsub.s32 %v767, %v769
          %v771 = vrot.slane %v764, %v770
          %v772 = vcombine.low %v747, %v755
          %v773 = vcombine.high %v747, %v755
          %v775 = vunpack.c.l.s4 1934713408
          %v776 = vunpack.c.0.s8 %v775
          %v777 = vlaneseq
          %v778 = vshrl.u32 %v777, 7
          %v779 = vsub.s32 %v776, %v778
          %v780 = vrot.slane %v772, %v779
          %v782 = vunpack.c.l.s4 1934713408
          %v783 = vunpack.c.0.s8 %v782
          %v784 = vlaneseq
          %v785 = vshrl.u32 %v784, 7
          %v786 = vsub.s32 %v783, %v785
          %v787 = vrot.slane %v773, %v786
          %v788 = vcombine.low %v763, %v771
          %v789 = vcombine.high %v763, %v771
          %v791 = vunpack.c.l.s4 1934713408
          %v792 = vunpack.c.0.s8 %v791
          %v793 = vlaneseq
          %v794 = vshrl.u32 %v793, 7
          %v795 = vsub.s32 %v792, %v794
          %v796 = vrot.slane %v788, %v795
          %v798 = vunpack.c.l.s4 1934713408
          %v799 = vunpack.c.0.s8 %v798
          %v800 = vlaneseq
          %v801 = vshrl.u32 %v800, 7
          %v802 = vsub.s32 %v799, %v801
          %v803 = vrot.slane %v789, %v802
          %v804 = vcombine.low %v780, %v796
          %v805 = vcombine.high %v780, %v796
          %v806 = vcombine.low %v787, %v803
          %v807 = vcombine.high %v787, %v803
          %808 = vst.msk [vmem:[#allocation4] sm:$0xff] %vm503, %v804
          %809 = vst.msk [vmem:[#allocation4 + $0x8] sm:$0xff] %vm503, %v805
          %810 = vst.msk [vmem:[#allocation4 + $0x10] sm:$0xff] %vm503, %v806
          %811 = vst.msk [vmem:[#allocation4 + $0x18] sm:$0xff] %vm503, %v807
        $region56: #{tpu_custom_call.1} parent=35 // pred_fallthru
          _
        %s812 = smul.u32 %s28, 8
        %s813 = scalar_lea.vmem [#allocation2], %s812
        %v814 = vld [vmem:[%s813] sm:$0xff]
        %v815 = vld [vmem:[%s813 + $0x8] sm:$0xff]
        %v816 = vld [vmem:[%s813 + $0x10] sm:$0xff]
        %v817 = vld [vmem:[%s813 + $0x18] sm:$0xff]
        %v818 = vld [vmem:[#allocation3] sm:$0xff]
        %v819 = vld [vmem:[#allocation3 + $0x8] sm:$0xff]
        %v820 = vld [vmem:[#allocation3 + $0x10] sm:$0xff]
        %v821 = vld [vmem:[#allocation3 + $0x18] sm:$0xff]
        %vm822 = vcmask 64512
        %v824 = vsel %vm822, %v814, 0
        %v827 = vsel %vm822, %v818, 0
        %829 = vmatprep.subr.mxu0 0.0
        %830 = vmatpush1.xpose.msra.mxu0 0.0
        %831 = vmatprep.subr.mxu0 0.0
        %832 = vmatpush1.xpose.msra.mxu0 0.0
        %833 = vmatprep.subr.mxu0 0.0
        %834 = vmatpush1.xpose.msra.mxu0 0.0
        %835 = vmatprep.subr.mxu0 0.0
        %836 = vmatpush1.xpose.msra.mxu0 0.0
        %837 = vmatprep.subr.mxu0 0.0
        %838 = vmatpush1.xpose.msra.mxu0 0.0
        %839 = vmatprep.subr.mxu0 0.0
        %840 = vmatpush1.xpose.msra.mxu0 0.0
        %841 = vmatprep.subr.mxu0 0.0
        %842 = vmatpush1.xpose.msra.mxu0 0.0
        %843 = vmatprep.subr.mxu0 0.0
        %844 = vmatpush1.xpose.msra.mxu0 0.0
        %845 = vmatprep.subr.mxu0 0.0
        %846 = vmatpush1.xpose.msra.mxu0 0.0
        %847 = vmatprep.subr.mxu0 0.0
        %848 = vmatpush1.xpose.msra.mxu0 0.0
        %849 = vmatprep.subr.mxu0 0.0
        %850 = vmatpush1.xpose.msra.mxu0 0.0
        %851 = vmatprep.subr.mxu0 0.0
        %852 = vmatpush1.xpose.msra.mxu0 0.0
        %853 = vmatprep.subr.mxu0 0.0
        %854 = vmatpush1.xpose.msra.mxu0 0.0
        %855 = vmatprep.subr.mxu0 0.0
        %856 = vmatpush1.xpose.msra.mxu0 0.0
        %857 = vmatprep.subr.mxu0 0.0
        %858 = vmatpush1.xpose.msra.mxu0 0.0
        %859 = vmatprep.subr.mxu0 0.0
        %860 = vmatpush1.xpose.msra.mxu0 %v827
        %861 = vmatprep.subr.mxu0 0.0
        %862 = vmatpush2.xpose.msra.mxu0 0.0
        %863 = vmatprep.subr.mxu0 0.0
        %864 = vmatpush2.xpose.msra.mxu0 0.0
        %865 = vmatprep.subr.mxu0 0.0
        %866 = vmatpush2.xpose.msra.mxu0 0.0
        %867 = vmatprep.subr.mxu0 0.0
        %868 = vmatpush2.xpose.msra.mxu0 0.0
        %869 = vmatprep.subr.mxu0 0.0
        %870 = vmatpush2.xpose.msra.mxu0 0.0
        %871 = vmatprep.subr.mxu0 0.0
        %872 = vmatpush2.xpose.msra.mxu0 0.0
        %873 = vmatprep.subr.mxu0 0.0
        %874 = vmatpush2.xpose.msra.mxu0 0.0
        %875 = vmatprep.subr.mxu0 0.0
        %876 = vmatpush2.xpose.msra.mxu0 0.0
        %877 = vmatprep.subr.mxu0 0.0
        %878 = vmatpush2.xpose.msra.mxu0 0.0
        %879 = vmatprep.subr.mxu0 0.0
        %880 = vmatpush2.xpose.msra.mxu0 0.0
        %881 = vmatprep.subr.mxu0 0.0
        %882 = vmatpush2.xpose.msra.mxu0 0.0
        %883 = vmatprep.subr.mxu0 0.0
        %884 = vmatpush2.xpose.msra.mxu0 0.0
        %885 = vmatprep.subr.mxu0 0.0
        %886 = vmatpush2.xpose.msra.mxu0 0.0
        %887 = vmatprep.subr.mxu0 0.0
        %888 = vmatpush2.xpose.msra.mxu0 0.0
        %889 = vmatprep.subr.mxu0 0.0
        %890 = vmatpush2.xpose.msra.mxu0 0.0
        %891 = vmatprep.subr.mxu0 0.0
        %892 = vmatpush2.xpose.msra.mxu0 0.0
        %893 = vmatprep.mubr.f32.mxu0 0.0
        %894 = vmatmul.mubr.f32.gmra.mxu0 %v824
        %v895 = vpop.f32.mrf.mxu0
        %v896 = vadd.f32 0.0, %v895
        %v897 = vpop.f32.mrf.mxu0
        %898 = vdwg.mxu0
        %v900 = vsel %vm822, %v815, 0
        %v903 = vsel %vm822, %v819, 0
        %905 = vmatprep.subr.mxu0 0.0
        %906 = vmatpush1.xpose.msra.mxu0 0.0
        %907 = vmatprep.subr.mxu0 0.0
        %908 = vmatpush1.xpose.msra.mxu0 0.0
        %909 = vmatprep.subr.mxu0 0.0
        %910 = vmatpush1.xpose.msra.mxu0 0.0
        %911 = vmatprep.subr.mxu0 0.0
        %912 = vmatpush1.xpose.msra.mxu0 0.0
        %913 = vmatprep.subr.mxu0 0.0
        %914 = vmatpush1.xpose.msra.mxu0 0.0
        %915 = vmatprep.subr.mxu0 0.0
        %916 = vmatpush1.xpose.msra.mxu0 0.0
        %917 = vmatprep.subr.mxu0 0.0
        %918 = vmatpush1.xpose.msra.mxu0 0.0
        %919 = vmatprep.subr.mxu0 0.0
        %920 = vmatpush1.xpose.msra.mxu0 0.0
        %921 = vmatprep.subr.mxu0 0.0
        %922 = vmatpush1.xpose.msra.mxu0 0.0
        %923 = vmatprep.subr.mxu0 0.0
        %924 = vmatpush1.xpose.msra.mxu0 0.0
        %925 = vmatprep.subr.mxu0 0.0
        %926 = vmatpush1.xpose.msra.mxu0 0.0
        %927 = vmatprep.subr.mxu0 0.0
        %928 = vmatpush1.xpose.msra.mxu0 0.0
        %929 = vmatprep.subr.mxu0 0.0
        %930 = vmatpush1.xpose.msra.mxu0 0.0
        %931 = vmatprep.subr.mxu0 0.0
        %932 = vmatpush1.xpose.msra.mxu0 0.0
        %933 = vmatprep.subr.mxu0 0.0
        %934 = vmatpush1.xpose.msra.mxu0 0.0
        %935 = vmatprep.subr.mxu0 0.0
        %936 = vmatpush1.xpose.msra.mxu0 %v903
        %937 = vmatprep.subr.mxu0 0.0
        %938 = vmatpush2.xpose.msra.mxu0 0.0
        %939 = vmatprep.subr.mxu0 0.0
        %940 = vmatpush2.xpose.msra.mxu0 0.0
        %941 = vmatprep.subr.mxu0 0.0
        %942 = vmatpush2.xpose.msra.mxu0 0.0
        %943 = vmatprep.subr.mxu0 0.0
        %944 = vmatpush2.xpose.msra.mxu0 0.0
        %945 = vmatprep.subr.mxu0 0.0
        %946 = vmatpush2.xpose.msra.mxu0 0.0
        %947 = vmatprep.subr.mxu0 0.0
        %948 = vmatpush2.xpose.msra.mxu0 0.0
        %949 = vmatprep.subr.mxu0 0.0
        %950 = vmatpush2.xpose.msra.mxu0 0.0
        %951 = vmatprep.subr.mxu0 0.0
        %952 = vmatpush2.xpose.msra.mxu0 0.0
        %953 = vmatprep.subr.mxu0 0.0
        %954 = vmatpush2.xpose.msra.mxu0 0.0
        %955 = vmatprep.subr.mxu0 0.0
        %956 = vmatpush2.xpose.msra.mxu0 0.0
        %957 = vmatprep.subr.mxu0 0.0
        %958 = vmatpush2.xpose.msra.mxu0 0.0
        %959 = vmatprep.subr.mxu0 0.0
        %960 = vmatpush2.xpose.msra.mxu0 0.0
        %961 = vmatprep.subr.mxu0 0.0
        %962 = vmatpush2.xpose.msra.mxu0 0.0
        %963 = vmatprep.subr.mxu0 0.0
        %964 = vmatpush2.xpose.msra.mxu0 0.0
        %965 = vmatprep.subr.mxu0 0.0
        %966 = vmatpush2.xpose.msra.mxu0 0.0
        %967 = vmatprep.subr.mxu0 0.0
        %968 = vmatpush2.xpose.msra.mxu0 0.0
        %969 = vmatprep.mubr.f32.mxu0 0.0
        %970 = vmatmul.mubr.f32.gmra.mxu0 %v900
        %v971 = vpop.f32.mrf.mxu0
        %v972 = vadd.f32 0.0, %v971
        %v973 = vpop.f32.mrf.mxu0
        %974 = vdwg.mxu0
        %v976 = vsel %vm822, %v816, 0
        %v979 = vsel %vm822, %v820, 0
        %981 = vmatprep.subr.mxu0 0.0
        %982 = vmatpush1.xpose.msra.mxu0 0.0
        %983 = vmatprep.subr.mxu0 0.0
        %984 = vmatpush1.xpose.msra.mxu0 0.0
        %985 = vmatprep.subr.mxu0 0.0
        %986 = vmatpush1.xpose.msra.mxu0 0.0
        %987 = vmatprep.subr.mxu0 0.0
        %988 = vmatpush1.xpose.msra.mxu0 0.0
        %989 = vmatprep.subr.mxu0 0.0
        %990 = vmatpush1.xpose.msra.mxu0 0.0
        %991 = vmatprep.subr.mxu0 0.0
        %992 = vmatpush1.xpose.msra.mxu0 0.0
        %993 = vmatprep.subr.mxu0 0.0
        %994 = vmatpush1.xpose.msra.mxu0 0.0
        %995 = vmatprep.subr.mxu0 0.0
        %996 = vmatpush1.xpose.msra.mxu0 0.0
        %997 = vmatprep.subr.mxu0 0.0
        %998 = vmatpush1.xpose.msra.mxu0 0.0
        %999 = vmatprep.subr.mxu0 0.0
        %1000 = vmatpush1.xpose.msra.mxu0 0.0
        %1001 = vmatprep.subr.mxu0 0.0
        %1002 = vmatpush1.xpose.msra.mxu0 0.0
        %1003 = vmatprep.subr.mxu0 0.0
        %1004 = vmatpush1.xpose.msra.mxu0 0.0
        %1005 = vmatprep.subr.mxu0 0.0
        %1006 = vmatpush1.xpose.msra.mxu0 0.0
        %1007 = vmatprep.subr.mxu0 0.0
        %1008 = vmatpush1.xpose.msra.mxu0 0.0
        %1009 = vmatprep.subr.mxu0 0.0
        %1010 = vmatpush1.xpose.msra.mxu0 0.0
        %1011 = vmatprep.subr.mxu0 0.0
        %1012 = vmatpush1.xpose.msra.mxu0 %v979
        %1013 = vmatprep.subr.mxu0 0.0
        %1014 = vmatpush2.xpose.msra.mxu0 0.0
        %1015 = vmatprep.subr.mxu0 0.0
        %1016 = vmatpush2.xpose.msra.mxu0 0.0
        %1017 = vmatprep.subr.mxu0 0.0
        %1018 = vmatpush2.xpose.msra.mxu0 0.0
        %1019 = vmatprep.subr.mxu0 0.0
        %1020 = vmatpush2.xpose.msra.mxu0 0.0
        %1021 = vmatprep.subr.mxu0 0.0
        %1022 = vmatpush2.xpose.msra.mxu0 0.0
        %1023 = vmatprep.subr.mxu0 0.0
        %1024 = vmatpush2.xpose.msra.mxu0 0.0
        %1025 = vmatprep.subr.mxu0 0.0
        %1026 = vmatpush2.xpose.msra.mxu0 0.0
        %1027 = vmatprep.subr.mxu0 0.0
        %1028 = vmatpush2.xpose.msra.mxu0 0.0
        %1029 = vmatprep.subr.mxu0 0.0
        %1030 = vmatpush2.xpose.msra.mxu0 0.0
        %1031 = vmatprep.subr.mxu0 0.0
        %1032 = vmatpush2.xpose.msra.mxu0 0.0
        %1033 = vmatprep.subr.mxu0 0.0
        %1034 = vmatpush2.xpose.msra.mxu0 0.0
        %1035 = vmatprep.subr.mxu0 0.0
        %1036 = vmatpush2.xpose.msra.mxu0 0.0
        %1037 = vmatprep.subr.mxu0 0.0
        %1038 = vmatpush2.xpose.msra.mxu0 0.0
        %1039 = vmatprep.subr.mxu0 0.0
        %1040 = vmatpush2.xpose.msra.mxu0 0.0
        %1041 = vmatprep.subr.mxu0 0.0
        %1042 = vmatpush2.xpose.msra.mxu0 0.0
        %1043 = vmatprep.subr.mxu0 0.0
        %1044 = vmatpush2.xpose.msra.mxu0 0.0
        %1045 = vmatprep.mubr.f32.mxu0 0.0
        %1046 = vmatmul.mubr.f32.gmra.mxu0 %v976
        %v1047 = vpop.f32.mrf.mxu0
        %v1048 = vadd.f32 0.0, %v1047
        %v1049 = vpop.f32.mrf.mxu0
        %1050 = vdwg.mxu0
        %v1052 = vsel %vm822, %v817, 0
        %v1055 = vsel %vm822, %v821, 0
        %1057 = vmatprep.subr.mxu0 0.0
        %1058 = vmatpush1.xpose.msra.mxu0 0.0
        %1059 = vmatprep.subr.mxu0 0.0
        %1060 = vmatpush1.xpose.msra.mxu0 0.0
        %1061 = vmatprep.subr.mxu0 0.0
        %1062 = vmatpush1.xpose.msra.mxu0 0.0
        %1063 = vmatprep.subr.mxu0 0.0
        %1064 = vmatpush1.xpose.msra.mxu0 0.0
        %1065 = vmatprep.subr.mxu0 0.0
        %1066 = vmatpush1.xpose.msra.mxu0 0.0
        %1067 = vmatprep.subr.mxu0 0.0
        %1068 = vmatpush1.xpose.msra.mxu0 0.0
        %1069 = vmatprep.subr.mxu0 0.0
        %1070 = vmatpush1.xpose.msra.mxu0 0.0
        %1071 = vmatprep.subr.mxu0 0.0
        %1072 = vmatpush1.xpose.msra.mxu0 0.0
        %1073 = vmatprep.subr.mxu0 0.0
        %1074 = vmatpush1.xpose.msra.mxu0 0.0
        %1075 = vmatprep.subr.mxu0 0.0
        %1076 = vmatpush1.xpose.msra.mxu0 0.0
        %1077 = vmatprep.subr.mxu0 0.0
        %1078 = vmatpush1.xpose.msra.mxu0 0.0
        %1079 = vmatprep.subr.mxu0 0.0
        %1080 = vmatpush1.xpose.msra.mxu0 0.0
        %1081 = vmatprep.subr.mxu0 0.0
        %1082 = vmatpush1.xpose.msra.mxu0 0.0
        %1083 = vmatprep.subr.mxu0 0.0
        %1084 = vmatpush1.xpose.msra.mxu0 0.0
        %1085 = vmatprep.subr.mxu0 0.0
        %1086 = vmatpush1.xpose.msra.mxu0 0.0
        %1087 = vmatprep.subr.mxu0 0.0
        %1088 = vmatpush1.xpose.msra.mxu0 %v1055
        %1089 = vmatprep.subr.mxu0 0.0
        %1090 = vmatpush2.xpose.msra.mxu0 0.0
        %1091 = vmatprep.subr.mxu0 0.0
        %1092 = vmatpush2.xpose.msra.mxu0 0.0
        %1093 = vmatprep.subr.mxu0 0.0
        %1094 = vmatpush2.xpose.msra.mxu0 0.0
        %1095 = vmatprep.subr.mxu0 0.0
        %1096 = vmatpush2.xpose.msra.mxu0 0.0
        %1097 = vmatprep.subr.mxu0 0.0
        %1098 = vmatpush2.xpose.msra.mxu0 0.0
        %1099 = vmatprep.subr.mxu0 0.0
        %1100 = vmatpush2.xpose.msra.mxu0 0.0
        %1101 = vmatprep.subr.mxu0 0.0
        %1102 = vmatpush2.xpose.msra.mxu0 0.0
        %1103 = vmatprep.subr.mxu0 0.0
        %1104 = vmatpush2.xpose.msra.mxu0 0.0
        %1105 = vmatprep.subr.mxu0 0.0
        %1106 = vmatpush2.xpose.msra.mxu0 0.0
        %1107 = vmatprep.subr.mxu0 0.0
        %1108 = vmatpush2.xpose.msra.mxu0 0.0
        %1109 = vmatprep.subr.mxu0 0.0
        %1110 = vmatpush2.xpose.msra.mxu0 0.0
        %1111 = vmatprep.subr.mxu0 0.0
        %1112 = vmatpush2.xpose.msra.mxu0 0.0
        %1113 = vmatprep.subr.mxu0 0.0
        %1114 = vmatpush2.xpose.msra.mxu0 0.0
        %1115 = vmatprep.subr.mxu0 0.0
        %1116 = vmatpush2.xpose.msra.mxu0 0.0
        %1117 = vmatprep.subr.mxu0 0.0
        %1118 = vmatpush2.xpose.msra.mxu0 0.0
        %1119 = vmatprep.subr.mxu0 0.0
        %1120 = vmatpush2.xpose.msra.mxu0 0.0
        %1121 = vmatprep.mubr.f32.mxu0 0.0
        %1122 = vmatmul.mubr.f32.gmra.mxu0 %v1052
        %v1123 = vpop.f32.mrf.mxu0
        %v1124 = vadd.f32 0.0, %v1123
        %v1125 = vpop.f32.mrf.mxu0
        %1126 = vdwg.mxu0
        %v1127 = vsel %vm822, %v896, -inf
        %1128 = vmax.xlane.f32.xlu0 %v1127
        %v1129 = vpop.xlane.xlu0 %1128
        %v1130 = vsel %vm822, %v972, -inf
        %1131 = vmax.xlane.f32.xlu0 %v1130
        %v1132 = vpop.xlane.xlu0 %1131
        %v1133 = vsel %vm822, %v1048, -inf
        %1134 = vmax.xlane.f32.xlu0 %v1133
        %v1135 = vpop.xlane.xlu0 %1134
        %v1136 = vsel %vm822, %v1124, -inf
        %1137 = vmax.xlane.f32.xlu0 %v1136
        %v1138 = vpop.xlane.xlu0 %1137
        %v1139 = vsub.f32 %v896, %v1129
        %v1140 = vsub.f32 %v972, %v1132
        %v1141 = vsub.f32 %v1048, %v1135
        %v1142 = vsub.f32 %v1124, %v1138
        %v1143 = vmul.f32 %v1139, 1.442695
        %v1144 = vpow.pop %v1143
        %v1145 = vmul.f32 %v1140, 1.442695
        %v1146 = vpow.pop %v1145
        %v1147 = vmul.f32 %v1141, 1.442695
        %v1148 = vpow.pop %v1147
        %v1149 = vmul.f32 %v1142, 1.442695
        %v1150 = vpow.pop %v1149
        %v1151 = vsel %vm822, %v1144, 0.0
        %1152 = vadd.xlane.f32.xlu0 %v1151
        %v1153 = vpop.xlane.xlu0 %1152
        %v1154 = vsel %vm822, %v1146, 0.0
        %1155 = vadd.xlane.f32.xlu0 %v1154
        %v1156 = vpop.xlane.xlu0 %1155
        %v1157 = vsel %vm822, %v1148, 0.0
        %1158 = vadd.xlane.f32.xlu0 %v1157
        %v1159 = vpop.xlane.xlu0 %1158
        %v1160 = vsel %vm822, %v1150, 0.0
        %1161 = vadd.xlane.f32.xlu0 %v1160
        %v1162 = vpop.xlane.xlu0 %1161
        %v1163 = vld [vmem:[#allocation4] sm:$0xff]
        %v1164 = vld [vmem:[#allocation4 + $0x8] sm:$0xff]
        %v1165 = vld [vmem:[#allocation4 + $0x10] sm:$0xff]
        %v1166 = vld [vmem:[#allocation4 + $0x18] sm:$0xff]
        %v1168 = vsel %vm822, %v1144, 0
        %1170 = vmatprep.subr.mxu0 0.0
        %1171 = vmatpush1.msra.mxu0 0.0
        %1172 = vmatprep.subr.mxu0 0.0
        %1173 = vmatpush1.msra.mxu0 0.0
        %1174 = vmatprep.subr.mxu0 0.0
        %1175 = vmatpush1.msra.mxu0 0.0
        %1176 = vmatprep.subr.mxu0 0.0
        %1177 = vmatpush1.msra.mxu0 0.0
        %1178 = vmatprep.subr.mxu0 0.0
        %1179 = vmatpush1.msra.mxu0 0.0
        %1180 = vmatprep.subr.mxu0 0.0
        %1181 = vmatpush1.msra.mxu0 0.0
        %1182 = vmatprep.subr.mxu0 0.0
        %1183 = vmatpush1.msra.mxu0 0.0
        %1184 = vmatprep.subr.mxu0 0.0
        %1185 = vmatpush1.msra.mxu0 0.0
        %1186 = vmatprep.subr.mxu0 0.0
        %1187 = vmatpush1.msra.mxu0 0.0
        %1188 = vmatprep.subr.mxu0 0.0
        %1189 = vmatpush1.msra.mxu0 0.0
        %1190 = vmatprep.subr.mxu0 0.0
        %1191 = vmatpush1.msra.mxu0 0.0
        %1192 = vmatprep.subr.mxu0 0.0
        %1193 = vmatpush1.msra.mxu0 0.0
        %1194 = vmatprep.subr.mxu0 0.0
        %1195 = vmatpush1.msra.mxu0 0.0
        %1196 = vmatprep.subr.mxu0 0.0
        %1197 = vmatpush1.msra.mxu0 0.0
        %1198 = vmatprep.subr.mxu0 0.0
        %1199 = vmatpush1.msra.mxu0 0.0
        %1200 = vmatprep.subr.mxu0 0.0
        %1201 = vmatpush1.msra.mxu0 %v1163
        %1202 = vmatprep.subr.mxu0 0.0
        %1203 = vmatpush2.msra.mxu0 0.0
        %1204 = vmatprep.subr.mxu0 0.0
        %1205 = vmatpush2.msra.mxu0 0.0
        %1206 = vmatprep.subr.mxu0 0.0
        %1207 = vmatpush2.msra.mxu0 0.0
        %1208 = vmatprep.subr.mxu0 0.0
        %1209 = vmatpush2.msra.mxu0 0.0
        %1210 = vmatprep.subr.mxu0 0.0
        %1211 = vmatpush2.msra.mxu0 0.0
        %1212 = vmatprep.subr.mxu0 0.0
        %1213 = vmatpush2.msra.mxu0 0.0
        %1214 = vmatprep.subr.mxu0 0.0
        %1215 = vmatpush2.msra.mxu0 0.0
        %1216 = vmatprep.subr.mxu0 0.0
        %1217 = vmatpush2.msra.mxu0 0.0
        %1218 = vmatprep.subr.mxu0 0.0
        %1219 = vmatpush2.msra.mxu0 0.0
        %1220 = vmatprep.subr.mxu0 0.0
        %1221 = vmatpush2.msra.mxu0 0.0
        %1222 = vmatprep.subr.mxu0 0.0
        %1223 = vmatpush2.msra.mxu0 0.0
        %1224 = vmatprep.subr.mxu0 0.0
        %1225 = vmatpush2.msra.mxu0 0.0
        %1226 = vmatprep.subr.mxu0 0.0
        %1227 = vmatpush2.msra.mxu0 0.0
        %1228 = vmatprep.subr.mxu0 0.0
        %1229 = vmatpush2.msra.mxu0 0.0
        %1230 = vmatprep.subr.mxu0 0.0
        %1231 = vmatpush2.msra.mxu0 0.0
        %1232 = vmatprep.subr.mxu0 0.0
        %1233 = vmatpush2.msra.mxu0 0.0
        %1234 = vmatprep.mubr.f32.mxu0 0.0
        %1235 = vmatmul.mubr.f32.gmra.mxu0 %v1168
        %v1236 = vpop.f32.mrf.mxu0
        %v1237 = vadd.f32 0.0, %v1236
        %v1238 = vpop.f32.mrf.mxu0
        %1239 = vdwg.mxu0
        %v1241 = vsel %vm822, %v1146, 0
        %1243 = vmatprep.subr.mxu0 0.0
        %1244 = vmatpush1.msra.mxu0 0.0
        %1245 = vmatprep.subr.mxu0 0.0
        %1246 = vmatpush1.msra.mxu0 0.0
        %1247 = vmatprep.subr.mxu0 0.0
        %1248 = vmatpush1.msra.mxu0 0.0
        %1249 = vmatprep.subr.mxu0 0.0
        %1250 = vmatpush1.msra.mxu0 0.0
        %1251 = vmatprep.subr.mxu0 0.0
        %1252 = vmatpush1.msra.mxu0 0.0
        %1253 = vmatprep.subr.mxu0 0.0
        %1254 = vmatpush1.msra.mxu0 0.0
        %1255 = vmatprep.subr.mxu0 0.0
        %1256 = vmatpush1.msra.mxu0 0.0
        %1257 = vmatprep.subr.mxu0 0.0
        %1258 = vmatpush1.msra.mxu0 0.0
        %1259 = vmatprep.subr.mxu0 0.0
        %1260 = vmatpush1.msra.mxu0 0.0
        %1261 = vmatprep.subr.mxu0 0.0
        %1262 = vmatpush1.msra.mxu0 0.0
        %1263 = vmatprep.subr.mxu0 0.0
        %1264 = vmatpush1.msra.mxu0 0.0
        %1265 = vmatprep.subr.mxu0 0.0
        %1266 = vmatpush1.msra.mxu0 0.0
        %1267 = vmatprep.subr.mxu0 0.0
        %1268 = vmatpush1.msra.mxu0 0.0
        %1269 = vmatprep.subr.mxu0 0.0
        %1270 = vmatpush1.msra.mxu0 0.0
        %1271 = vmatprep.subr.mxu0 0.0
        %1272 = vmatpush1.msra.mxu0 0.0
        %1273 = vmatprep.subr.mxu0 0.0
        %1274 = vmatpush1.msra.mxu0 %v1164
        %1275 = vmatprep.subr.mxu0 0.0
        %1276 = vmatpush2.msra.mxu0 0.0
        %1277 = vmatprep.subr.mxu0 0.0
        %1278 = vmatpush2.msra.mxu0 0.0
        %1279 = vmatprep.subr.mxu0 0.0
        %1280 = vmatpush2.msra.mxu0 0.0
        %1281 = vmatprep.subr.mxu0 0.0
        %1282 = vmatpush2.msra.mxu0 0.0
        %1283 = vmatprep.subr.mxu0 0.0
        %1284 = vmatpush2.msra.mxu0 0.0
        %1285 = vmatprep.subr.mxu0 0.0
        %1286 = vmatpush2.msra.mxu0 0.0
        %1287 = vmatprep.subr.mxu0 0.0
        %1288 = vmatpush2.msra.mxu0 0.0
        %1289 = vmatprep.subr.mxu0 0.0
        %1290 = vmatpush2.msra.mxu0 0.0
        %1291 = vmatprep.subr.mxu0 0.0
        %1292 = vmatpush2.msra.mxu0 0.0
        %1293 = vmatprep.subr.mxu0 0.0
        %1294 = vmatpush2.msra.mxu0 0.0
        %1295 = vmatprep.subr.mxu0 0.0
        %1296 = vmatpush2.msra.mxu0 0.0
        %1297 = vmatprep.subr.mxu0 0.0
        %1298 = vmatpush2.msra.mxu0 0.0
        %1299 = vmatprep.subr.mxu0 0.0
        %1300 = vmatpush2.msra.mxu0 0.0
        %1301 = vmatprep.subr.mxu0 0.0
        %1302 = vmatpush2.msra.mxu0 0.0
        %1303 = vmatprep.subr.mxu0 0.0
        %1304 = vmatpush2.msra.mxu0 0.0
        %1305 = vmatprep.subr.mxu0 0.0
        %1306 = vmatpush2.msra.mxu0 0.0
        %1307 = vmatprep.mubr.f32.mxu0 0.0
        %1308 = vmatmul.mubr.f32.gmra.mxu0 %v1241
        %v1309 = vpop.f32.mrf.mxu0
        %v1310 = vadd.f32 0.0, %v1309
        %v1311 = vpop.f32.mrf.mxu0
        %1312 = vdwg.mxu0
        %v1314 = vsel %vm822, %v1148, 0
        %1316 = vmatprep.subr.mxu0 0.0
        %1317 = vmatpush1.msra.mxu0 0.0
        %1318 = vmatprep.subr.mxu0 0.0
        %1319 = vmatpush1.msra.mxu0 0.0
        %1320 = vmatprep.subr.mxu0 0.0
        %1321 = vmatpush1.msra.mxu0 0.0
        %1322 = vmatprep.subr.mxu0 0.0
        %1323 = vmatpush1.msra.mxu0 0.0
        %1324 = vmatprep.subr.mxu0 0.0
        %1325 = vmatpush1.msra.mxu0 0.0
        %1326 = vmatprep.subr.mxu0 0.0
        %1327 = vmatpush1.msra.mxu0 0.0
        %1328 = vmatprep.subr.mxu0 0.0
        %1329 = vmatpush1.msra.mxu0 0.0
        %1330 = vmatprep.subr.mxu0 0.0
        %1331 = vmatpush1.msra.mxu0 0.0
        %1332 = vmatprep.subr.mxu0 0.0
        %1333 = vmatpush1.msra.mxu0 0.0
        %1334 = vmatprep.subr.mxu0 0.0
        %1335 = vmatpush1.msra.mxu0 0.0
        %1336 = vmatprep.subr.mxu0 0.0
        %1337 = vmatpush1.msra.mxu0 0.0
        %1338 = vmatprep.subr.mxu0 0.0
        %1339 = vmatpush1.msra.mxu0 0.0
        %1340 = vmatprep.subr.mxu0 0.0
        %1341 = vmatpush1.msra.mxu0 0.0
        %1342 = vmatprep.subr.mxu0 0.0
        %1343 = vmatpush1.msra.mxu0 0.0
        %1344 = vmatprep.subr.mxu0 0.0
        %1345 = vmatpush1.msra.mxu0 0.0
        %1346 = vmatprep.subr.mxu0 0.0
        %1347 = vmatpush1.msra.mxu0 %v1165
        %1348 = vmatprep.subr.mxu0 0.0
        %1349 = vmatpush2.msra.mxu0 0.0
        %1350 = vmatprep.subr.mxu0 0.0
        %1351 = vmatpush2.msra.mxu0 0.0
        %1352 = vmatprep.subr.mxu0 0.0
        %1353 = vmatpush2.msra.mxu0 0.0
        %1354 = vmatprep.subr.mxu0 0.0
        %1355 = vmatpush2.msra.mxu0 0.0
        %1356 = vmatprep.subr.mxu0 0.0
        %1357 = vmatpush2.msra.mxu0 0.0
        %1358 = vmatprep.subr.mxu0 0.0
        %1359 = vmatpush2.msra.mxu0 0.0
        %1360 = vmatprep.subr.mxu0 0.0
        %1361 = vmatpush2.msra.mxu0 0.0
        %1362 = vmatprep.subr.mxu0 0.0
        %1363 = vmatpush2.msra.mxu0 0.0
        %1364 = vmatprep.subr.mxu0 0.0
        %1365 = vmatpush2.msra.mxu0 0.0
        %1366 = vmatprep.subr.mxu0 0.0
        %1367 = vmatpush2.msra.mxu0 0.0
        %1368 = vmatprep.subr.mxu0 0.0
        %1369 = vmatpush2.msra.mxu0 0.0
        %1370 = vmatprep.subr.mxu0 0.0
        %1371 = vmatpush2.msra.mxu0 0.0
        %1372 = vmatprep.subr.mxu0 0.0
        %1373 = vmatpush2.msra.mxu0 0.0
        %1374 = vmatprep.subr.mxu0 0.0
        %1375 = vmatpush2.msra.mxu0 0.0
        %1376 = vmatprep.subr.mxu0 0.0
        %1377 = vmatpush2.msra.mxu0 0.0
        %1378 = vmatprep.subr.mxu0 0.0
        %1379 = vmatpush2.msra.mxu0 0.0
        %1380 = vmatprep.mubr.f32.mxu0 0.0
        %1381 = vmatmul.mubr.f32.gmra.mxu0 %v1314
        %v1382 = vpop.f32.mrf.mxu0
        %v1383 = vadd.f32 0.0, %v1382
        %v1384 = vpop.f32.mrf.mxu0
        %1385 = vdwg.mxu0
        %v1387 = vsel %vm822, %v1150, 0
        %1389 = vmatprep.subr.mxu0 0.0
        %1390 = vmatpush1.msra.mxu0 0.0
        %1391 = vmatprep.subr.mxu0 0.0
        %1392 = vmatpush1.msra.mxu0 0.0
        %1393 = vmatprep.subr.mxu0 0.0
        %1394 = vmatpush1.msra.mxu0 0.0
        %1395 = vmatprep.subr.mxu0 0.0
        %1396 = vmatpush1.msra.mxu0 0.0
        %1397 = vmatprep.subr.mxu0 0.0
        %1398 = vmatpush1.msra.mxu0 0.0
        %1399 = vmatprep.subr.mxu0 0.0
        %1400 = vmatpush1.msra.mxu0 0.0
        %1401 = vmatprep.subr.mxu0 0.0
        %1402 = vmatpush1.msra.mxu0 0.0
        %1403 = vmatprep.subr.mxu0 0.0
        %1404 = vmatpush1.msra.mxu0 0.0
        %1405 = vmatprep.subr.mxu0 0.0
        %1406 = vmatpush1.msra.mxu0 0.0
        %1407 = vmatprep.subr.mxu0 0.0
        %1408 = vmatpush1.msra.mxu0 0.0
        %1409 = vmatprep.subr.mxu0 0.0
        %1410 = vmatpush1.msra.mxu0 0.0
        %1411 = vmatprep.subr.mxu0 0.0
        %1412 = vmatpush1.msra.mxu0 0.0
        %1413 = vmatprep.subr.mxu0 0.0
        %1414 = vmatpush1.msra.mxu0 0.0
        %1415 = vmatprep.subr.mxu0 0.0
        %1416 = vmatpush1.msra.mxu0 0.0
        %1417 = vmatprep.subr.mxu0 0.0
        %1418 = vmatpush1.msra.mxu0 0.0
        %1419 = vmatprep.subr.mxu0 0.0
        %1420 = vmatpush1.msra.mxu0 %v1166
        %1421 = vmatprep.subr.mxu0 0.0
        %1422 = vmatpush2.msra.mxu0 0.0
        %1423 = vmatprep.subr.mxu0 0.0
        %1424 = vmatpush2.msra.mxu0 0.0
        %1425 = vmatprep.subr.mxu0 0.0
        %1426 = vmatpush2.msra.mxu0 0.0
        %1427 = vmatprep.subr.mxu0 0.0
        %1428 = vmatpush2.msra.mxu0 0.0
        %1429 = vmatprep.subr.mxu0 0.0
        %1430 = vmatpush2.msra.mxu0 0.0
        %1431 = vmatprep.subr.mxu0 0.0
        %1432 = vmatpush2.msra.mxu0 0.0
        %1433 = vmatprep.subr.mxu0 0.0
        %1434 = vmatpush2.msra.mxu0 0.0
        %1435 = vmatprep.subr.mxu0 0.0
        %1436 = vmatpush2.msra.mxu0 0.0
        %1437 = vmatprep.subr.mxu0 0.0
        %1438 = vmatpush2.msra.mxu0 0.0
        %1439 = vmatprep.subr.mxu0 0.0
        %1440 = vmatpush2.msra.mxu0 0.0
        %1441 = vmatprep.subr.mxu0 0.0
        %1442 = vmatpush2.msra.mxu0 0.0
        %1443 = vmatprep.subr.mxu0 0.0
        %1444 = vmatpush2.msra.mxu0 0.0
        %1445 = vmatprep.subr.mxu0 0.0
        %1446 = vmatpush2.msra.mxu0 0.0
        %1447 = vmatprep.subr.mxu0 0.0
        %1448 = vmatpush2.msra.mxu0 0.0
        %1449 = vmatprep.subr.mxu0 0.0
        %1450 = vmatpush2.msra.mxu0 0.0
        %1451 = vmatprep.subr.mxu0 0.0
        %1452 = vmatpush2.msra.mxu0 0.0
        %1453 = vmatprep.mubr.f32.mxu0 0.0
        %1454 = vmatmul.mubr.f32.gmra.mxu0 %v1387
        %v1455 = vpop.f32.mrf.mxu0
        %v1456 = vadd.f32 0.0, %v1455
        %v1457 = vpop.f32.mrf.mxu0
        %1458 = vdwg.mxu0
        %v1459 = vrcp.pop %v1153
        %v1460 = vrcp.pop %v1156
        %v1461 = vrcp.pop %v1159
        %v1462 = vrcp.pop %v1162
        %v1463 = vmul.f32 %v1237, %v1459
        %v1464 = vmul.f32 %v1310, %v1460
        %v1465 = vmul.f32 %v1383, %v1461
        %v1466 = vmul.f32 %v1456, %v1462
        %v1467 = vcombine.low %v1463, %v1465
        %v1468 = vcombine.high %v1463, %v1465
        %v1470 = vunpack.c.l.s4 1983009808
        %v1471 = vunpack.c.0.s8 %v1470
        %v1472 = vlaneseq
        %v1473 = vshrl.u32 %v1472, 7
        %v1474 = vsub.s32 %v1471, %v1473
        %v1475 = vrot.slane %v1467, %v1474
        %v1477 = vunpack.c.l.s4 1983009808
        %v1478 = vunpack.c.0.s8 %v1477
        %v1479 = vlaneseq
        %v1480 = vshrl.u32 %v1479, 7
        %v1481 = vsub.s32 %v1478, %v1480
        %v1482 = vrot.slane %v1468, %v1481
        %v1483 = vcombine.low %v1464, %v1466
        %v1484 = vcombine.high %v1464, %v1466
        %v1486 = vunpack.c.l.s4 1983009808
        %v1487 = vunpack.c.0.s8 %v1486
        %v1488 = vlaneseq
        %v1489 = vshrl.u32 %v1488, 7
        %v1490 = vsub.s32 %v1487, %v1489
        %v1491 = vrot.slane %v1483, %v1490
        %v1493 = vunpack.c.l.s4 1983009808
        %v1494 = vunpack.c.0.s8 %v1493
        %v1495 = vlaneseq
        %v1496 = vshrl.u32 %v1495, 7
        %v1497 = vsub.s32 %v1494, %v1496
        %v1498 = vrot.slane %v1484, %v1497
        %v1499 = vcombine.low %v1475, %v1491
        %v1500 = vcombine.high %v1475, %v1491
        %v1502 = vunpack.c.l.s4 1934713408
        %v1503 = vunpack.c.0.s8 %v1502
        %v1504 = vlaneseq
        %v1505 = vshrl.u32 %v1504, 7
        %v1506 = vsub.s32 %v1503, %v1505
        %v1507 = vrot.slane %v1499, %v1506
        %v1509 = vunpack.c.l.s4 1934713408
        %v1510 = vunpack.c.0.s8 %v1509
        %v1511 = vlaneseq
        %v1512 = vshrl.u32 %v1511, 7
        %v1513 = vsub.s32 %v1510, %v1512
        %v1514 = vrot.slane %v1500, %v1513
        %v1515 = vcombine.low %v1482, %v1498
        %v1516 = vcombine.high %v1482, %v1498
        %v1518 = vunpack.c.l.s4 1934713408
        %v1519 = vunpack.c.0.s8 %v1518
        %v1520 = vlaneseq
        %v1521 = vshrl.u32 %v1520, 7
        %v1522 = vsub.s32 %v1519, %v1521
        %v1523 = vrot.slane %v1515, %v1522
        %v1525 = vunpack.c.l.s4 1934713408
        %v1526 = vunpack.c.0.s8 %v1525
        %v1527 = vlaneseq
        %v1528 = vshrl.u32 %v1527, 7
        %v1529 = vsub.s32 %v1526, %v1528
        %v1530 = vrot.slane %v1516, %v1529
        %v1531 = vcombine.high %v1507, 0.0
        %v1532 = vcombine.high %v1514, 0.0
        %v1533 = vcombine.high %v1523, 0.0
        %v1534 = vcombine.high %v1530, 0.0
        %v1535 = vcombine.low %v1507, %v1514
        %v1537 = vunpack.c.l.s4 1983009808
        %v1538 = vunpack.c.0.s8 %v1537
        %v1539 = vlaneseq
        %v1540 = vshrl.u32 %v1539, 7
        %v1541 = vsub.s32 %v1538, %v1540
        %v1542 = vrot.slane %v1535, %v1541
        %v1543 = vcombine.low %v1531, %v1532
        %v1545 = vunpack.c.l.s4 1983009808
        %v1546 = vunpack.c.0.s8 %v1545
        %v1547 = vlaneseq
        %v1548 = vshrl.u32 %v1547, 7
        %v1549 = vsub.s32 %v1546, %v1548
        %v1550 = vrot.slane %v1543, %v1549
        %v1551 = vcombine.low %v1523, %v1530
        %v1553 = vunpack.c.l.s4 1983009808
        %v1554 = vunpack.c.0.s8 %v1553
        %v1555 = vlaneseq
        %v1556 = vshrl.u32 %v1555, 7
        %v1557 = vsub.s32 %v1554, %v1556
        %v1558 = vrot.slane %v1551, %v1557
        %v1559 = vcombine.low %v1533, %v1534
        %v1561 = vunpack.c.l.s4 1983009808
        %v1562 = vunpack.c.0.s8 %v1561
        %v1563 = vlaneseq
        %v1564 = vshrl.u32 %v1563, 7
        %v1565 = vsub.s32 %v1562, %v1564
        %v1566 = vrot.slane %v1559, %v1565
        %v1567 = vcombine.low %v1542, %v1550
        %v1568 = vcombine.high %v1542, %v1550
        %v1570 = vunpack.c.l.s4 1934713408
        %v1571 = vunpack.c.0.s8 %v1570
        %v1572 = vlaneseq
        %v1573 = vshrl.u32 %v1572, 7
        %v1574 = vsub.s32 %v1571, %v1573
        %v1575 = vrot.slane %v1567, %v1574
        %v1577 = vunpack.c.l.s4 1934713408
        %v1578 = vunpack.c.0.s8 %v1577
        %v1579 = vlaneseq
        %v1580 = vshrl.u32 %v1579, 7
        %v1581 = vsub.s32 %v1578, %v1580
        %v1582 = vrot.slane %v1568, %v1581
        %v1583 = vcombine.low %v1558, %v1566
        %v1584 = vcombine.high %v1558, %v1566
        %v1586 = vunpack.c.l.s4 1934713408
        %v1587 = vunpack.c.0.s8 %v1586
        %v1588 = vlaneseq
        %v1589 = vshrl.u32 %v1588, 7
        %v1590 = vsub.s32 %v1587, %v1589
        %v1591 = vrot.slane %v1583, %v1590
        %v1593 = vunpack.c.l.s4 1934713408
        %v1594 = vunpack.c.0.s8 %v1593
        %v1595 = vlaneseq
        %v1596 = vshrl.u32 %v1595, 7
        %v1597 = vsub.s32 %v1594, %v1596
        %v1598 = vrot.slane %v1584, %v1597
        %v1599 = vcombine.low %v1575, %v1591
        %v1600 = vcombine.high %v1575, %v1591
        %v1601 = vcombine.low %v1582, %v1598
        %v1602 = vcombine.high %v1582, %v1598
        %1604 = vrot.lane.b32.xlu0 %v1600, 8
        %v1605 = vpop.permute.xlu0 %1604
        %1608 = vrot.lane.b32.xlu0 %v1601, 16
        %v1609 = vpop.permute.xlu0 %1608
        %1612 = vrot.lane.b32.xlu0 %v1602, 24
        %v1613 = vpop.permute.xlu0 %1612
        %v1615 = vsel %vm822, %v1599, %v1605
        %vm1616 = vcmask 130048
        %v1617 = vsel %vm1616, %v1615, %v1609
        %vm1618 = vcmask 195584
        %v1619 = vsel %vm1618, %v1617, %v1613
        %v1620 = vld [vmem:[#allocation10] sm:$0xff]
        %v1621 = vld [vmem:[#allocation10 + $0x8] sm:$0xff]
        %v1622 = vld [vmem:[#allocation10 + $0x10] sm:$0xff]
        %v1623 = vld [vmem:[#allocation10 + $0x18] sm:$0xff]
        %v1624 = vlaneseq
        %v1625 = vshrl.u32 %v1624, 7
        %v1626 = vsub.s32 1, %v1625
        %v1627 = vrot.slane %v269, %v1626
        %vm1628 = vcmask 261120
        %v1630 = vsel %vm1628, %v1619, 0
        %1632 = vmatprep.subr.mxu0 0.0
        %1633 = vmatpush1.msra.mxu0 0.0
        %1634 = vmatprep.subr.mxu0 0.0
        %1635 = vmatpush1.msra.mxu0 0.0
        %1636 = vmatprep.subr.mxu0 0.0
        %1637 = vmatpush1.msra.mxu0 0.0
        %1638 = vmatprep.subr.mxu0 0.0
        %1639 = vmatpush1.msra.mxu0 0.0
        %1640 = vmatprep.subr.mxu0 0.0
        %1641 = vmatpush1.msra.mxu0 0.0
        %1642 = vmatprep.subr.mxu0 0.0
        %1643 = vmatpush1.msra.mxu0 0.0
        %1644 = vmatprep.subr.mxu0 0.0
        %1645 = vmatpush1.msra.mxu0 0.0
        %1646 = vmatprep.subr.mxu0 0.0
        %1647 = vmatpush1.msra.mxu0 0.0
        %1648 = vmatprep.subr.mxu0 0.0
        %1649 = vmatpush1.msra.mxu0 0.0
        %1650 = vmatprep.subr.mxu0 0.0
        %1651 = vmatpush1.msra.mxu0 0.0
        %1652 = vmatprep.subr.mxu0 0.0
        %1653 = vmatpush1.msra.mxu0 0.0
        %1654 = vmatprep.subr.mxu0 0.0
        %1655 = vmatpush1.msra.mxu0 0.0
        %1656 = vmatprep.subr.mxu0 0.0
        %1657 = vmatpush1.msra.mxu0 %v1623
        %1658 = vmatprep.subr.mxu0 0.0
        %1659 = vmatpush1.msra.mxu0 %v1622
        %1660 = vmatprep.subr.mxu0 0.0
        %1661 = vmatpush1.msra.mxu0 %v1621
        %1662 = vmatprep.subr.mxu0 0.0
        %1663 = vmatpush1.msra.mxu0 %v1620
        %1664 = vmatprep.subr.mxu0 0.0
        %1665 = vmatpush2.msra.mxu0 0.0
        %1666 = vmatprep.subr.mxu0 0.0
        %1667 = vmatpush2.msra.mxu0 0.0
        %1668 = vmatprep.subr.mxu0 0.0
        %1669 = vmatpush2.msra.mxu0 0.0
        %1670 = vmatprep.subr.mxu0 0.0
        %1671 = vmatpush2.msra.mxu0 0.0
        %1672 = vmatprep.subr.mxu0 0.0
        %1673 = vmatpush2.msra.mxu0 0.0
        %1674 = vmatprep.subr.mxu0 0.0
        %1675 = vmatpush2.msra.mxu0 0.0
        %1676 = vmatprep.subr.mxu0 0.0
        %1677 = vmatpush2.msra.mxu0 0.0
        %1678 = vmatprep.subr.mxu0 0.0
        %1679 = vmatpush2.msra.mxu0 0.0
        %1680 = vmatprep.subr.mxu0 0.0
        %1681 = vmatpush2.msra.mxu0 0.0
        %1682 = vmatprep.subr.mxu0 0.0
        %1683 = vmatpush2.msra.mxu0 0.0
        %1684 = vmatprep.subr.mxu0 0.0
        %1685 = vmatpush2.msra.mxu0 0.0
        %1686 = vmatprep.subr.mxu0 0.0
        %1687 = vmatpush2.msra.mxu0 0.0
        %1688 = vmatprep.subr.mxu0 0.0
        %1689 = vmatpush2.msra.mxu0 0.0
        %1690 = vmatprep.subr.mxu0 0.0
        %1691 = vmatpush2.msra.mxu0 0.0
        %1692 = vmatprep.subr.mxu0 0.0
        %1693 = vmatpush2.msra.mxu0 0.0
        %1694 = vmatprep.subr.mxu0 0.0
        %1695 = vmatpush2.msra.mxu0 0.0
        %1696 = vmatprep.mubr.f32.mxu0 0.0
        %1697 = vmatmul.mubr.f32.gmra.mxu0 %v1630
        %v1698 = vpop.f32.mrf.mxu0
        %v1699 = vadd.f32 %v1627, %v1698
        %v1700 = vpop.f32.mrf.mxu0
        %1701 = vdwg.mxu0
        %v1702 = vsel %vm1628, %v1699, 0.0
        %1703 = vadd.xlane.f32.xlu0 %v1702
        %v1704 = vpop.xlane.xlu0 %1703
        %v1705 = vrcp.pop 32.0
        %v1706 = vmul.f32 %v1704, %v1705
        %v1707 = vsub.f32 %v1699, %v1706
        %v1708 = vmul.f32 %v1707, %v1707
        %v1709 = vsel %vm1628, %v1708, 0.0
        %1710 = vadd.xlane.f32.xlu0 %v1709
        %v1711 = vpop.xlane.xlu0 %1710
        %v1712 = vmul.f32 %v1711, %v1705
        %v1713 = vadd.f32 %v1712, 1e-12
        %v1714 = vrsqrt.pop %v1713
        %v1715 = vmul.f32 %v1707, %v1714
        %v1716 = vlaneseq
        %v1717 = vshrl.u32 %v1716, 7
        %v1718 = vsub.s32 2, %v1717
        %v1719 = vrot.slane %v269, %v1718
        %v1720 = vmul.f32 %v1715, %v1719
        %v1721 = vlaneseq
        %v1722 = vshrl.u32 %v1721, 7
        %v1723 = vsub.s32 3, %v1722
        %v1724 = vrot.slane %v269, %v1723
        %v1725 = vadd.f32 %v1720, %v1724
        %1726 = vst.msk [vmem:[%s268] sm:$0xff] %vm1628, %v1725
        %s1727 = sand.u32 %s134, 1
        %s1728 = scalar_lea.sflag [#allocation7], %s1727
        %s1729 = sand.u32 %s134, 1
        %s1730 = smul.addr %s1729, 8
        %s1731 = scalar_lea.vmem [#allocation13], %s1730
        // Predicated region
        $region57: #{tpu_custom_call.1} parent=35 // pred_check
          %p1732 = pneg %p144
        $region58: #{tpu_custom_call.1} parent=35 // pred_check_branch
          %1734 = sbr.rel (%p1732) target = $region60
        $region59: #{tpu_custom_call.1} parent=35 // pred_region
          %s1736 = ssub.s32 128, 128
          %1737 = vsyncadd %s1728, %s1736
          %s1738 = sadd.s32 %s28, %s27
          %s1739 = smul.addr %s1738, 128
          %s1740 = scalar_lea.hbm %s4, %s1739
          %s1742 = sshll.u32 %s1731, 4
          %s1743 = int_to_ptr.vmem [resolvable:$true] %s1742
          %1745 = dma.vmem_to_hbm [thread:$0]  %s1743, 128, %s1740, %s1728
        $region60: #{tpu_custom_call.1} parent=35 // pred_fallthru
          _
      $region36: #{tpu_custom_call.1} parent=5 // pred_fallthru
        _
      %p1746 = scmp.le.s32.totalorder 2, %s18
      // Predicated region
      $region61: #{tpu_custom_call.1} parent=5 // pred_check
        %p1747 = pneg %p1746
      $region62: #{tpu_custom_call.1} parent=5 // pred_check_branch
        %1749 = sbr.rel (%p1747) target = $region64
      $region63: #{tpu_custom_call.1} parent=5 // pred_region
        %s1750 = ssub.s32 %s18, 2
        // Predicated region
        $region65: #{tpu_custom_call.1} parent=63 // pred_check
          %p1751 = pneg %p150
        $region66: #{tpu_custom_call.1} parent=63 // pred_check_branch
          %1753 = sbr.rel (%p1751) target = $region68
        $region67: #{tpu_custom_call.1} parent=63 // pred_region
          %s1754 = sand.u32 %s135, 1
          %s1755 = scalar_lea.sflag [#allocation7], %s1754
          %s1756 = sand.u32 %s135, 1
          %s1757 = smul.addr %s1756, 8
          %s1758 = scalar_lea.vmem [#allocation13], %s1757
          %1759 = dma.done %s1755, 128
        $region68: #{tpu_custom_call.1} parent=63 // pred_fallthru
          _
      $region64: #{tpu_custom_call.1} parent=5 // pred_fallthru
        _
    $region6: #{tpu_custom_call.1} parent=1 // loop_footer
      %s22 = sadd.s32 1, %s18
    $region7: #{tpu_custom_call.1} parent=1 // loop_footer_branch
      %17 = sbr.rel target = $region3
    $region8: #{tpu_custom_call.1} parent=1 // loop_exit
      _
    %1760 = vsyncpa [#allocation6], 1
    %s1761 = scalar_lea.sflag [#allocation6], 1
    %1762 = vsyncpa %s1761, 1
    %1763 = vsyncpa [#allocation9], 1
    %1764 = vsyncpa [#allocation12], 1
    %1765 = vsyncpa [#allocation7], 1
    %s1766 = scalar_lea.sflag [#allocation7], 1
    %1767 = vsyncpa %s1766, 1

</llo_original>
